<compile_context>
chip_gen: v7x
topology: tpu7x:2x2x1
jax: 0.10.0
libtpu: 0.0.40
codegen_flags: <defaults>
</compile_context>

<pallas_src>
import jax
import jax.numpy as jnp
from jax import lax
from jax.experimental import pallas as pl
from jax.experimental.pallas import tpu as pltpu


def _round_up(x, m):
    return (x + m - 1) // m * m


def _detect_vmem_limit():
    """Scoped-VMEM limit: ~75% of physical VMEM (96 MiB on 128 MiB v5e/v6e,
    48 MiB on v7x's 64 MiB).  Falls back to a v7x-safe 48 MiB."""
    cap = 64 * 1024 * 1024
    try:
        cap = int(pltpu.get_tpu_info().vmem_capacity_bytes)
        cap = min(cap, 128 * 1024 * 1024)
    except Exception:
        pass
    return max(32 * 1024 * 1024, (cap * 3) // 4)


_VMEM_LIMIT = _detect_vmem_limit()


# ----------------------------------------------------------------------------
# Tiled dense layer  y = x @ w.T + b
# ----------------------------------------------------------------------------
def _linear_kernel(x_ref, wt_ref, b_ref, o_ref):
    # x: (tm, Kp) bf16, wt: (Kp, Np) bf16, b: (1, Np) f32 -> o: (tm, Np)
    acc = jnp.dot(x_ref[...], wt_ref[...], preferred_element_type=jnp.float32)
    o_ref[...] = (acc + b_ref[...]).astype(o_ref.dtype)


def pallas_linear(x, w, b=None, *, out_dtype=jnp.float32, tile_m=512):
    """Dense layer.  x: (M, K), w: (N, K), b: (N,) or None.

    Tiled over M; weights stay resident in VMEM across the grid.  MXU
    operands are bf16 with f32 accumulation.  N is padded to a multiple of
    128 inside (lane-dense stores); tiny K is zero-padded to 128.
    """
    M, K = x.shape
    N = w.shape[0]
    Np = _round_up(N, 128)
    Kp = _round_up(K, 128) if K < 128 else K
    tm = min(tile_m, _round_up(M, 16))
    Mp = _round_up(M, tm)

    xb = x.astype(jnp.bfloat16)
    if Mp != M or Kp != K:
        xb = jnp.pad(xb, ((0, Mp - M), (0, Kp - K)))
    wt = w.T.astype(jnp.bfloat16)
    if Kp != K or Np != N:
        wt = jnp.pad(wt, ((0, Kp - K), (0, Np - N)))
    if b is None:
        b2 = jnp.zeros((1, Np), jnp.float32)
    else:
        b2 = jnp.pad(b.astype(jnp.float32), (0, Np - N)).reshape(1, Np)

    out = pl.pallas_call(
        _linear_kernel,
        out_shape=jax.ShapeDtypeStruct((Mp, Np), out_dtype),
        grid=(Mp // tm,),
        in_specs=[
            pl.BlockSpec((tm, Kp), lambda i: (i, 0)),
            pl.BlockSpec((Kp, Np), lambda i: (0, 0)),    # resident weight
            pl.BlockSpec((1, Np), lambda i: (0, 0)),     # resident bias
        ],
        out_specs=pl.BlockSpec((tm, Np), lambda i: (i, 0)),
        compiler_params=pltpu.CompilerParams(
            dimension_semantics=("parallel",),
            vmem_limit_bytes=_VMEM_LIMIT,
        ),
    )(xb, wt, b2)
    out = out[:M]
    if Np != N:
        out = out[:, :N]
    return out


# ----------------------------------------------------------------------------
# GRU recurrence as a Pallas kernel (PyTorch nn.GRU semantics, packed-sequence
# behaviour via a per-step validity mask).  All directions of one layer are
# fused into a single recurrence (one grid step computes fw and bw).
# ----------------------------------------------------------------------------
def _pad_gate_rows(w, H, Hp):
    # (3H, Din) -> (3Hp, Din): each r/z/n gate block padded to Hp rows so gate
    # g starts at a lane-aligned column offset g*Hp after the matmul.
    w3 = jnp.pad(w.reshape(3, H, -1), ((0, 0), (0, Hp - H), (0, 0)))
    return w3.reshape(3 * Hp, -1)


def _pad_gate_vec(b, H, Hp):
    return jnp.pad(b.reshape(3, H), ((0, 0), (0, Hp - H))).reshape(3 * Hp)


def _pad_whhT(w_hh, H, Hp):
    # (3H, H) -> transposed, gate-padded (Hp, 3Hp) so h(Bp,Hp) @ result gives
    # the three recurrent gate pre-activations at lane offsets 0, Hp, 2Hp.
    w3 = jnp.pad(w_hh.reshape(3, H, H), ((0, 0), (0, Hp - H), (0, Hp - H)))
    return jnp.transpose(w3, (2, 0, 1)).reshape(Hp, 3 * Hp)


def _gru_kernel(gi_ref, mask_ref, whhT_ref, bhh_ref, y_ref, h_ref):
    # gi_ref:   (1, ndir, Bp, 3Hp) f32 — input-side gate pre-acts for step t
    # mask_ref: (1, ndir, Bp, 1)   f32 — 1.0 where step t is inside the seq
    # whhT_ref: (ndir, Hp, 3Hp)    bf16 — recurrent weights (VMEM-resident)
    # bhh_ref:  (ndir, 1, 3Hp)     f32 — recurrent bias (resident)
    # y_ref:    (1, ndir, Bp, Hp)       — per-step output block
    # h_ref:    (ndir, Bp, Hp)     f32 scratch — hidden state, persists over t
    t = pl.program_id(0)

    @pl.when(t == 0)
    def _():
        h_ref[...] = jnp.zeros_like(h_ref)

    ndir, _, Hp = h_ref.shape
    for d in range(ndir):                        # static unroll over directions
        h = h_ref[d]                             # (Bp, Hp) f32
        gi = gi_ref[0, d]                        # (Bp, 3Hp) f32
        gh = jnp.dot(h.astype(jnp.bfloat16), whhT_ref[d],
                     preferred_element_type=jnp.float32) + bhh_ref[d]
        r = jax.nn.sigmoid(gi[:, :Hp] + gh[:, :Hp])
        z = jax.nn.sigmoid(gi[:, Hp:2 * Hp] + gh[:, Hp:2 * Hp])
        n = jnp.tanh(gi[:, 2 * Hp:] + r * gh[:, 2 * Hp:])
        h_new = (1.0 - z) * n + z * h
        m = mask_ref[0, d]                       # (Bp, 1): 1 = valid, 0 = pad
        h_ref[d] = m * h_new + (1.0 - m) * h     # padded steps keep the state
        y_ref[0, d] = (m * h_new).astype(y_ref.dtype)   # padded steps emit 0


def _pallas_gru_call(gi, mask, whhT, bhh, Hp):
    # gi: (T, ndir, Bp, 3Hp) f32, mask: (T, ndir, Bp, 1) f32,
    # whhT: (ndir, Hp, 3Hp) bf16, bhh: (ndir, 1, 3Hp) f32
    T, ndir, Bp, G = gi.shape
    # TODO(synk): on v7x, add a leading core-parallel batch/direction grid axis
    # so the second TensorCore is not idle during the serial recurrence.
    return pl.pallas_call(
        _gru_kernel,
        out_shape=jax.ShapeDtypeStruct((T, ndir, Bp, Hp), jnp.float32),
        grid=(T,),
        in_specs=[
            pl.BlockSpec((1, ndir, Bp, G), lambda t: (t, 0, 0, 0)),
            pl.BlockSpec((1, ndir, Bp, 1), lambda t: (t, 0, 0, 0)),
            pl.BlockSpec((ndir, Hp, G), lambda t: (0, 0, 0)),   # resident
            pl.BlockSpec((ndir, 1, G), lambda t: (0, 0, 0)),    # resident
        ],
        out_specs=pl.BlockSpec((1, ndir, Bp, Hp), lambda t: (t, 0, 0, 0)),
        scratch_shapes=[pltpu.VMEM((ndir, Bp, Hp), jnp.float32)],
        compiler_params=pltpu.CompilerParams(
            dimension_semantics=("arbitrary",),
            vmem_limit_bytes=_VMEM_LIMIT,
        ),
    )(gi, mask, whhT, bhh)


def gru_forward(x, lengths, dir_params):
    """Run one GRU layer for all directions fused in a single Pallas
    recurrence.  dir_params: list of (w_ih, w_hh, b_ih, b_hh, reverse) tuples
    (PyTorch nn.GRU layout).  Returns one (B, T, H) output per direction,
    already un-reversed, with pack/pad_packed semantics (padded timesteps emit
    zeros and do not advance the state)."""
    B, T, Din = x.shape
    H = dir_params[0][1].shape[1]
    Hp = _round_up(H, 128)
    Bp = _round_up(B, 8)

    valid = (jnp.arange(T)[None, :] < lengths[:, None]).astype(jnp.float32)

    gi_l, m_l, wt_l, bh_l = [], [], [], []
    for (w_ih, w_hh, b_ih, b_hh, reverse) in dir_params:
        x_d = jnp.flip(x, axis=1) if reverse else x
        m_d = jnp.flip(valid, axis=1) if reverse else valid
        # Input-side projection for ALL timesteps in one tiled matmul
        # (hoisted out of the serial recurrence).  Gates padded to Hp lanes.
        gi = pallas_linear(x_d.reshape(B * T, Din),
                           _pad_gate_rows(w_ih, H, Hp),
                           _pad_gate_vec(b_ih, H, Hp))
        gi = gi.reshape(B, T, 3 * Hp).transpose(1, 0, 2)         # (T, B, 3Hp)
        gi_l.append(jnp.pad(gi, ((0, 0), (0, Bp - B), (0, 0))))
        m = m_d.transpose(1, 0)[:, :, None]                      # (T, B, 1)
        m_l.append(jnp.pad(m, ((0, 0), (0, Bp - B), (0, 0))))
        wt_l.append(_pad_whhT(w_hh, H, Hp).astype(jnp.bfloat16))
        bh_l.append(_pad_gate_vec(b_hh, H, Hp).reshape(1, 3 * Hp))

    gi_dirs = jnp.stack(gi_l, axis=1)          # (T, ndir, Bp, 3Hp) f32
    m_dirs = jnp.stack(m_l, axis=1)            # (T, ndir, Bp, 1)   f32
    wt_dirs = jnp.stack(wt_l, axis=0)          # (ndir, Hp, 3Hp)    bf16
    bh_dirs = jnp.stack(bh_l, axis=0)          # (ndir, 1, 3Hp)     f32

    y = _pallas_gru_call(gi_dirs, m_dirs, wt_dirs, bh_dirs, Hp)

    outs = []
    for d, (_, _, _, _, reverse) in enumerate(dir_params):
        yd = y[:, d, :B, :H]                                     # (T, B, H)
        if reverse:
            yd = jnp.flip(yd, axis=0)
        outs.append(yd.transpose(1, 0, 2))                       # (B, T, H)
    return outs


# ----------------------------------------------------------------------------
# Joint network, tiled over (B, T, U, C) with bf16 tanh cached across C tiles
# ----------------------------------------------------------------------------
def _joint_kernel(ep_ref, dp_ref, wfc_ref, o_ref, h_ref):
    # ep_ref: (1, tT, Ip) bf16 (enc @ W1e.T + b1), dp_ref: (1, tU, Ip) bf16
    # wfc_ref: (Ip, tC) bf16, o_ref: (1, tT, tU, tC)
    # h_ref: (tT, tU, Ip) bf16 scratch — computed at c==0, reused across C.
    @pl.when(pl.program_id(3) == 0)
    def _():
        # Broadcast-add + tanh in bf16 (bf16 VPU/EUP on v6e/v7x; on v5e the
        # compiler upcasts internally — still correct).
        h_ref[...] = jnp.tanh(ep_ref[0][:, None, :] + dp_ref[0][None, :, :])

    tT, tU, Ip = h_ref.shape
    h2 = h_ref[...].reshape(tT * tU, Ip)
    out = jnp.dot(h2, wfc_ref[...], preferred_element_type=jnp.float32)
    o_ref[0] = out.reshape(tT, tU, -1).astype(o_ref.dtype)


def _choose_joint_tiles(T, U, Ip, Cp0, out_bytes, budget):
    tT = min(128, _round_up(T, 16))
    tU = min(64, _round_up(U, 16))
    tC = min(Cp0, 2048)

    def usage(a, b, c):
        return (2 * a * b * c * out_bytes      # double-buffered logits tile
                + a * b * Ip * 2               # bf16 tanh scratch
                + 2 * Ip * c * 2               # double-buffered fc weight slab
                + 2 * (a + b) * Ip * 2)        # double-buffered ep/dp blocks

    while usage(tT, tU, tC) > budget and tC > 128:
        tC = max(128, _round_up(tC // 2, 128))
    while usage(tT, tU, tC) > budget and tT > 16:
        tT = max(16, _round_up(tT // 2, 16))
    while usage(tT, tU, tC) > budget and tU > 16:
        tU = max(16, _round_up(tU // 2, 16))
    return tT, tU, tC


def pallas_joint(ep, dp, wfc, *, out_dtype=jnp.bfloat16):
    """RNNT joint given pre-projected activations.

    ep : (B, T, Ip) bf16 = enc_out @ W1e.T + b1   (Ip = inner_dim padded to 128)
    dp : (B, U, Ip) bf16 = dec_out @ W1d.T
    wfc: (C, I)     f32  -> logits (B, T, U, C) in `out_dtype` (bf16 halves the
                            dominant HBM writeback).
    """
    B, T, Ip = ep.shape
    U = dp.shape[1]
    C, I = wfc.shape
    assert dp.shape[2] == Ip and I <= Ip and Ip % 128 == 0

    out_bytes = jnp.dtype(out_dtype).itemsize
    tT, tU, tC = _choose_joint_tiles(T, U, Ip, _round_up(C, 128), out_bytes,
                                     int(_VMEM_LIMIT * 0.6))
    Tp, Up = _round_up(T, tT), _round_up(U, tU)
    Cp = _round_up(_round_up(C, 128), tC)

    ep_p = jnp.pad(ep, ((0, 0), (0, Tp - T), (0, 0))) if Tp != T else ep
    dp_p = jnp.pad(dp, ((0, 0), (0, Up - U), (0, 0))) if Up != U else dp
    wfc_p = jnp.pad(wfc, ((0, Cp - C), (0, Ip - I))).T.astype(jnp.bfloat16)

    logits = pl.pallas_call(
        _joint_kernel,
        out_shape=jax.ShapeDtypeStruct((B, Tp, Up, Cp), out_dtype),
        grid=(B, Tp // tT, Up // tU, Cp // tC),
        in_specs=[
            pl.BlockSpec((1, tT, Ip), lambda b, i, j, c: (b, i, 0)),
            pl.BlockSpec((1, tU, Ip), lambda b, i, j, c: (b, j, 0)),
            pl.BlockSpec((Ip, tC), lambda b, i, j, c: (0, c)),
        ],
        out_specs=pl.BlockSpec((1, tT, tU, tC),
                               lambda b, i, j, c: (b, i, j, c)),
        scratch_shapes=[pltpu.VMEM((tT, tU, Ip), jnp.bfloat16)],
        compiler_params=pltpu.CompilerParams(
            dimension_semantics=("parallel", "parallel", "parallel",
                                 "arbitrary"),
            vmem_limit_bytes=_VMEM_LIMIT,
        ),
    )(ep_p, dp_p, wfc_p)
    if (Tp, Up, Cp) != (T, U, C):
        logits = logits[:, :T, :U, :C]
    return logits


# ----------------------------------------------------------------------------
# Parameter init (deterministic, synthetic)
# ----------------------------------------------------------------------------
def _uniform(key, shape, scale):
    return jax.random.uniform(key, shape, jnp.float32, -scale, scale)


def init_params(key, *, num_classes, input_dim, num_encoder_layers,
                num_decoder_layers, enc_hidden, dec_hidden, output_dim,
                inner_dim):
    keys = iter(jax.random.split(key, 256))
    p = {}

    # ---- Encoder: bidirectional GRU stack + out_proj(2H -> output_dim) ----
    enc_layers = []
    for l in range(num_encoder_layers):
        in_dim = input_dim if l == 0 else 2 * enc_hidden
        s = 1.0 / jnp.sqrt(enc_hidden)
        layer = {}
        for d in ("fw", "bw"):
            layer[d] = {
                "w_ih": _uniform(next(keys), (3 * enc_hidden, in_dim), s),
                "w_hh": _uniform(next(keys), (3 * enc_hidden, enc_hidden), s),
                "b_ih": _uniform(next(keys), (3 * enc_hidden,), s),
                "b_hh": _uniform(next(keys), (3 * enc_hidden,), s),
            }
        enc_layers.append(layer)
    p["enc_layers"] = enc_layers
    s = 1.0 / jnp.sqrt(2 * enc_hidden)
    p["enc_out_w"] = _uniform(next(keys), (output_dim, 2 * enc_hidden), s)
    p["enc_out_b"] = _uniform(next(keys), (output_dim,), s)

    # ---- Decoder: embedding + unidirectional GRU + out_proj ----
    p["embedding"] = jax.random.normal(next(keys), (num_classes, dec_hidden),
                                       jnp.float32)
    dec_layers = []
    for l in range(num_decoder_layers):
        s = 1.0 / jnp.sqrt(dec_hidden)
        dec_layers.append({
            "w_ih": _uniform(next(keys), (3 * dec_hidden, dec_hidden), s),
            "w_hh": _uniform(next(keys), (3 * dec_hidden, dec_hidden), s),
            "b_ih": _uniform(next(keys), (3 * dec_hidden,), s),
            "b_hh": _uniform(next(keys), (3 * dec_hidden,), s),
        })
    p["dec_layers"] = dec_layers
    s = 1.0 / jnp.sqrt(dec_hidden)
    p["dec_out_w"] = _uniform(next(keys), (output_dim, dec_hidden), s)
    p["dec_out_b"] = _uniform(next(keys), (output_dim,), s)

    # ---- Joint: forward_layer (2*dec_hidden -> inner), fc (inner -> C) ----
    s = 1.0 / jnp.sqrt(2 * dec_hidden)
    p["joint_w1"] = _uniform(next(keys), (inner_dim, 2 * dec_hidden), s)
    p["joint_b1"] = _uniform(next(keys), (inner_dim,), s)
    s = 1.0 / jnp.sqrt(inner_dim)
    p["joint_fc"] = _uniform(next(keys), (num_classes, inner_dim), s)
    return p


# ----------------------------------------------------------------------------
# Forward pass (== RNNTransducer.forward, eval mode, num_gpus=1)
# ----------------------------------------------------------------------------
def encoder_forward(params, inputs, input_lengths):
    out = inputs.astype(jnp.float32)
    for layer in params["enc_layers"]:
        f, b = layer["fw"], layer["bw"]
        yf, yb = gru_forward(out, input_lengths, [
            (f["w_ih"], f["w_hh"], f["b_ih"], f["b_hh"], False),
            (b["w_ih"], b["w_hh"], b["b_ih"], b["b_hh"], True),
        ])
        out = jnp.concatenate([yf, yb], axis=-1)
    B, T, D2 = out.shape
    proj = pallas_linear(out.reshape(B * T, D2), params["enc_out_w"],
                         params["enc_out_b"])
    return proj.reshape(B, T, -1)


def decoder_forward(params, targets, target_lengths):
    out = params["embedding"][targets]                       # (B, U, H)
    for layer in params["dec_layers"]:
        (out,) = gru_forward(out, target_lengths, [
            (layer["w_ih"], layer["w_hh"], layer["b_ih"], layer["b_hh"],
             False),
        ])
    B, U, H = out.shape
    proj = pallas_linear(out.reshape(B * U, H), params["dec_out_w"],
                         params["dec_out_b"])
    return proj.reshape(B, U, -1)


@jax.jit
def rnnt_forward(params, inputs, input_lengths, targets, target_lengths):
    # concat_targets = F.pad(targets, (1, 0), value=0): prepend a 0 token
    B = targets.shape[0]
    concat_targets = jnp.concatenate(
        [jnp.zeros((B, 1), targets.dtype), targets], axis=1)
    enc_out = encoder_forward(params, inputs, input_lengths)        # (B, T, D)
    dec_out = decoder_forward(params, concat_targets,
                              target_lengths + 1)                    # (B, U, D)

    # Joint: cat([enc, dec]) @ W1.T + b1 == (enc @ W1e.T + b1) + (dec @ W1d.T)
    # -> hoist both projections out of the T x U hot loop; pad inner_dim to a
    #    multiple of 128 so the joint contraction feeds the MXU lane-densely.
    B_, T, D = enc_out.shape
    w1, b1 = params["joint_w1"], params["joint_b1"]
    assert w1.shape[1] == 2 * D, (
        "joint forward_layer expects output_dim == decoder hidden dim")
    U = dec_out.shape[1]
    I = w1.shape[0]
    Ip = _round_up(I, 128)
    w1e = jnp.pad(w1[:, :D], ((0, Ip - I), (0, 0)))
    w1d = jnp.pad(w1[:, D:], ((0, Ip - I), (0, 0)))
    b1p = jnp.pad(b1, (0, Ip - I))
    ep = pallas_linear(enc_out.reshape(B_ * T, D), w1e, b1p,
                       out_dtype=jnp.bfloat16).reshape(B_, T, Ip)
    dp = pallas_linear(dec_out.reshape(B_ * U, D), w1d, None,
                       out_dtype=jnp.bfloat16).reshape(B_, U, Ip)
    logits = pallas_joint(ep, dp, params["joint_fc"],
                          out_dtype=jnp.bfloat16)                    # (B,T,U,C)
    return logits


# ----------------------------------------------------------------------------
# Pure-JAX f32 references (sanity checks for the Pallas kernels)
# ----------------------------------------------------------------------------
def gru_reference(x, lengths, w_ih, w_hh, b_ih, b_hh, reverse=False):
    B, T, _ = x.shape
    h0 = jnp.zeros((B, w_hh.shape[1]), jnp.float32)
    ts = jnp.arange(T)
    if reverse:
        ts = ts[::-1]

    def step(h, t):
        x_t = lax.dynamic_index_in_dim(x, t, axis=1, keepdims=False)
        gi = x_t @ w_ih.T + b_ih
        gh = h @ w_hh.T + b_hh
        i_r, i_z, i_n = jnp.split(gi, 3, axis=-1)
        h_r, h_z, h_n = jnp.split(gh, 3, axis=-1)
        r = jax.nn.sigmoid(i_r + h_r)
        z = jax.nn.sigmoid(i_z + h_z)
        n = jnp.tanh(i_n + r * h_n)
        h_new = (1.0 - z) * n + z * h
        valid = (t < lengths)[:, None]
        h = jnp.where(valid, h_new, h)
        return h, jnp.where(valid, h_new, 0.0)

    _, ys = lax.scan(step, h0, ts)
    ys = jnp.swapaxes(ys, 0, 1)
    if reverse:
        ys = ys[:, ::-1, :]
    return ys


def joint_reference(enc_out, dec_out, w1, b1, wfc):
    B, T, D = enc_out.shape
    U = dec_out.shape[1]
    e = jnp.broadcast_to(enc_out[:, :, None, :], (B, T, U, D))
    d = jnp.broadcast_to(dec_out[:, None, :, :], (B, T, U, D))
    cat = jnp.concatenate([e, d], axis=-1)
    h = jnp.tanh(cat @ w1.T + b1)
    return h @ wfc.T


# ----------------------------------------------------------------------------
if __name__ == "__main__":
    # Small, module-consistent shapes.
    B = 2               # batch
    T = 8               # encoder (audio) frames
    INPUT_DIM = 16      # acoustic feature dim
    U_TGT = 6           # target token length (decoder runs on U_TGT + 1)
    NUM_CLASSES = 40
    ENC_HIDDEN = 32
    DEC_HIDDEN = 32
    OUTPUT_DIM = 32     # must equal DEC_HIDDEN (joint in-features = 2*DEC_HIDDEN)
    INNER_DIM = 64
    NUM_ENC_LAYERS = 2
    NUM_DEC_LAYERS = 1

    key = jax.random.PRNGKey(0)
    k_in, k_tgt, k_par = jax.random.split(key, 3)

    inputs = jax.random.normal(k_in, (B, T, INPUT_DIM), jnp.float32)
    input_lengths = jnp.array([T, T - 2], jnp.int32)
    targets = jax.random.randint(k_tgt, (B, U_TGT), 3, NUM_CLASSES, jnp.int32)
    target_lengths = jnp.array([U_TGT, U_TGT - 2], jnp.int32)

    params = init_params(
        k_par,
        num_classes=NUM_CLASSES, input_dim=INPUT_DIM,
        num_encoder_layers=NUM_ENC_LAYERS, num_decoder_layers=NUM_DEC_LAYERS,
        enc_hidden=ENC_HIDDEN, dec_hidden=DEC_HIDDEN,
        output_dim=OUTPUT_DIM, inner_dim=INNER_DIM,
    )

    logits = rnnt_forward(params, inputs, input_lengths, targets,
                          target_lengths)
    logits = jax.block_until_ready(logits)
    assert logits.shape == (B, T, U_TGT + 1, NUM_CLASSES)

    # --- Check 1: fused bidirectional Pallas GRU vs. pure-JAX f32 scan ------
    layer0 = params["enc_layers"][0]
    dirs0 = [
        (layer0["fw"]["w_ih"], layer0["fw"]["w_hh"],
         layer0["fw"]["b_ih"], layer0["fw"]["b_hh"], False),
        (layer0["bw"]["w_ih"], layer0["bw"]["w_hh"],
         layer0["bw"]["b_ih"], layer0["bw"]["b_hh"], True),
    ]
    yf, yb = gru_forward(inputs, input_lengths, dirs0)
    yf_ref = gru_reference(inputs, input_lengths, **layer0["fw"],
                           reverse=False)
    yb_ref = gru_reference(inputs, input_lengths, **layer0["bw"],
                           reverse=True)
    for got, ref in ((yf, yf_ref), (yb, yb_ref)):
        if not jnp.allclose(got, ref, atol=5e-2, rtol=5e-2):
            err = float(jnp.max(jnp.abs(got - ref)))
            raise AssertionError(
                f"Pallas GRU kernel mismatch vs reference (max abs err {err})")

    # --- Check 2: Pallas joint vs. pure-JAX f32 reference -------------------
    # (bf16 MXU operands / bf16 logits store, so tolerances are loosened.)
    enc_out = encoder_forward(params, inputs, input_lengths)
    dec_out = decoder_forward(
        params,
        jnp.concatenate([jnp.zeros((B, 1), targets.dtype), targets], axis=1),
        target_lengths + 1)
    ref = joint_reference(enc_out, dec_out, params["joint_w1"],
                          params["joint_b1"], params["joint_fc"])
    got = logits.astype(jnp.float32)
    if not jnp.allclose(got, ref, atol=5e-2, rtol=5e-2):
        err = float(jnp.max(jnp.abs(got - ref)))
        raise AssertionError(
            f"Pallas joint kernel mismatch vs reference (max abs err {err})")

    # TODO(synk): greedy decode()/recognize() (token-by-token autoregressive
    # loops) are host-driven control flow and are not implemented as kernels.
    print("KERNEL_OK")
</pallas_src>

<mosaic_0001>
module attributes {stable_mosaic.version = 11 : i64} {
  func.func @_linear_kernel(%arg0: i32, %arg1: memref<16x128xbf16, #tpu.memory_space<vmem>>, %arg2: memref<128x384xbf16, #tpu.memory_space<vmem>>, %arg3: memref<1x384xf32, #tpu.memory_space<vmem>>, %arg4: memref<16x384xf32, #tpu.memory_space<vmem>>) attributes {dimension_semantics = [#tpu.dimension_semantics<parallel>], iteration_bounds = array<i64: 1>, scalar_prefetch = 0 : i64, scratch_operands = 0 : i64, tpu.core_type = #tpu.core_type<tc>, window_params = [{transform_indices = @transform_0, window_bounds = array<i64: 16, 128>}, {pipeline_mode = #tpu.pipeline_mode<synchronous>, transform_indices = @transform_1, window_bounds = array<i64: 128, 384>}, {pipeline_mode = #tpu.pipeline_mode<synchronous>, transform_indices = @transform_2, window_bounds = array<i64: 1, 384>}, {transform_indices = @transform_3, window_bounds = array<i64: 16, 384>}]} {
    %c0 = arith.constant 0 : index
    %c0_0 = arith.constant 0 : index
    %0 = vector.load %arg1[%c0, %c0_0] : memref<16x128xbf16, #tpu.memory_space<vmem>>, vector<16x128xbf16>
    %c0_1 = arith.constant 0 : index
    %c0_2 = arith.constant 0 : index
    %1 = vector.load %arg2[%c0_1, %c0_2] : memref<128x384xbf16, #tpu.memory_space<vmem>>, vector<128x384xbf16>
    %cst = arith.constant dense<0.000000e+00> : vector<16x384xf32>
    %2 = tpu.matmul %0, %1, %cst {dimension_numbers = #tpu.dot_dimension_numbers<[1], [0], [0], [1], [0, 0, 1, 1], [], []>} : vector<16x128xbf16>, vector<128x384xbf16>, vector<16x384xf32> -> vector<16x384xf32>
    %c0_3 = arith.constant 0 : index
    %c0_4 = arith.constant 0 : index
    %3 = vector.load %arg3[%c0_3, %c0_4] : memref<1x384xf32, #tpu.memory_space<vmem>>, vector<1x384xf32>
    %4 = vector.broadcast %3 : vector<1x384xf32> to vector<16x384xf32>
    %5 = arith.addf %2, %4 : vector<16x384xf32>
    %c0_5 = arith.constant 0 : index
    %c0_6 = arith.constant 0 : index
    %6 = vector.load %arg4[%c0_5, %c0_6] : memref<16x384xf32, #tpu.memory_space<vmem>>, vector<16x384xf32>
    tpu.vector_store %arg4[%c0_5, %c0_6], %5 {strides = array<i32>} : memref<16x384xf32, #tpu.memory_space<vmem>>, vector<16x384xf32>,
    return
  }
  func.func @transform_0(%arg0: i32) -> (i32, i32) {
    %c0_i32 = arith.constant 0 : i32
    %c0_i32_0 = arith.constant 0 : i32
    return %arg0, %c0_i32 : i32, i32
  }
  func.func @transform_1(%arg0: i32) -> (i32, i32) {
    %c0_i32 = arith.constant 0 : i32
    %c0_i32_0 = arith.constant 0 : i32
    %c0_i32_1 = arith.constant 0 : i32
    return %c0_i32, %c0_i32_0 : i32, i32
  }
  func.func @transform_2(%arg0: i32) -> (i32, i32) {
    %c0_i32 = arith.constant 0 : i32
    %c0_i32_0 = arith.constant 0 : i32
    %c0_i32_1 = arith.constant 0 : i32
    return %c0_i32, %c0_i32_0 : i32, i32
  }
  func.func @transform_3(%arg0: i32) -> (i32, i32) {
    %c0_i32 = arith.constant 0 : i32
    %c0_i32_0 = arith.constant 0 : i32
    return %arg0, %c0_i32 : i32, i32
  }
}

module attributes {stable_mosaic.version = 11 : i64} {
  func.func @_gru_kernel(%arg0: i32, %arg1: memref<1x2x8x384xf32, #tpu.memory_space<vmem>>, %arg2: memref<1x2x8x1xf32, #tpu.memory_space<vmem>>, %arg3: memref<2x128x384xbf16, #tpu.memory_space<vmem>>, %arg4: memref<2x1x384xf32, #tpu.memory_space<vmem>>, %arg5: memref<1x2x8x128xf32, #tpu.memory_space<vmem>>, %arg6: memref<2x8x128xf32, #tpu.memory_space<vmem>>) attributes {dimension_semantics = [#tpu.dimension_semantics<arbitrary>], iteration_bounds = array<i64: 8>, scalar_prefetch = 0 : i64, scratch_operands = 1 : i64, tpu.core_type = #tpu.core_type<tc>, window_params = [{transform_indices = @transform_0, window_bounds = array<i64: 1, 2, 8, 384>}, {transform_indices = @transform_1, window_bounds = array<i64: 1, 2, 8, 1>}, {pipeline_mode = #tpu.pipeline_mode<synchronous>, transform_indices = @transform_2, window_bounds = array<i64: 2, 128, 384>}, {pipeline_mode = #tpu.pipeline_mode<synchronous>, transform_indices = @transform_3, window_bounds = array<i64: 2, 1, 384>}, {transform_indices = @transform_4, window_bounds = array<i64: 1, 2, 8, 128>}]} {
    %c0_i32 = arith.constant 0 : i32
    %0 = arith.cmpi eq, %arg0, %c0_i32 : i32
    %1 = arith.extui %0 : i1 to i32
    %c0_i32_0 = arith.constant 0 : i32
    %2 = arith.cmpi ne, %1, %c0_i32_0 : i32
    scf.if %2 {
      %cst_56 = arith.constant 0.000000e+00 : f32
      %113 = vector.broadcast %cst_56 : f32 to vector<2x8x128xf32>
      %c0_57 = arith.constant 0 : index
      %c0_58 = arith.constant 0 : index
      %c0_59 = arith.constant 0 : index
      %114 = vector.load %arg6[%c0_57, %c0_58, %c0_59] : memref<2x8x128xf32, #tpu.memory_space<vmem>>, vector<2x8x128xf32>
      tpu.vector_store %arg6[%c0_57, %c0_58, %c0_59], %113 {strides = array<i32>} : memref<2x8x128xf32, #tpu.memory_space<vmem>>, vector<2x8x128xf32>,
    } else {
    }
    %c0 = arith.constant 0 : index
    %c0_1 = arith.constant 0 : index
    %c0_2 = arith.constant 0 : index
    %3 = vector.load %arg6[%c0, %c0_1, %c0_2] : memref<2x8x128xf32, #tpu.memory_space<vmem>>, vector<1x8x128xf32>
    %4 = vector.shape_cast %3 : vector<1x8x128xf32> to vector<8x128xf32>
    %c0_3 = arith.constant 0 : index
    %c0_4 = arith.constant 0 : index
    %c0_5 = arith.constant 0 : index
    %c0_6 = arith.constant 0 : index
    %5 = vector.load %arg1[%c0_3, %c0_4, %c0_5, %c0_6] : memref<1x2x8x384xf32, #tpu.memory_space<vmem>>, vector<1x1x8x384xf32>
    %6 = vector.shape_cast %5 : vector<1x1x8x384xf32> to vector<8x384xf32>
    %7 = arith.truncf %4 : vector<8x128xf32> to vector<8x128xbf16>
    %c0_7 = arith.constant 0 : index
    %c0_8 = arith.constant 0 : index
    %c0_9 = arith.constant 0 : index
    %8 = vector.load %arg3[%c0_7, %c0_8, %c0_9] : memref<2x128x384xbf16, #tpu.memory_space<vmem>>, vector<1x128x384xbf16>
    %9 = vector.shape_cast %8 : vector<1x128x384xbf16> to vector<128x384xbf16>
    %cst = arith.constant dense<0.000000e+00> : vector<8x384xf32>
    %10 = tpu.matmul %7, %9, %cst {dimension_numbers = #tpu.dot_dimension_numbers<[1], [0], [0], [1], [0, 0, 1, 1], [], []>} : vector<8x128xbf16>, vector<128x384xbf16>, vector<8x384xf32> -> vector<8x384xf32>
    %c0_10 = arith.constant 0 : index
    %c0_11 = arith.constant 0 : index
    %c0_12 = arith.constant 0 : index
    %11 = vector.load %arg4[%c0_10, %c0_11, %c0_12] : memref<2x1x384xf32, #tpu.memory_space<vmem>>, vector<1x1x384xf32>
    %12 = vector.shape_cast %11 : vector<1x1x384xf32> to vector<1x384xf32>
    %13 = vector.broadcast %12 : vector<1x384xf32> to vector<8x384xf32>
    %14 = arith.addf %10, %13 : vector<8x384xf32>
    %15 = vector.extract_strided_slice %6 {offsets = [0, 0], sizes = [8, 128], strides = [1, 1]} : vector<8x384xf32> to vector<8x128xf32>
    %16 = vector.extract_strided_slice %14 {offsets = [0, 0], sizes = [8, 128], strides = [1, 1]} : vector<8x384xf32> to vector<8x128xf32>
    %17 = arith.addf %15, %16 : vector<8x128xf32>
    %18 = arith.negf %17 : vector<8x128xf32>
    %19 = math.exp %18 : vector<8x128xf32>
    %cst_13 = arith.constant 1.000000e+00 : f32
    %20 = vector.broadcast %cst_13 : f32 to vector<8x128xf32>
    %21 = arith.addf %20, %19 : vector<8x128xf32>
    %22 = arith.divf %20, %21 : vector<8x128xf32>
    %23 = vector.extract_strided_slice %6 {offsets = [0, 128], sizes = [8, 128], strides = [1, 1]} : vector<8x384xf32> to vector<8x128xf32>
    %24 = vector.extract_strided_slice %14 {offsets = [0, 128], sizes = [8, 128], strides = [1, 1]} : vector<8x384xf32> to vector<8x128xf32>
    %25 = arith.addf %23, %24 : vector<8x128xf32>
    %26 = arith.negf %25 : vector<8x128xf32>
    %27 = math.exp %26 : vector<8x128xf32>
    %cst_14 = arith.constant 1.000000e+00 : f32
    %28 = vector.broadcast %cst_14 : f32 to vector<8x128xf32>
    %29 = arith.addf %28, %27 : vector<8x128xf32>
    %30 = arith.divf %28, %29 : vector<8x128xf32>
    %31 = vector.extract_strided_slice %6 {offsets = [0, 256], sizes = [8, 128], strides = [1, 1]} : vector<8x384xf32> to vector<8x128xf32>
    %32 = vector.extract_strided_slice %14 {offsets = [0, 256], sizes = [8, 128], strides = [1, 1]} : vector<8x384xf32> to vector<8x128xf32>
    %33 = arith.mulf %22, %32 : vector<8x128xf32>
    %34 = arith.addf %31, %33 : vector<8x128xf32>
    %35 = math.tanh %34 : vector<8x128xf32>
    %cst_15 = arith.constant 1.000000e+00 : f32
    %36 = vector.broadcast %cst_15 : f32 to vector<8x128xf32>
    %37 = arith.subf %36, %30 : vector<8x128xf32>
    %38 = arith.mulf %37, %35 : vector<8x128xf32>
    %39 = arith.mulf %30, %4 : vector<8x128xf32>
    %40 = arith.addf %38, %39 : vector<8x128xf32>
    %c0_16 = arith.constant 0 : index
    %c0_17 = arith.constant 0 : index
    %c0_18 = arith.constant 0 : index
    %c0_19 = arith.constant 0 : index
    %41 = vector.load %arg2[%c0_16, %c0_17, %c0_18, %c0_19] : memref<1x2x8x1xf32, #tpu.memory_space<vmem>>, vector<1x1x8x1xf32>
    %42 = vector.shape_cast %41 : vector<1x1x8x1xf32> to vector<8x1xf32>
    %43 = vector.broadcast %42 : vector<8x1xf32> to vector<8x128xf32>
    %44 = arith.mulf %43, %40 : vector<8x128xf32>
    %cst_20 = arith.constant 1.000000e+00 : f32
    %45 = vector.broadcast %cst_20 : f32 to vector<8x1xf32>
    %46 = arith.subf %45, %42 : vector<8x1xf32>
    %47 = vector.broadcast %46 : vector<8x1xf32> to vector<8x128xf32>
    %48 = arith.mulf %47, %4 : vector<8x128xf32>
    %49 = arith.addf %44, %48 : vector<8x128xf32>
    %c0_21 = arith.constant 0 : index
    %c0_22 = arith.constant 0 : index
    %c0_23 = arith.constant 0 : index
    %50 = vector.load %arg6[%c0_21, %c0_22, %c0_23] : memref<2x8x128xf32, #tpu.memory_space<vmem>>, vector<1x8x128xf32>
    %51 = vector.shape_cast %50 : vector<1x8x128xf32> to vector<8x128xf32>
    %52 = vector.shape_cast %49 : vector<8x128xf32> to vector<1x8x128xf32>
    tpu.vector_store %arg6[%c0_21, %c0_22, %c0_23], %52 {strides = array<i32>} : memref<2x8x128xf32, #tpu.memory_space<vmem>>, vector<1x8x128xf32>,
    %53 = vector.broadcast %42 : vector<8x1xf32> to vector<8x128xf32>
    %54 = arith.mulf %53, %40 : vector<8x128xf32>
    %c0_24 = arith.constant 0 : index
    %c0_25 = arith.constant 0 : index
    %c0_26 = arith.constant 0 : index
    %c0_27 = arith.constant 0 : index
    %55 = vector.load %arg5[%c0_24, %c0_25, %c0_26, %c0_27] : memref<1x2x8x128xf32, #tpu.memory_space<vmem>>, vector<1x1x8x128xf32>
    %56 = vector.shape_cast %55 : vector<1x1x8x128xf32> to vector<8x128xf32>
    %57 = vector.shape_cast %54 : vector<8x128xf32> to vector<1x1x8x128xf32>
    tpu.vector_store %arg5[%c0_24, %c0_25, %c0_26, %c0_27], %57 {strides = array<i32>} : memref<1x2x8x128xf32, #tpu.memory_space<vmem>>, vector<1x1x8x128xf32>,
    %c1 = arith.constant 1 : index
    %c0_28 = arith.constant 0 : index
    %c0_29 = arith.constant 0 : index
    %58 = vector.load %arg6[%c1, %c0_28, %c0_29] : memref<2x8x128xf32, #tpu.memory_space<vmem>>, vector<1x8x128xf32>
    %59 = vector.shape_cast %58 : vector<1x8x128xf32> to vector<8x128xf32>
    %c0_30 = arith.constant 0 : index
    %c1_31 = arith.constant 1 : index
    %c0_32 = arith.constant 0 : index
    %c0_33 = arith.constant 0 : index
    %60 = vector.load %arg1[%c0_30, %c1_31, %c0_32, %c0_33] : memref<1x2x8x384xf32, #tpu.memory_space<vmem>>, vector<1x1x8x384xf32>
    %61 = vector.shape_cast %60 : vector<1x1x8x384xf32> to vector<8x384xf32>
    %62 = arith.truncf %59 : vector<8x128xf32> to vector<8x128xbf16>
    %c1_34 = arith.constant 1 : index
    %c0_35 = arith.constant 0 : index
    %c0_36 = arith.constant 0 : index
    %63 = vector.load %arg3[%c1_34, %c0_35, %c0_36] : memref<2x128x384xbf16, #tpu.memory_space<vmem>>, vector<1x128x384xbf16>
    %64 = vector.shape_cast %63 : vector<1x128x384xbf16> to vector<128x384xbf16>
    %cst_37 = arith.constant dense<0.000000e+00> : vector<8x384xf32>
    %65 = tpu.matmul %62, %64, %cst_37 {dimension_numbers = #tpu.dot_dimension_numbers<[1], [0], [0], [1], [0, 0, 1, 1], [], []>} : vector<8x128xbf16>, vector<128x384xbf16>, vector<8x384xf32> -> vector<8x384xf32>
    %c1_38 = arith.constant 1 : index
    %c0_39 = arith.constant 0 : index
    %c0_40 = arith.constant 0 : index
    %66 = vector.load %arg4[%c1_38, %c0_39, %c0_40] : memref<2x1x384xf32, #tpu.memory_space<vmem>>, vector<1x1x384xf32>
    %67 = vector.shape_cast %66 : vector<1x1x384xf32> to vector<1x384xf32>
    %68 = vector.broadcast %67 : vector<1x384xf32> to vector<8x384xf32>
    %69 = arith.addf %65, %68 : vector<8x384xf32>
    %70 = vector.extract_strided_slice %61 {offsets = [0, 0], sizes = [8, 128], strides = [1, 1]} : vector<8x384xf32> to vector<8x128xf32>
    %71 = vector.extract_strided_slice %69 {offsets = [0, 0], sizes = [8, 128], strides = [1, 1]} : vector<8x384xf32> to vector<8x128xf32>
    %72 = arith.addf %70, %71 : vector<8x128xf32>
    %73 = arith.negf %72 : vector<8x128xf32>
    %74 = math.exp %73 : vector<8x128xf32>
    %cst_41 = arith.constant 1.000000e+00 : f32
    %75 = vector.broadcast %cst_41 : f32 to vector<8x128xf32>
    %76 = arith.addf %75, %74 : vector<8x128xf32>
    %77 = arith.divf %75, %76 : vector<8x128xf32>
    %78 = vector.extract_strided_slice %61 {offsets = [0, 128], sizes = [8, 128], strides = [1, 1]} : vector<8x384xf32> to vector<8x128xf32>
    %79 = vector.extract_strided_slice %69 {offsets = [0, 128], sizes = [8, 128], strides = [1, 1]} : vector<8x384xf32> to vector<8x128xf32>
    %80 = arith.addf %78, %79 : vector<8x128xf32>
    %81 = arith.negf %80 : vector<8x128xf32>
    %82 = math.exp %81 : vector<8x128xf32>
    %cst_42 = arith.constant 1.000000e+00 : f32
    %83 = vector.broadcast %cst_42 : f32 to vector<8x128xf32>
    %84 = arith.addf %83, %82 : vector<8x128xf32>
    %85 = arith.divf %83, %84 : vector<8x128xf32>
    %86 = vector.extract_strided_slice %61 {offsets = [0, 256], sizes = [8, 128], strides = [1, 1]} : vector<8x384xf32> to vector<8x128xf32>
    %87 = vector.extract_strided_slice %69 {offsets = [0, 256], sizes = [8, 128], strides = [1, 1]} : vector<8x384xf32> to vector<8x128xf32>
    %88 = arith.mulf %77, %87 : vector<8x128xf32>
    %89 = arith.addf %86, %88 : vector<8x128xf32>
    %90 = math.tanh %89 : vector<8x128xf32>
    %cst_43 = arith.constant 1.000000e+00 : f32
    %91 = vector.broadcast %cst_43 : f32 to vector<8x128xf32>
    %92 = arith.subf %91, %85 : vector<8x128xf32>
    %93 = arith.mulf %92, %90 : vector<8x128xf32>
    %94 = arith.mulf %85, %59 : vector<8x128xf32>
    %95 = arith.addf %93, %94 : vector<8x128xf32>
    %c0_44 = arith.constant 0 : index
    %c1_45 = arith.constant 1 : index
    %c0_46 = arith.constant 0 : index
    %c0_47 = arith.constant 0 : index
    %96 = vector.load %arg2[%c0_44, %c1_45, %c0_46, %c0_47] : memref<1x2x8x1xf32, #tpu.memory_space<vmem>>, vector<1x1x8x1xf32>
    %97 = vector.shape_cast %96 : vector<1x1x8x1xf32> to vector<8x1xf32>
    %98 = vector.broadcast %97 : vector<8x1xf32> to vector<8x128xf32>
    %99 = arith.mulf %98, %95 : vector<8x128xf32>
    %cst_48 = arith.constant 1.000000e+00 : f32
    %100 = vector.broadcast %cst_48 : f32 to vector<8x1xf32>
    %101 = arith.subf %100, %97 : vector<8x1xf32>
    %102 = vector.broadcast %101 : vector<8x1xf32> to vector<8x128xf32>
    %103 = arith.mulf %102, %59 : vector<8x128xf32>
    %104 = arith.addf %99, %103 : vector<8x128xf32>
    %c1_49 = arith.constant 1 : index
    %c0_50 = arith.constant 0 : index
    %c0_51 = arith.constant 0 : index
    %105 = vector.load %arg6[%c1_49, %c0_50, %c0_51] : memref<2x8x128xf32, #tpu.memory_space<vmem>>, vector<1x8x128xf32>
    %106 = vector.shape_cast %105 : vector<1x8x128xf32> to vector<8x128xf32>
    %107 = vector.shape_cast %104 : vector<8x128xf32> to vector<1x8x128xf32>
    tpu.vector_store %arg6[%c1_49, %c0_50, %c0_51], %107 {strides = array<i32>} : memref<2x8x128xf32, #tpu.memory_space<vmem>>, vector<1x8x128xf32>,
    %108 = vector.broadcast %97 : vector<8x1xf32> to vector<8x128xf32>
    %109 = arith.mulf %108, %95 : vector<8x128xf32>
    %c0_52 = arith.constant 0 : index
    %c1_53 = arith.constant 1 : index
    %c0_54 = arith.constant 0 : index
    %c0_55 = arith.constant 0 : index
    %110 = vector.load %arg5[%c0_52, %c1_53, %c0_54, %c0_55] : memref<1x2x8x128xf32, #tpu.memory_space<vmem>>, vector<1x1x8x128xf32>
    %111 = vector.shape_cast %110 : vector<1x1x8x128xf32> to vector<8x128xf32>
    %112 = vector.shape_cast %109 : vector<8x128xf32> to vector<1x1x8x128xf32>
    tpu.vector_store %arg5[%c0_52, %c1_53, %c0_54, %c0_55], %112 {strides = array<i32>} : memref<1x2x8x128xf32, #tpu.memory_space<vmem>>, vector<1x1x8x128xf32>,
    return
  }
  func.func @transform_0(%arg0: i32) -> (i32, i32, i32, i32) {
    %c0_i32 = arith.constant 0 : i32
    %c0_i32_0 = arith.constant 0 : i32
    %c0_i32_1 = arith.constant 0 : i32
    %c0_i32_2 = arith.constant 0 : i32
    return %arg0, %c0_i32, %c0_i32_0, %c0_i32_1 : i32, i32, i32, i32
  }
  func.func @transform_1(%arg0: i32) -> (i32, i32, i32, i32) {
    %c0_i32 = arith.constant 0 : i32
    %c0_i32_0 = arith.constant 0 : i32
    %c0_i32_1 = arith.constant 0 : i32
    %c0_i32_2 = arith.constant 0 : i32
    return %arg0, %c0_i32, %c0_i32_0, %c0_i32_1 : i32, i32, i32, i32
  }
  func.func @transform_2(%arg0: i32) -> (i32, i32, i32) {
    %c0_i32 = arith.constant 0 : i32
    %c0_i32_0 = arith.constant 0 : i32
    %c0_i32_1 = arith.constant 0 : i32
    %c0_i32_2 = arith.constant 0 : i32
    return %c0_i32, %c0_i32_0, %c0_i32_1 : i32, i32, i32
  }
  func.func @transform_3(%arg0: i32) -> (i32, i32, i32) {
    %c0_i32 = arith.constant 0 : i32
    %c0_i32_0 = arith.constant 0 : i32
    %c0_i32_1 = arith.constant 0 : i32
    %c0_i32_2 = arith.constant 0 : i32
    return %c0_i32, %c0_i32_0, %c0_i32_1 : i32, i32, i32
  }
  func.func @transform_4(%arg0: i32) -> (i32, i32, i32, i32) {
    %c0_i32 = arith.constant 0 : i32
    %c0_i32_0 = arith.constant 0 : i32
    %c0_i32_1 = arith.constant 0 : i32
    %c0_i32_2 = arith.constant 0 : i32
    return %arg0, %c0_i32, %c0_i32_0, %c0_i32_1 : i32, i32, i32, i32
  }
}

module attributes {stable_mosaic.version = 11 : i64} {
  func.func @_linear_kernel(%arg0: i32, %arg1: memref<16x128xbf16, #tpu.memory_space<vmem>>, %arg2: memref<128x128xbf16, #tpu.memory_space<vmem>>, %arg3: memref<1x128xf32, #tpu.memory_space<vmem>>, %arg4: memref<16x128xf32, #tpu.memory_space<vmem>>) attributes {dimension_semantics = [#tpu.dimension_semantics<parallel>], iteration_bounds = array<i64: 1>, scalar_prefetch = 0 : i64, scratch_operands = 0 : i64, tpu.core_type = #tpu.core_type<tc>, window_params = [{transform_indices = @transform_0, window_bounds = array<i64: 16, 128>}, {pipeline_mode = #tpu.pipeline_mode<synchronous>, transform_indices = @transform_1, window_bounds = array<i64: 128, 128>}, {pipeline_mode = #tpu.pipeline_mode<synchronous>, transform_indices = @transform_2, window_bounds = array<i64: 1, 128>}, {transform_indices = @transform_3, window_bounds = array<i64: 16, 128>}]} {
    %c0 = arith.constant 0 : index
    %c0_0 = arith.constant 0 : index
    %0 = vector.load %arg1[%c0, %c0_0] : memref<16x128xbf16, #tpu.memory_space<vmem>>, vector<16x128xbf16>
    %c0_1 = arith.constant 0 : index
    %c0_2 = arith.constant 0 : index
    %1 = vector.load %arg2[%c0_1, %c0_2] : memref<128x128xbf16, #tpu.memory_space<vmem>>, vector<128x128xbf16>
    %cst = arith.constant dense<0.000000e+00> : vector<16x128xf32>
    %2 = tpu.matmul %0, %1, %cst {dimension_numbers = #tpu.dot_dimension_numbers<[1], [0], [0], [1], [0, 0, 1, 1], [], []>} : vector<16x128xbf16>, vector<128x128xbf16>, vector<16x128xf32> -> vector<16x128xf32>
    %c0_3 = arith.constant 0 : index
    %c0_4 = arith.constant 0 : index
    %3 = vector.load %arg3[%c0_3, %c0_4] : memref<1x128xf32, #tpu.memory_space<vmem>>, vector<1x128xf32>
    %4 = vector.broadcast %3 : vector<1x128xf32> to vector<16x128xf32>
    %5 = arith.addf %2, %4 : vector<16x128xf32>
    %c0_5 = arith.constant 0 : index
    %c0_6 = arith.constant 0 : index
    %6 = vector.load %arg4[%c0_5, %c0_6] : memref<16x128xf32, #tpu.memory_space<vmem>>, vector<16x128xf32>
    tpu.vector_store %arg4[%c0_5, %c0_6], %5 {strides = array<i32>} : memref<16x128xf32, #tpu.memory_space<vmem>>, vector<16x128xf32>,
    return
  }
  func.func @transform_0(%arg0: i32) -> (i32, i32) {
    %c0_i32 = arith.constant 0 : i32
    %c0_i32_0 = arith.constant 0 : i32
    return %arg0, %c0_i32 : i32, i32
  }
  func.func @transform_1(%arg0: i32) -> (i32, i32) {
    %c0_i32 = arith.constant 0 : i32
    %c0_i32_0 = arith.constant 0 : i32
    %c0_i32_1 = arith.constant 0 : i32
    return %c0_i32, %c0_i32_0 : i32, i32
  }
  func.func @transform_2(%arg0: i32) -> (i32, i32) {
    %c0_i32 = arith.constant 0 : i32
    %c0_i32_0 = arith.constant 0 : i32
    %c0_i32_1 = arith.constant 0 : i32
    return %c0_i32, %c0_i32_0 : i32, i32
  }
  func.func @transform_3(%arg0: i32) -> (i32, i32) {
    %c0_i32 = arith.constant 0 : i32
    %c0_i32_0 = arith.constant 0 : i32
    return %arg0, %c0_i32 : i32, i32
  }
}

module attributes {stable_mosaic.version = 11 : i64} {
  func.func @_linear_kernel(%arg0: i32, %arg1: memref<16x128xbf16, #tpu.memory_space<vmem>>, %arg2: memref<128x128xbf16, #tpu.memory_space<vmem>>, %arg3: memref<1x128xf32, #tpu.memory_space<vmem>>, %arg4: memref<16x128xbf16, #tpu.memory_space<vmem>>) attributes {dimension_semantics = [#tpu.dimension_semantics<parallel>], iteration_bounds = array<i64: 1>, scalar_prefetch = 0 : i64, scratch_operands = 0 : i64, tpu.core_type = #tpu.core_type<tc>, window_params = [{transform_indices = @transform_0, window_bounds = array<i64: 16, 128>}, {pipeline_mode = #tpu.pipeline_mode<synchronous>, transform_indices = @transform_1, window_bounds = array<i64: 128, 128>}, {pipeline_mode = #tpu.pipeline_mode<synchronous>, transform_indices = @transform_2, window_bounds = array<i64: 1, 128>}, {transform_indices = @transform_3, window_bounds = array<i64: 16, 128>}]} {
    %c0 = arith.constant 0 : index
    %c0_0 = arith.constant 0 : index
    %0 = vector.load %arg1[%c0, %c0_0] : memref<16x128xbf16, #tpu.memory_space<vmem>>, vector<16x128xbf16>
    %c0_1 = arith.constant 0 : index
    %c0_2 = arith.constant 0 : index
    %1 = vector.load %arg2[%c0_1, %c0_2] : memref<128x128xbf16, #tpu.memory_space<vmem>>, vector<128x128xbf16>
    %cst = arith.constant dense<0.000000e+00> : vector<16x128xf32>
    %2 = tpu.matmul %0, %1, %cst {dimension_numbers = #tpu.dot_dimension_numbers<[1], [0], [0], [1], [0, 0, 1, 1], [], []>} : vector<16x128xbf16>, vector<128x128xbf16>, vector<16x128xf32> -> vector<16x128xf32>
    %c0_3 = arith.constant 0 : index
    %c0_4 = arith.constant 0 : index
    %3 = vector.load %arg3[%c0_3, %c0_4] : memref<1x128xf32, #tpu.memory_space<vmem>>, vector<1x128xf32>
    %4 = vector.broadcast %3 : vector<1x128xf32> to vector<16x128xf32>
    %5 = arith.addf %2, %4 : vector<16x128xf32>
    %6 = arith.truncf %5 : vector<16x128xf32> to vector<16x128xbf16>
    %c0_5 = arith.constant 0 : index
    %c0_6 = arith.constant 0 : index
    %7 = vector.load %arg4[%c0_5, %c0_6] : memref<16x128xbf16, #tpu.memory_space<vmem>>, vector<16x128xbf16>
    tpu.vector_store %arg4[%c0_5, %c0_6], %6 {strides = array<i32>} : memref<16x128xbf16, #tpu.memory_space<vmem>>, vector<16x128xbf16>,
    return
  }
  func.func @transform_0(%arg0: i32) -> (i32, i32) {
    %c0_i32 = arith.constant 0 : i32
    %c0_i32_0 = arith.constant 0 : i32
    return %arg0, %c0_i32 : i32, i32
  }
  func.func @transform_1(%arg0: i32) -> (i32, i32) {
    %c0_i32 = arith.constant 0 : i32
    %c0_i32_0 = arith.constant 0 : i32
    %c0_i32_1 = arith.constant 0 : i32
    return %c0_i32, %c0_i32_0 : i32, i32
  }
  func.func @transform_2(%arg0: i32) -> (i32, i32) {
    %c0_i32 = arith.constant 0 : i32
    %c0_i32_0 = arith.constant 0 : i32
    %c0_i32_1 = arith.constant 0 : i32
    return %c0_i32, %c0_i32_0 : i32, i32
  }
  func.func @transform_3(%arg0: i32) -> (i32, i32) {
    %c0_i32 = arith.constant 0 : i32
    %c0_i32_0 = arith.constant 0 : i32
    return %arg0, %c0_i32 : i32, i32
  }
}

module attributes {stable_mosaic.version = 11 : i64} {
  func.func @_gru_kernel(%arg0: i32, %arg1: memref<1x1x8x384xf32, #tpu.memory_space<vmem>>, %arg2: memref<1x1x8x1xf32, #tpu.memory_space<vmem>>, %arg3: memref<1x128x384xbf16, #tpu.memory_space<vmem>>, %arg4: memref<1x1x384xf32, #tpu.memory_space<vmem>>, %arg5: memref<1x1x8x128xf32, #tpu.memory_space<vmem>>, %arg6: memref<1x8x128xf32, #tpu.memory_space<vmem>>) attributes {dimension_semantics = [#tpu.dimension_semantics<arbitrary>], iteration_bounds = array<i64: 7>, scalar_prefetch = 0 : i64, scratch_operands = 1 : i64, tpu.core_type = #tpu.core_type<tc>, window_params = [{transform_indices = @transform_0, window_bounds = array<i64: 1, 1, 8, 384>}, {transform_indices = @transform_1, window_bounds = array<i64: 1, 1, 8, 1>}, {pipeline_mode = #tpu.pipeline_mode<synchronous>, transform_indices = @transform_2, window_bounds = array<i64: 1, 128, 384>}, {pipeline_mode = #tpu.pipeline_mode<synchronous>, transform_indices = @transform_3, window_bounds = array<i64: 1, 1, 384>}, {transform_indices = @transform_4, window_bounds = array<i64: 1, 1, 8, 128>}]} {
    %c0_i32 = arith.constant 0 : i32
    %0 = arith.cmpi eq, %arg0, %c0_i32 : i32
    %1 = arith.extui %0 : i1 to i32
    %c0_i32_0 = arith.constant 0 : i32
    %2 = arith.cmpi ne, %1, %c0_i32_0 : i32
    scf.if %2 {
      %cst_28 = arith.constant 0.000000e+00 : f32
      %58 = vector.broadcast %cst_28 : f32 to vector<1x8x128xf32>
      %c0_29 = arith.constant 0 : index
      %c0_30 = arith.constant 0 : index
      %c0_31 = arith.constant 0 : index
      %59 = vector.load %arg6[%c0_29, %c0_30, %c0_31] : memref<1x8x128xf32, #tpu.memory_space<vmem>>, vector<1x8x128xf32>
      tpu.vector_store %arg6[%c0_29, %c0_30, %c0_31], %58 {strides = array<i32>} : memref<1x8x128xf32, #tpu.memory_space<vmem>>, vector<1x8x128xf32>,
    } else {
    }
    %c0 = arith.constant 0 : index
    %c0_1 = arith.constant 0 : index
    %c0_2 = arith.constant 0 : index
    %3 = vector.load %arg6[%c0, %c0_1, %c0_2] : memref<1x8x128xf32, #tpu.memory_space<vmem>>, vector<1x8x128xf32>
    %4 = vector.shape_cast %3 : vector<1x8x128xf32> to vector<8x128xf32>
    %c0_3 = arith.constant 0 : index
    %c0_4 = arith.constant 0 : index
    %c0_5 = arith.constant 0 : index
    %c0_6 = arith.constant 0 : index
    %5 = vector.load %arg1[%c0_3, %c0_4, %c0_5, %c0_6] : memref<1x1x8x384xf32, #tpu.memory_space<vmem>>, vector<1x1x8x384xf32>
    %6 = vector.shape_cast %5 : vector<1x1x8x384xf32> to vector<8x384xf32>
    %7 = arith.truncf %4 : vector<8x128xf32> to vector<8x128xbf16>
    %c0_7 = arith.constant 0 : index
    %c0_8 = arith.constant 0 : index
    %c0_9 = arith.constant 0 : index
    %8 = vector.load %arg3[%c0_7, %c0_8, %c0_9] : memref<1x128x384xbf16, #tpu.memory_space<vmem>>, vector<1x128x384xbf16>
    %9 = vector.shape_cast %8 : vector<1x128x384xbf16> to vector<128x384xbf16>
    %cst = arith.constant dense<0.000000e+00> : vector<8x384xf32>
    %10 = tpu.matmul %7, %9, %cst {dimension_numbers = #tpu.dot_dimension_numbers<[1], [0], [0], [1], [0, 0, 1, 1], [], []>} : vector<8x128xbf16>, vector<128x384xbf16>, vector<8x384xf32> -> vector<8x384xf32>
    %c0_10 = arith.constant 0 : index
    %c0_11 = arith.constant 0 : index
    %c0_12 = arith.constant 0 : index
    %11 = vector.load %arg4[%c0_10, %c0_11, %c0_12] : memref<1x1x384xf32, #tpu.memory_space<vmem>>, vector<1x1x384xf32>
    %12 = vector.shape_cast %11 : vector<1x1x384xf32> to vector<1x384xf32>
    %13 = vector.broadcast %12 : vector<1x384xf32> to vector<8x384xf32>
    %14 = arith.addf %10, %13 : vector<8x384xf32>
    %15 = vector.extract_strided_slice %6 {offsets = [0, 0], sizes = [8, 128], strides = [1, 1]} : vector<8x384xf32> to vector<8x128xf32>
    %16 = vector.extract_strided_slice %14 {offsets = [0, 0], sizes = [8, 128], strides = [1, 1]} : vector<8x384xf32> to vector<8x128xf32>
    %17 = arith.addf %15, %16 : vector<8x128xf32>
    %18 = arith.negf %17 : vector<8x128xf32>
    %19 = math.exp %18 : vector<8x128xf32>
    %cst_13 = arith.constant 1.000000e+00 : f32
    %20 = vector.broadcast %cst_13 : f32 to vector<8x128xf32>
    %21 = arith.addf %20, %19 : vector<8x128xf32>
    %22 = arith.divf %20, %21 : vector<8x128xf32>
    %23 = vector.extract_strided_slice %6 {offsets = [0, 128], sizes = [8, 128], strides = [1, 1]} : vector<8x384xf32> to vector<8x128xf32>
    %24 = vector.extract_strided_slice %14 {offsets = [0, 128], sizes = [8, 128], strides = [1, 1]} : vector<8x384xf32> to vector<8x128xf32>
    %25 = arith.addf %23, %24 : vector<8x128xf32>
    %26 = arith.negf %25 : vector<8x128xf32>
    %27 = math.exp %26 : vector<8x128xf32>
    %cst_14 = arith.constant 1.000000e+00 : f32
    %28 = vector.broadcast %cst_14 : f32 to vector<8x128xf32>
    %29 = arith.addf %28, %27 : vector<8x128xf32>
    %30 = arith.divf %28, %29 : vector<8x128xf32>
    %31 = vector.extract_strided_slice %6 {offsets = [0, 256], sizes = [8, 128], strides = [1, 1]} : vector<8x384xf32> to vector<8x128xf32>
    %32 = vector.extract_strided_slice %14 {offsets = [0, 256], sizes = [8, 128], strides = [1, 1]} : vector<8x384xf32> to vector<8x128xf32>
    %33 = arith.mulf %22, %32 : vector<8x128xf32>
    %34 = arith.addf %31, %33 : vector<8x128xf32>
    %35 = math.tanh %34 : vector<8x128xf32>
    %cst_15 = arith.constant 1.000000e+00 : f32
    %36 = vector.broadcast %cst_15 : f32 to vector<8x128xf32>
    %37 = arith.subf %36, %30 : vector<8x128xf32>
    %38 = arith.mulf %37, %35 : vector<8x128xf32>
    %39 = arith.mulf %30, %4 : vector<8x128xf32>
    %40 = arith.addf %38, %39 : vector<8x128xf32>
    %c0_16 = arith.constant 0 : index
    %c0_17 = arith.constant 0 : index
    %c0_18 = arith.constant 0 : index
    %c0_19 = arith.constant 0 : index
    %41 = vector.load %arg2[%c0_16, %c0_17, %c0_18, %c0_19] : memref<1x1x8x1xf32, #tpu.memory_space<vmem>>, vector<1x1x8x1xf32>
    %42 = vector.shape_cast %41 : vector<1x1x8x1xf32> to vector<8x1xf32>
    %43 = vector.broadcast %42 : vector<8x1xf32> to vector<8x128xf32>
    %44 = arith.mulf %43, %40 : vector<8x128xf32>
    %cst_20 = arith.constant 1.000000e+00 : f32
    %45 = vector.broadcast %cst_20 : f32 to vector<8x1xf32>
    %46 = arith.subf %45, %42 : vector<8x1xf32>
    %47 = vector.broadcast %46 : vector<8x1xf32> to vector<8x128xf32>
    %48 = arith.mulf %47, %4 : vector<8x128xf32>
    %49 = arith.addf %44, %48 : vector<8x128xf32>
    %c0_21 = arith.constant 0 : index
    %c0_22 = arith.constant 0 : index
    %c0_23 = arith.constant 0 : index
    %50 = vector.load %arg6[%c0_21, %c0_22, %c0_23] : memref<1x8x128xf32, #tpu.memory_space<vmem>>, vector<1x8x128xf32>
    %51 = vector.shape_cast %50 : vector<1x8x128xf32> to vector<8x128xf32>
    %52 = vector.shape_cast %49 : vector<8x128xf32> to vector<1x8x128xf32>
    tpu.vector_store %arg6[%c0_21, %c0_22, %c0_23], %52 {strides = array<i32>} : memref<1x8x128xf32, #tpu.memory_space<vmem>>, vector<1x8x128xf32>,
    %53 = vector.broadcast %42 : vector<8x1xf32> to vector<8x128xf32>
    %54 = arith.mulf %53, %40 : vector<8x128xf32>
    %c0_24 = arith.constant 0 : index
    %c0_25 = arith.constant 0 : index
    %c0_26 = arith.constant 0 : index
    %c0_27 = arith.constant 0 : index
    %55 = vector.load %arg5[%c0_24, %c0_25, %c0_26, %c0_27] : memref<1x1x8x128xf32, #tpu.memory_space<vmem>>, vector<1x1x8x128xf32>
    %56 = vector.shape_cast %55 : vector<1x1x8x128xf32> to vector<8x128xf32>
    %57 = vector.shape_cast %54 : vector<8x128xf32> to vector<1x1x8x128xf32>
    tpu.vector_store %arg5[%c0_24, %c0_25, %c0_26, %c0_27], %57 {strides = array<i32>} : memref<1x1x8x128xf32, #tpu.memory_space<vmem>>, vector<1x1x8x128xf32>,
    return
  }
  func.func @transform_0(%arg0: i32) -> (i32, i32, i32, i32) {
    %c0_i32 = arith.constant 0 : i32
    %c0_i32_0 = arith.constant 0 : i32
    %c0_i32_1 = arith.constant 0 : i32
    %c0_i32_2 = arith.constant 0 : i32
    return %arg0, %c0_i32, %c0_i32_0, %c0_i32_1 : i32, i32, i32, i32
  }
  func.func @transform_1(%arg0: i32) -> (i32, i32, i32, i32) {
    %c0_i32 = arith.constant 0 : i32
    %c0_i32_0 = arith.constant 0 : i32
    %c0_i32_1 = arith.constant 0 : i32
    %c0_i32_2 = arith.constant 0 : i32
    return %arg0, %c0_i32, %c0_i32_0, %c0_i32_1 : i32, i32, i32, i32
  }
  func.func @transform_2(%arg0: i32) -> (i32, i32, i32) {
    %c0_i32 = arith.constant 0 : i32
    %c0_i32_0 = arith.constant 0 : i32
    %c0_i32_1 = arith.constant 0 : i32
    %c0_i32_2 = arith.constant 0 : i32
    return %c0_i32, %c0_i32_0, %c0_i32_1 : i32, i32, i32
  }
  func.func @transform_3(%arg0: i32) -> (i32, i32, i32) {
    %c0_i32 = arith.constant 0 : i32
    %c0_i32_0 = arith.constant 0 : i32
    %c0_i32_1 = arith.constant 0 : i32
    %c0_i32_2 = arith.constant 0 : i32
    return %c0_i32, %c0_i32_0, %c0_i32_1 : i32, i32, i32
  }
  func.func @transform_4(%arg0: i32) -> (i32, i32, i32, i32) {
    %c0_i32 = arith.constant 0 : i32
    %c0_i32_0 = arith.constant 0 : i32
    %c0_i32_1 = arith.constant 0 : i32
    %c0_i32_2 = arith.constant 0 : i32
    return %arg0, %c0_i32, %c0_i32_0, %c0_i32_1 : i32, i32, i32, i32
  }
}

module attributes {stable_mosaic.version = 11 : i64} {
  func.func @_joint_kernel(%arg0: i32, %arg1: i32, %arg2: i32, %arg3: i32, %arg4: memref<1x16x128xbf16, #tpu.memory_space<vmem>>, %arg5: memref<1x16x128xbf16, #tpu.memory_space<vmem>>, %arg6: memref<128x128xbf16, #tpu.memory_space<vmem>>, %arg7: memref<1x16x16x128xbf16, #tpu.memory_space<vmem>>, %arg8: memref<16x16x128xbf16, #tpu.memory_space<vmem>>) attributes {dimension_semantics = [#tpu.dimension_semantics<parallel>, #tpu.dimension_semantics<parallel>, #tpu.dimension_semantics<parallel>, #tpu.dimension_semantics<arbitrary>], iteration_bounds = array<i64: 2, 1, 1, 1>, scalar_prefetch = 0 : i64, scratch_operands = 1 : i64, tpu.core_type = #tpu.core_type<tc>, window_params = [{transform_indices = @transform_0, window_bounds = array<i64: 1, 16, 128>}, {transform_indices = @transform_1, window_bounds = array<i64: 1, 16, 128>}, {transform_indices = @transform_2, window_bounds = array<i64: 128, 128>}, {transform_indices = @transform_3, window_bounds = array<i64: 1, 16, 16, 128>}]} {
    %c0_i32 = arith.constant 0 : i32
    %0 = arith.cmpi eq, %arg3, %c0_i32 : i32
    %1 = arith.extui %0 : i1 to i32
    %c0_i32_0 = arith.constant 0 : i32
    %2 = arith.cmpi ne, %1, %c0_i32_0 : i32
    scf.if %2 {
      %c0_9 = arith.constant 0 : index
      %c0_10 = arith.constant 0 : index
      %c0_11 = arith.constant 0 : index
      %12 = vector.load %arg4[%c0_9, %c0_10, %c0_11] : memref<1x16x128xbf16, #tpu.memory_space<vmem>>, vector<1x16x128xbf16>
      %13 = vector.shape_cast %12 : vector<1x16x128xbf16> to vector<16x128xbf16>
      %14 = vector.shape_cast %13 : vector<16x128xbf16> to vector<16x1x128xbf16>
      %c0_12 = arith.constant 0 : index
      %c0_13 = arith.constant 0 : index
      %c0_14 = arith.constant 0 : index
      %15 = vector.load %arg5[%c0_12, %c0_13, %c0_14] : memref<1x16x128xbf16, #tpu.memory_space<vmem>>, vector<1x16x128xbf16>
      %16 = vector.shape_cast %15 : vector<1x16x128xbf16> to vector<16x128xbf16>
      %17 = vector.shape_cast %16 : vector<16x128xbf16> to vector<1x16x128xbf16>
      %18 = vector.broadcast %14 : vector<16x1x128xbf16> to vector<16x16x128xbf16>
      %19 = vector.broadcast %17 : vector<1x16x128xbf16> to vector<16x16x128xbf16>
      %20 = arith.addf %18, %19 : vector<16x16x128xbf16>
      %21 = math.tanh %20 : vector<16x16x128xbf16>
      %c0_15 = arith.constant 0 : index
      %c0_16 = arith.constant 0 : index
      %c0_17 = arith.constant 0 : index
      %22 = vector.load %arg8[%c0_15, %c0_16, %c0_17] : memref<16x16x128xbf16, #tpu.memory_space<vmem>>, vector<16x16x128xbf16>
      tpu.vector_store %arg8[%c0_15, %c0_16, %c0_17], %21 {strides = array<i32>} : memref<16x16x128xbf16, #tpu.memory_space<vmem>>, vector<16x16x128xbf16>,
    } else {
    }
    %c0 = arith.constant 0 : index
    %c0_1 = arith.constant 0 : index
    %c0_2 = arith.constant 0 : index
    %3 = vector.load %arg8[%c0, %c0_1, %c0_2] : memref<16x16x128xbf16, #tpu.memory_space<vmem>>, vector<16x16x128xbf16>
    %4 = vector.shape_cast %3 : vector<16x16x128xbf16> to vector<256x128xbf16>
    %c0_3 = arith.constant 0 : index
    %c0_4 = arith.constant 0 : index
    %5 = vector.load %arg6[%c0_3, %c0_4] : memref<128x128xbf16, #tpu.memory_space<vmem>>, vector<128x128xbf16>
    %cst = arith.constant dense<0.000000e+00> : vector<256x128xf32>
    %6 = tpu.matmul %4, %5, %cst {dimension_numbers = #tpu.dot_dimension_numbers<[1], [0], [0], [1], [0, 0, 1, 1], [], []>} : vector<256x128xbf16>, vector<128x128xbf16>, vector<256x128xf32> -> vector<256x128xf32>
    %7 = vector.shape_cast %6 : vector<256x128xf32> to vector<16x16x128xf32>
    %8 = arith.truncf %7 : vector<16x16x128xf32> to vector<16x16x128xbf16>
    %c0_5 = arith.constant 0 : index
    %c0_6 = arith.constant 0 : index
    %c0_7 = arith.constant 0 : index
    %c0_8 = arith.constant 0 : index
    %9 = vector.load %arg7[%c0_5, %c0_6, %c0_7, %c0_8] : memref<1x16x16x128xbf16, #tpu.memory_space<vmem>>, vector<1x16x16x128xbf16>
    %10 = vector.shape_cast %9 : vector<1x16x16x128xbf16> to vector<16x16x128xbf16>
    %11 = vector.shape_cast %8 : vector<16x16x128xbf16> to vector<1x16x16x128xbf16>
    tpu.vector_store %arg7[%c0_5, %c0_6, %c0_7, %c0_8], %11 {strides = array<i32>} : memref<1x16x16x128xbf16, #tpu.memory_space<vmem>>, vector<1x16x16x128xbf16>,
    return
  }
  func.func @transform_0(%arg0: i32, %arg1: i32, %arg2: i32, %arg3: i32) -> (i32, i32, i32) {
    %c0_i32 = arith.constant 0 : i32
    %c0_i32_0 = arith.constant 0 : i32
    return %arg0, %arg1, %c0_i32 : i32, i32, i32
  }
  func.func @transform_1(%arg0: i32, %arg1: i32, %arg2: i32, %arg3: i32) -> (i32, i32, i32) {
    %c0_i32 = arith.constant 0 : i32
    %c0_i32_0 = arith.constant 0 : i32
    return %arg0, %arg2, %c0_i32 : i32, i32, i32
  }
  func.func @transform_2(%arg0: i32, %arg1: i32, %arg2: i32, %arg3: i32) -> (i32, i32) {
    %c0_i32 = arith.constant 0 : i32
    %c0_i32_0 = arith.constant 0 : i32
    return %c0_i32, %arg3 : i32, i32
  }
  func.func @transform_3(%arg0: i32, %arg1: i32, %arg2: i32, %arg3: i32) -> (i32, i32, i32, i32) {
    %c0_i32 = arith.constant 0 : i32
    return %arg0, %arg1, %arg2, %arg3 : i32, i32, i32, i32
  }
}

</mosaic_0001>

<llo_original>
// kernel: rnnt_forward.14
$region0: #{rnnt_forward.14}
  #allocation0 [shape = 'u32[]', space=smem, size = 0x4, offset = 0x4, fixed_abs, tag = 'smem constant byte address 0x4 - core index']
  #allocation1 [shape = 'u32[144,128]{1,0:T(1,128)}', space=vmem, size = 0x12000, scoped, tag = 'internal scratch']
  %s0 = inlined_call_operand.vmem [shape: bf16[16,128], index: 0, kind: input, shape index: {}]
  %s1 = inlined_call_operand.vmem [shape: bf16[128,384], index: 1, kind: input, shape index: {}]
  %s2 = inlined_call_operand.vmem [shape: f32[1,384], index: 2, kind: input, shape index: {}]
  %s3 = inlined_call_operand.vmem [shape: f32[16,384], index: 3, kind: output, shape index: {}]
  %s4 = sld [smem:[#allocation0]]
  $region22: #{rnnt_forward.14} parent=0
    _
  %s6 = ssub.s32 1, %s4
  %s7 = scalar_select 0, %s6, %s4
  // Predicated region
  $region2: #{rnnt_forward.14} parent=0 // pred_check
    _
  $region3: #{rnnt_forward.14} parent=0 // pred_check_branch
    %9 = sbr.rel (0) target = $region5
  $region4: #{rnnt_forward.14} parent=0 // pred_region
    _
  $region5: #{rnnt_forward.14} parent=0 // pred_fallthru
    _
  // Predicated region
  $region6: #{rnnt_forward.14} parent=0 // pred_check
    _
  $region7: #{rnnt_forward.14} parent=0 // pred_check_branch
    %11 = sbr.rel (0) target = $region9
  $region8: #{rnnt_forward.14} parent=0 // pred_region
    _
  $region9: #{rnnt_forward.14} parent=0 // pred_fallthru
    _
  // Predicated region
  $region10: #{rnnt_forward.14} parent=0 // pred_check
    _
  $region11: #{rnnt_forward.14} parent=0 // pred_check_branch
    %13 = sbr.rel (0) target = $region13
  $region12: #{rnnt_forward.14} parent=0 // pred_region
    _
  $region13: #{rnnt_forward.14} parent=0 // pred_fallthru
    _
  %v15 = vld [vmem:[%s0] sm:$0xf]
  %v16 = vld [vmem:[%s0 + $0x4] sm:$0xf]
  %v17 = vld [vmem:[%s1] sm:$0xff]
  %v18 = vld [vmem:[%s1 + $0x8] sm:$0xf]
  %v19 = vld [vmem:[%s1 + $0xc] sm:$0xff]
  %v20 = vld [vmem:[%s1 + $0x14] sm:$0xf]
  %v21 = vld [vmem:[%s1 + $0x18] sm:$0xff]
  %v22 = vld [vmem:[%s1 + $0x20] sm:$0xf]
  %v23 = vld [vmem:[%s1 + $0x24] sm:$0xff]
  %v24 = vld [vmem:[%s1 + $0x2c] sm:$0xf]
  %v25 = vld [vmem:[%s1 + $0x30] sm:$0xff]
  %v26 = vld [vmem:[%s1 + $0x38] sm:$0xf]
  %v27 = vld [vmem:[%s1 + $0x3c] sm:$0xff]
  %v28 = vld [vmem:[%s1 + $0x44] sm:$0xf]
  %v29 = vld [vmem:[%s1 + $0x48] sm:$0xff]
  %v30 = vld [vmem:[%s1 + $0x50] sm:$0xf]
  %v31 = vld [vmem:[%s1 + $0x54] sm:$0xff]
  %v32 = vld [vmem:[%s1 + $0x5c] sm:$0xf]
  %v33 = vld [vmem:[%s1 + $0x60] sm:$0xff]
  %v34 = vld [vmem:[%s1 + $0x68] sm:$0xf]
  %v35 = vld [vmem:[%s1 + $0x6c] sm:$0xff]
  %v36 = vld [vmem:[%s1 + $0x74] sm:$0xf]
  %v37 = vld [vmem:[%s1 + $0x78] sm:$0xff]
  %v38 = vld [vmem:[%s1 + $0x80] sm:$0xf]
  %v39 = vld [vmem:[%s1 + $0x84] sm:$0xff]
  %v40 = vld [vmem:[%s1 + $0x8c] sm:$0xf]
  %v41 = vld [vmem:[%s1 + $0x90] sm:$0xff]
  %v42 = vld [vmem:[%s1 + $0x98] sm:$0xf]
  %v43 = vld [vmem:[%s1 + $0x9c] sm:$0xff]
  %v44 = vld [vmem:[%s1 + $0xa4] sm:$0xf]
  %v45 = vld [vmem:[%s1 + $0xa8] sm:$0xff]
  %v46 = vld [vmem:[%s1 + $0xb0] sm:$0xf]
  %v47 = vld [vmem:[%s1 + $0xb4] sm:$0xff]
  %v48 = vld [vmem:[%s1 + $0xbc] sm:$0xf]
  %v49 = vld [vmem:[%s2] sm:$0x7]
  %v51 = vlaneseq
  %v52 = vshrl.u32 %v51, 7
  %v53 = vsub.s32 0, %v52
  %v54 = vrot.slane %v49, %v53
  %v55 = vlaneseq
  %v56 = vshrl.u32 %v55, 7
  %v57 = vsub.s32 1, %v56
  %v58 = vrot.slane %v49, %v57
  %v59 = vlaneseq
  %v60 = vshrl.u32 %v59, 7
  %v61 = vsub.s32 2, %v60
  %v62 = vrot.slane %v49, %v61
  %v68 = vunpack.c.l.b16 %v15
  %v69 = vunpack.c.l.b16 %v16
  %v70 = vpack.c.b16 %v69, %v68
  %v104 = vunpack.c.l.b16 %v17
  %v105 = vunpack.c.h.b16 %v17
  %v106 = vunpack.c.l.b16 %v18
  %v107 = vunpack.c.l.b16 %v19
  %v108 = vunpack.c.h.b16 %v19
  %v109 = vunpack.c.l.b16 %v20
  %v110 = vunpack.c.l.b16 %v21
  %v111 = vunpack.c.h.b16 %v21
  %v112 = vunpack.c.l.b16 %v22
  %v113 = vunpack.c.l.b16 %v23
  %v114 = vunpack.c.h.b16 %v23
  %v115 = vunpack.c.l.b16 %v24
  %v116 = vunpack.c.l.b16 %v25
  %v117 = vunpack.c.h.b16 %v25
  %v118 = vunpack.c.l.b16 %v26
  %v119 = vunpack.c.l.b16 %v27
  %v120 = vunpack.c.h.b16 %v27
  %v121 = vunpack.c.l.b16 %v28
  %v122 = vunpack.c.l.b16 %v29
  %v123 = vunpack.c.h.b16 %v29
  %v124 = vunpack.c.l.b16 %v30
  %v125 = vunpack.c.l.b16 %v31
  %v126 = vunpack.c.h.b16 %v31
  %v127 = vunpack.c.l.b16 %v32
  %v128 = vunpack.c.l.b16 %v33
  %v129 = vunpack.c.h.b16 %v33
  %v130 = vunpack.c.l.b16 %v34
  %v131 = vunpack.c.l.b16 %v35
  %v132 = vunpack.c.h.b16 %v35
  %v133 = vunpack.c.l.b16 %v36
  %v134 = vunpack.c.l.b16 %v37
  %v135 = vunpack.c.h.b16 %v37
  %v136 = vunpack.c.l.b16 %v38
  %v137 = vunpack.c.l.b16 %v39
  %v138 = vunpack.c.h.b16 %v39
  %v139 = vunpack.c.l.b16 %v40
  %v140 = vunpack.c.l.b16 %v41
  %v141 = vunpack.c.h.b16 %v41
  %v142 = vunpack.c.l.b16 %v42
  %v143 = vunpack.c.l.b16 %v43
  %v144 = vunpack.c.h.b16 %v43
  %v145 = vunpack.c.l.b16 %v44
  %v146 = vunpack.c.l.b16 %v45
  %v147 = vunpack.c.h.b16 %v45
  %v148 = vunpack.c.l.b16 %v46
  %v149 = vunpack.c.l.b16 %v47
  %v150 = vunpack.c.h.b16 %v47
  %v151 = vunpack.c.l.b16 %v48
  %v152 = vpack.c.b16 %v107, %v104
  %v153 = vpack.c.b16 %v108, %v105
  %v154 = vpack.c.b16 %v109, %v106
  %v155 = vpack.c.b16 %v113, %v110
  %v156 = vpack.c.b16 %v114, %v111
  %v157 = vpack.c.b16 %v115, %v112
  %v158 = vpack.c.b16 %v119, %v116
  %v159 = vpack.c.b16 %v120, %v117
  %v160 = vpack.c.b16 %v121, %v118
  %v161 = vpack.c.b16 %v125, %v122
  %v162 = vpack.c.b16 %v126, %v123
  %v163 = vpack.c.b16 %v127, %v124
  %v164 = vpack.c.b16 %v131, %v128
  %v165 = vpack.c.b16 %v132, %v129
  %v166 = vpack.c.b16 %v133, %v130
  %v167 = vpack.c.b16 %v137, %v134
  %v168 = vpack.c.b16 %v138, %v135
  %v169 = vpack.c.b16 %v139, %v136
  %v170 = vpack.c.b16 %v143, %v140
  %v171 = vpack.c.b16 %v144, %v141
  %v172 = vpack.c.b16 %v145, %v142
  %v173 = vpack.c.b16 %v149, %v146
  %v174 = vpack.c.b16 %v150, %v147
  %v175 = vpack.c.b16 %v151, %v148
  %200 = vmatprep.subr.bf16.mxu0 %v153
  %201 = vmatpush1.bf16.msra.mxu0 %v152
  %202 = vmatprep.subr.bf16.mxu0 %v156
  %203 = vmatpush1.bf16.msra.mxu0 %v155
  %204 = vmatprep.subr.bf16.mxu0 %v159
  %205 = vmatpush1.bf16.msra.mxu0 %v158
  %206 = vmatprep.subr.bf16.mxu0 %v162
  %207 = vmatpush1.bf16.msra.mxu0 %v161
  %208 = vmatprep.subr.bf16.mxu0 %v165
  %209 = vmatpush1.bf16.msra.mxu0 %v164
  %210 = vmatprep.subr.bf16.mxu0 %v168
  %211 = vmatpush1.bf16.msra.mxu0 %v167
  %212 = vmatprep.subr.bf16.mxu0 %v171
  %213 = vmatpush1.bf16.msra.mxu0 %v170
  %214 = vmatprep.subr.bf16.mxu0 %v174
  %215 = vmatpush1.bf16.msra.mxu0 %v173
  %216 = vmatprep.subr.bf16.mxu0 0
  %217 = vmatpush1.bf16.msra.mxu0 0
  %218 = vmatprep.subr.bf16.mxu0 0
  %219 = vmatpush1.bf16.msra.mxu0 0
  %220 = vmatprep.subr.bf16.mxu0 0
  %221 = vmatpush1.bf16.msra.mxu0 0
  %222 = vmatprep.subr.bf16.mxu0 0
  %223 = vmatpush1.bf16.msra.mxu0 0
  %224 = vmatprep.subr.bf16.mxu0 0
  %225 = vmatpush1.bf16.msra.mxu0 0
  %226 = vmatprep.subr.bf16.mxu0 0
  %227 = vmatpush1.bf16.msra.mxu0 0
  %228 = vmatprep.subr.bf16.mxu0 0
  %229 = vmatpush1.bf16.msra.mxu0 0
  %230 = vmatprep.subr.bf16.mxu0 0
  %231 = vmatpush1.bf16.msra.mxu0 0
  %232 = vmatprep.mubr.bf16.mxu0 0
  %233 = vmatmul.mubr.bf16.gmra.mrb[0].mxu0 %v70
  %v234 = vpop.f32.mrb[0].mxu0
  %v235 = vadd.f32 %v54, %v234
  %v236 = vpop.f32.mrb[0].mxu0
  %v237 = vadd.f32 %v58, %v236
  %v238 = vpop.f32.mrb[0].mxu0
  %v239 = vadd.f32 %v54, %v238
  %v240 = vpop.f32.mrb[0].mxu0
  %v241 = vadd.f32 %v58, %v240
  %242 = vdwg.mxu0
  %243 = vmatprep.subr.bf16.mxu0 0
  %244 = vmatpush1.bf16.msra.mxu0 %v154
  %245 = vmatprep.subr.bf16.mxu0 0
  %246 = vmatpush1.bf16.msra.mxu0 %v157
  %247 = vmatprep.subr.bf16.mxu0 0
  %248 = vmatpush1.bf16.msra.mxu0 %v160
  %249 = vmatprep.subr.bf16.mxu0 0
  %250 = vmatpush1.bf16.msra.mxu0 %v163
  %251 = vmatprep.subr.bf16.mxu0 0
  %252 = vmatpush1.bf16.msra.mxu0 %v166
  %253 = vmatprep.subr.bf16.mxu0 0
  %254 = vmatpush1.bf16.msra.mxu0 %v169
  %255 = vmatprep.subr.bf16.mxu0 0
  %256 = vmatpush1.bf16.msra.mxu0 %v172
  %257 = vmatprep.subr.bf16.mxu0 0
  %258 = vmatpush1.bf16.msra.mxu0 %v175
  %259 = vmatprep.subr.bf16.mxu0 0
  %260 = vmatpush1.bf16.msra.mxu0 0
  %261 = vmatprep.subr.bf16.mxu0 0
  %262 = vmatpush1.bf16.msra.mxu0 0
  %263 = vmatprep.subr.bf16.mxu0 0
  %264 = vmatpush1.bf16.msra.mxu0 0
  %265 = vmatprep.subr.bf16.mxu0 0
  %266 = vmatpush1.bf16.msra.mxu0 0
  %267 = vmatprep.subr.bf16.mxu0 0
  %268 = vmatpush1.bf16.msra.mxu0 0
  %269 = vmatprep.subr.bf16.mxu0 0
  %270 = vmatpush1.bf16.msra.mxu0 0
  %271 = vmatprep.subr.bf16.mxu0 0
  %272 = vmatpush1.bf16.msra.mxu0 0
  %273 = vmatprep.subr.bf16.mxu0 0
  %274 = vmatpush1.bf16.msra.mxu0 0
  %275 = vmatprep.mubr.bf16.mxu0 0
  %276 = vmatmul.mubr.bf16.gmra.mrb[0].mxu0 %v70
  %v277 = vpop.f32.mrb[0].mxu0
  %v278 = vadd.f32 %v62, %v277
  %v279 = vpop.f32.mrb[0].mxu0
  %v280 = vpop.f32.mrb[0].mxu0
  %v281 = vadd.f32 %v62, %v280
  %v282 = vpop.f32.mrb[0].mxu0
  %283 = vdwg.mxu0
  %284 = vst [vmem:[%s3] sm:$0xff] %v235
  %285 = vst [vmem:[%s3 + $0x8] sm:$0xff] %v237
  %286 = vst [vmem:[%s3 + $0x10] sm:$0xff] %v278
  %287 = vst [vmem:[%s3 + $0x18] sm:$0xff] %v239
  %288 = vst [vmem:[%s3 + $0x20] sm:$0xff] %v241
  %289 = vst [vmem:[%s3 + $0x28] sm:$0xff] %v281
  // Predicated region
  $region14: #{rnnt_forward.14} parent=0 // pred_check
    _
  $region15: #{rnnt_forward.14} parent=0 // pred_check_branch
    %291 = sbr.rel (0) target = $region17
  $region16: #{rnnt_forward.14} parent=0 // pred_region
    _
  $region17: #{rnnt_forward.14} parent=0 // pred_fallthru
    _
  // Predicated region
  $region18: #{rnnt_forward.14} parent=0 // pred_check
    _
  $region19: #{rnnt_forward.14} parent=0 // pred_check_branch
    %293 = sbr.rel (0) target = $region21
  $region20: #{rnnt_forward.14} parent=0 // pred_region
    _
  $region21: #{rnnt_forward.14} parent=0 // pred_fallthru
    _

// kernel: rnnt_forward.15
$region0: #{rnnt_forward.15}
  #allocation0 [shape = 'u32[]', space=smem, size = 0x4, offset = 0x4, fixed_abs, tag = 'smem constant byte address 0x4 - core index']
  #allocation1 [shape = 'u32[144,128]{1,0:T(1,128)}', space=vmem, size = 0x12000, scoped, tag = 'internal scratch']
  #allocation2 [shape = 'f32[2,8,128]{2,1,0:T(8,128)}', space=vmem, size = 0x2000, scoped, tag = 'scratch operand']
  %s0 = inlined_call_operand.vmem [shape: f32[8,2,8,384], index: 0, kind: input, shape index: {}]
  %s1 = inlined_call_operand.vmem [shape: f32[8,2,8,1], index: 1, kind: input, shape index: {}]
  %s2 = inlined_call_operand.vmem [shape: bf16[2,128,384], index: 2, kind: input, shape index: {}]
  %s3 = inlined_call_operand.vmem [shape: f32[2,1,384], index: 3, kind: input, shape index: {}]
  %s4 = inlined_call_operand.vmem [shape: f32[8,2,8,128], index: 4, kind: output, shape index: {}]
  %s5 = sld [smem:[#allocation0]]
  $region53: #{rnnt_forward.15} parent=0
    _
  %s7 = ssub.s32 1, %s5
  %s8 = scalar_select 0, %s7, %s5
  loop: start=0, step=1, limit=10
  $region2: #{rnnt_forward.15} parent=0 // loop_pre_header
    _
  $region3: #{rnnt_forward.15} parent=0 // loop_header
    %s10 = sphi 0, %s14
    %p11 = scmp.ge.s32.totalorder %s10, 10
    %s20 = sphi 0, %s22
    %s23 = sphi 0, %s20
    %s24 = sphi 0, %s23
    %s40 = sphi 0, %s24
    %s46 = sphi 0, %s48
    %s49 = sphi 0, %s46
    %s50 = sphi 0, %s49
    %s66 = sphi 0, %s50
    %s70 = sphi 0, %s70
    %s72 = sphi 0, %s70
    %s73 = sphi 0, %s72
    %s87 = sphi 0, %s73
    %s91 = sphi 0, %s91
    %s93 = sphi 0, %s91
    %s94 = sphi 0, %s93
    %s108 = sphi 0, %s94
    %s114 = sphi 0, %s116
    %s117 = sphi 0, %s114
    %s118 = sphi 0, %s117
    %s134 = sphi 0, %s118
  $region4: #{rnnt_forward.15} parent=0 // loop_header_branch
    %13 = sbr.rel (%p11) target = $region8
  $region5: #{rnnt_forward.15} parent=0 // loop_body
    %s15 = ssub.s32 %s10, 1
    %s16 = ssub.s32 %s10, 2
    %s17 = sadd.s32 %s10, 1
    %s18 = ssub.s32 %s10, %s17
    %p19 = scmp.eq.s32.totalorder %s18, 0
    %s21 = sadd.s32 %s20, 1
    %s22 = scalar_select %p19, %s20, %s21
    %p25 = pneg %p19
    %p26 = scmp.eq.s32.totalorder %s10, 7
    %p27 = por %p25, %p26
    %p28 = scmp.ne.s32.totalorder %s20, %s23
    %p29 = scmp.eq.s32.totalorder %s10, 0
    %p30 = por %p28, %p29
    %p31 = scmp.ne.s32.totalorder %s20, %s23
    %p32 = scmp.eq.s32.totalorder %s15, 7
    %p33 = por %p31, %p32
    %p34 = scmp.ne.s32.totalorder %s23, %s24
    %p35 = scmp.eq.s32.totalorder %s15, 0
    %p36 = por %p34, %p35
    %p37 = scmp.ne.s32.totalorder %s23, %s24
    %p38 = scmp.eq.s32.totalorder %s16, 7
    %p39 = por %p37, %p38
    %p41 = scmp.ne.s32.totalorder %s24, %s40
    %p42 = scmp.eq.s32.totalorder %s16, 0
    %p43 = por %p41, %p42
    %s44 = ssub.s32 %s10, %s17
    %p45 = scmp.eq.s32.totalorder %s44, 0
    %s47 = sadd.s32 %s46, 1
    %s48 = scalar_select %p45, %s46, %s47
    %p51 = pneg %p45
    %p52 = scmp.eq.s32.totalorder %s10, 7
    %p53 = por %p51, %p52
    %p54 = scmp.ne.s32.totalorder %s46, %s49
    %p55 = scmp.eq.s32.totalorder %s10, 0
    %p56 = por %p54, %p55
    %p57 = scmp.ne.s32.totalorder %s46, %s49
    %p58 = scmp.eq.s32.totalorder %s15, 7
    %p59 = por %p57, %p58
    %p60 = scmp.ne.s32.totalorder %s49, %s50
    %p61 = scmp.eq.s32.totalorder %s15, 0
    %p62 = por %p60, %p61
    %p63 = scmp.ne.s32.totalorder %s49, %s50
    %p64 = scmp.eq.s32.totalorder %s16, 7
    %p65 = por %p63, %p64
    %p67 = scmp.ne.s32.totalorder %s50, %s66
    %p68 = scmp.eq.s32.totalorder %s16, 0
    %p69 = por %p67, %p68
    %s71 = sadd.s32 %s70, 1
    %p74 = scmp.eq.s32.totalorder %s10, 7
    %p75 = scmp.ne.s32.totalorder %s70, %s72
    %p76 = scmp.eq.s32.totalorder %s10, 0
    %p77 = por %p75, %p76
    %p78 = scmp.ne.s32.totalorder %s70, %s72
    %p79 = scmp.eq.s32.totalorder %s15, 7
    %p80 = por %p78, %p79
    %p81 = scmp.ne.s32.totalorder %s72, %s73
    %p82 = scmp.eq.s32.totalorder %s15, 0
    %p83 = por %p81, %p82
    %p84 = scmp.ne.s32.totalorder %s72, %s73
    %p85 = scmp.eq.s32.totalorder %s16, 7
    %p86 = por %p84, %p85
    %p88 = scmp.ne.s32.totalorder %s73, %s87
    %p89 = scmp.eq.s32.totalorder %s16, 0
    %p90 = por %p88, %p89
    %s92 = sadd.s32 %s91, 1
    %p95 = scmp.eq.s32.totalorder %s10, 7
    %p96 = scmp.ne.s32.totalorder %s91, %s93
    %p97 = scmp.eq.s32.totalorder %s10, 0
    %p98 = por %p96, %p97
    %p99 = scmp.ne.s32.totalorder %s91, %s93
    %p100 = scmp.eq.s32.totalorder %s15, 7
    %p101 = por %p99, %p100
    %p102 = scmp.ne.s32.totalorder %s93, %s94
    %p103 = scmp.eq.s32.totalorder %s15, 0
    %p104 = por %p102, %p103
    %p105 = scmp.ne.s32.totalorder %s93, %s94
    %p106 = scmp.eq.s32.totalorder %s16, 7
    %p107 = por %p105, %p106
    %p109 = scmp.ne.s32.totalorder %s94, %s108
    %p110 = scmp.eq.s32.totalorder %s16, 0
    %p111 = por %p109, %p110
    %s112 = ssub.s32 %s10, %s17
    %p113 = scmp.eq.s32.totalorder %s112, 0
    %s115 = sadd.s32 %s114, 1
    %s116 = scalar_select %p113, %s114, %s115
    %p119 = pneg %p113
    %p120 = scmp.eq.s32.totalorder %s10, 7
    %p121 = por %p119, %p120
    %p122 = scmp.ne.s32.totalorder %s114, %s117
    %p123 = scmp.eq.s32.totalorder %s10, 0
    %p124 = por %p122, %p123
    %p125 = scmp.ne.s32.totalorder %s114, %s117
    %p126 = scmp.eq.s32.totalorder %s15, 7
    %p127 = por %p125, %p126
    %p128 = scmp.ne.s32.totalorder %s117, %s118
    %p129 = scmp.eq.s32.totalorder %s15, 0
    %p130 = por %p128, %p129
    %p131 = scmp.ne.s32.totalorder %s117, %s118
    %p132 = scmp.eq.s32.totalorder %s16, 7
    %p133 = por %p131, %p132
    %p135 = scmp.ne.s32.totalorder %s118, %s134
    %p136 = scmp.eq.s32.totalorder %s16, 0
    %p137 = por %p135, %p136
    %p138 = scmp.le.s32.totalorder 1, %s10
    %p139 = scmp.lt.s32.totalorder %s10, 9
    %p140 = pnand %p138, %p139
    %p141 = pneg %p140
    // Predicated region
    $region9: #{rnnt_forward.15} parent=5 // pred_check
      _
    $region10: #{rnnt_forward.15} parent=5 // pred_check_branch
      %143 = sbr.rel (%p140) target = $region12
    $region11: #{rnnt_forward.15} parent=5 // pred_region
      %s144 = ssub.s32 %s10, 1
      // Predicated region
      $region13: #{rnnt_forward.15} parent=11 // pred_check
        %p145 = pneg %p83
      $region14: #{rnnt_forward.15} parent=11 // pred_check_branch
        %147 = sbr.rel (%p145) target = $region16
      $region15: #{rnnt_forward.15} parent=11 // pred_region
        _
      $region16: #{rnnt_forward.15} parent=11 // pred_fallthru
        _
      // Predicated region
      $region17: #{rnnt_forward.15} parent=11 // pred_check
        %p148 = pneg %p104
      $region18: #{rnnt_forward.15} parent=11 // pred_check_branch
        %150 = sbr.rel (%p148) target = $region20
      $region19: #{rnnt_forward.15} parent=11 // pred_region
        _
      $region20: #{rnnt_forward.15} parent=11 // pred_fallthru
        _
    $region12: #{rnnt_forward.15} parent=5 // pred_fallthru
      _
    %p151 = scmp.lt.s32.totalorder %s10, 8
    // Predicated region
    $region21: #{rnnt_forward.15} parent=5 // pred_check
      %p152 = pneg %p151
    $region22: #{rnnt_forward.15} parent=5 // pred_check_branch
      %154 = sbr.rel (%p152) target = $region24
    $region23: #{rnnt_forward.15} parent=5 // pred_region
      // Predicated region
      $region25: #{rnnt_forward.15} parent=23 // pred_check
        %p155 = pneg %p30
      $region26: #{rnnt_forward.15} parent=23 // pred_check_branch
        %157 = sbr.rel (%p155) target = $region28
      $region27: #{rnnt_forward.15} parent=23 // pred_region
        %p158 = scmp.lt.s32.totalorder %s10, 7
        %s159 = scalar_select %p158, %s10, 7
        %s160 = smul.addr %s159, 6
        %s161 = smul.addr %s160, 8
        %s162 = scalar_lea.vmem %s0, %s161
      $region28: #{rnnt_forward.15} parent=23 // pred_fallthru
        _
      // Predicated region
      $region29: #{rnnt_forward.15} parent=23 // pred_check
        %p163 = pneg %p56
      $region30: #{rnnt_forward.15} parent=23 // pred_check_branch
        %165 = sbr.rel (%p163) target = $region32
      $region31: #{rnnt_forward.15} parent=23 // pred_region
        %p166 = scmp.lt.s32.totalorder %s10, 7
        %s167 = scalar_select %p166, %s10, 7
        %s168 = smul.addr %s167, 2
        %s169 = smul.addr %s168, 8
        %s170 = scalar_lea.vmem %s1, %s169
      $region32: #{rnnt_forward.15} parent=23 // pred_fallthru
        _
    $region24: #{rnnt_forward.15} parent=5 // pred_fallthru
      _
    %p171 = scmp.le.s32.totalorder 1, %s10
    %p172 = scmp.lt.s32.totalorder %s10, 9
    %p173 = pnand %p171, %p172
    %p174 = pneg %p173
    // Predicated region
    $region33: #{rnnt_forward.15} parent=5 // pred_check
      _
    $region34: #{rnnt_forward.15} parent=5 // pred_check_branch
      %176 = sbr.rel (%p173) target = $region36
    $region35: #{rnnt_forward.15} parent=5 // pred_region
      %s177 = ssub.s32 %s10, 1
      %p178 = scmp.lt.s32.totalorder %s15, 7
      %s179 = scalar_select %p178, %s15, 7
      %s180 = smul.addr %s179, 6
      %s181 = smul.addr %s180, 8
      %s182 = scalar_lea.vmem %s0, %s181
      %p183 = pneg %p36
      %p184 = pneg %p33
      %p185 = scmp.lt.s32.totalorder %s15, 7
      %s186 = scalar_select %p185, %s15, 7
      %s187 = smul.addr %s186, 2
      %s188 = smul.addr %s187, 8
      %s189 = scalar_lea.vmem %s1, %s188
      %p190 = pneg %p62
      %p191 = pneg %p59
      %p192 = pneg %p83
      %p193 = pneg %p80
      %p194 = pneg %p104
      %p195 = pneg %p101
      %p196 = pneg %p130
      %p197 = pneg %p127
      %p198 = scmp.lt.s32.totalorder %s15, 7
      %s199 = scalar_select %p198, %s15, 7
      %s200 = smul.addr %s199, 2
      %s201 = smul.addr %s200, 8
      %s202 = scalar_lea.vmem %s4, %s201
      %p203 = scmp.lt.s32.totalorder %s15, 7
      %s204 = scalar_select %p203, %s15, 7
      %s205 = smul.addr %s204, 6
      %s206 = smul.addr %s205, 8
      %s207 = scalar_lea.vmem %s0, %s206
      %p208 = scmp.lt.s32.totalorder %s15, 7
      %s209 = scalar_select %p208, %s15, 7
      %s210 = smul.addr %s209, 2
      %s211 = smul.addr %s210, 8
      %s212 = scalar_lea.vmem %s1, %s211
      %p213 = scmp.lt.s32.totalorder %s15, 7
      %s214 = scalar_select %p213, %s15, 7
      %s215 = smul.addr %s214, 2
      %s216 = smul.addr %s215, 8
      %s217 = scalar_lea.vmem %s4, %s216
      %p219 = scmp.eq.s32.totalorder %s15, 0
      // Predicated region
      $region37: #{rnnt_forward.15} parent=35 // pred_check
        %p220 = pneg %p219
      $region38: #{rnnt_forward.15} parent=35 // pred_check_branch
        %222 = sbr.rel (%p220) target = $region40
      $region39: #{rnnt_forward.15} parent=35 // pred_region
        %223 = vst [vmem:[#allocation2] sm:$0xff] 0.0
        %224 = vst [vmem:[#allocation2 + $0x8] sm:$0xff] 0.0
      $region40: #{rnnt_forward.15} parent=35 // pred_fallthru
        _
      %v225 = vld [vmem:[#allocation2] sm:$0xff]
      %v226 = vld [vmem:[%s207] sm:$0xff]
      %v227 = vld [vmem:[%s207 + $0x8] sm:$0xff]
      %v228 = vld [vmem:[%s207 + $0x10] sm:$0xff]
      %v229 = vpack.c.bf16 %v225, %v225
      %v230 = vld [vmem:[%s2] sm:$0xff]
      %v231 = vld [vmem:[%s2 + $0x8] sm:$0xf]
      %v232 = vld [vmem:[%s2 + $0xc] sm:$0xff]
      %v233 = vld [vmem:[%s2 + $0x14] sm:$0xf]
      %v234 = vld [vmem:[%s2 + $0x18] sm:$0xff]
      %v235 = vld [vmem:[%s2 + $0x20] sm:$0xf]
      %v236 = vld [vmem:[%s2 + $0x24] sm:$0xff]
      %v237 = vld [vmem:[%s2 + $0x2c] sm:$0xf]
      %v238 = vld [vmem:[%s2 + $0x30] sm:$0xff]
      %v239 = vld [vmem:[%s2 + $0x38] sm:$0xf]
      %v240 = vld [vmem:[%s2 + $0x3c] sm:$0xff]
      %v241 = vld [vmem:[%s2 + $0x44] sm:$0xf]
      %v242 = vld [vmem:[%s2 + $0x48] sm:$0xff]
      %v243 = vld [vmem:[%s2 + $0x50] sm:$0xf]
      %v244 = vld [vmem:[%s2 + $0x54] sm:$0xff]
      %v245 = vld [vmem:[%s2 + $0x5c] sm:$0xf]
      %v246 = vld [vmem:[%s2 + $0x60] sm:$0xff]
      %v247 = vld [vmem:[%s2 + $0x68] sm:$0xf]
      %v248 = vld [vmem:[%s2 + $0x6c] sm:$0xff]
      %v249 = vld [vmem:[%s2 + $0x74] sm:$0xf]
      %v250 = vld [vmem:[%s2 + $0x78] sm:$0xff]
      %v251 = vld [vmem:[%s2 + $0x80] sm:$0xf]
      %v252 = vld [vmem:[%s2 + $0x84] sm:$0xff]
      %v253 = vld [vmem:[%s2 + $0x8c] sm:$0xf]
      %v254 = vld [vmem:[%s2 + $0x90] sm:$0xff]
      %v255 = vld [vmem:[%s2 + $0x98] sm:$0xf]
      %v256 = vld [vmem:[%s2 + $0x9c] sm:$0xff]
      %v257 = vld [vmem:[%s2 + $0xa4] sm:$0xf]
      %v258 = vld [vmem:[%s2 + $0xa8] sm:$0xff]
      %v259 = vld [vmem:[%s2 + $0xb0] sm:$0xf]
      %v260 = vld [vmem:[%s2 + $0xb4] sm:$0xff]
      %v261 = vld [vmem:[%s2 + $0xbc] sm:$0xf]
      %v262 = vld [vmem:[%s3] sm:$0x7]
      %v264 = vlaneseq
      %v265 = vshrl.u32 %v264, 7
      %v266 = vsub.s32 0, %v265
      %v267 = vrot.slane %v262, %v266
      %v268 = vlaneseq
      %v269 = vshrl.u32 %v268, 7
      %v270 = vsub.s32 1, %v269
      %v271 = vrot.slane %v262, %v270
      %v272 = vlaneseq
      %v273 = vshrl.u32 %v272, 7
      %v274 = vsub.s32 2, %v273
      %v275 = vrot.slane %v262, %v274
      %v311 = vunpack.c.l.b16 %v230
      %v312 = vunpack.c.h.b16 %v230
      %v313 = vunpack.c.l.b16 %v231
      %v314 = vunpack.c.l.b16 %v232
      %v315 = vunpack.c.h.b16 %v232
      %v316 = vunpack.c.l.b16 %v233
      %v317 = vunpack.c.l.b16 %v234
      %v318 = vunpack.c.h.b16 %v234
      %v319 = vunpack.c.l.b16 %v235
      %v320 = vunpack.c.l.b16 %v236
      %v321 = vunpack.c.h.b16 %v236
      %v322 = vunpack.c.l.b16 %v237
      %v323 = vunpack.c.l.b16 %v238
      %v324 = vunpack.c.h.b16 %v238
      %v325 = vunpack.c.l.b16 %v239
      %v326 = vunpack.c.l.b16 %v240
      %v327 = vunpack.c.h.b16 %v240
      %v328 = vunpack.c.l.b16 %v241
      %v329 = vunpack.c.l.b16 %v242
      %v330 = vunpack.c.h.b16 %v242
      %v331 = vunpack.c.l.b16 %v243
      %v332 = vunpack.c.l.b16 %v244
      %v333 = vunpack.c.h.b16 %v244
      %v334 = vunpack.c.l.b16 %v245
      %v335 = vunpack.c.l.b16 %v246
      %v336 = vunpack.c.h.b16 %v246
      %v337 = vunpack.c.l.b16 %v247
      %v338 = vunpack.c.l.b16 %v248
      %v339 = vunpack.c.h.b16 %v248
      %v340 = vunpack.c.l.b16 %v249
      %v341 = vunpack.c.l.b16 %v250
      %v342 = vunpack.c.h.b16 %v250
      %v343 = vunpack.c.l.b16 %v251
      %v344 = vunpack.c.l.b16 %v252
      %v345 = vunpack.c.h.b16 %v252
      %v346 = vunpack.c.l.b16 %v253
      %v347 = vunpack.c.l.b16 %v254
      %v348 = vunpack.c.h.b16 %v254
      %v349 = vunpack.c.l.b16 %v255
      %v350 = vunpack.c.l.b16 %v256
      %v351 = vunpack.c.h.b16 %v256
      %v352 = vunpack.c.l.b16 %v257
      %v353 = vunpack.c.l.b16 %v258
      %v354 = vunpack.c.h.b16 %v258
      %v355 = vunpack.c.l.b16 %v259
      %v356 = vunpack.c.l.b16 %v260
      %v357 = vunpack.c.h.b16 %v260
      %v358 = vunpack.c.l.b16 %v261
      %v359 = vpack.c.b16 %v314, %v311
      %v360 = vpack.c.b16 %v315, %v312
      %v361 = vpack.c.b16 %v316, %v313
      %v362 = vpack.c.b16 %v320, %v317
      %v363 = vpack.c.b16 %v321, %v318
      %v364 = vpack.c.b16 %v322, %v319
      %v365 = vpack.c.b16 %v326, %v323
      %v366 = vpack.c.b16 %v327, %v324
      %v367 = vpack.c.b16 %v328, %v325
      %v368 = vpack.c.b16 %v332, %v329
      %v369 = vpack.c.b16 %v333, %v330
      %v370 = vpack.c.b16 %v334, %v331
      %v371 = vpack.c.b16 %v338, %v335
      %v372 = vpack.c.b16 %v339, %v336
      %v373 = vpack.c.b16 %v340, %v337
      %v374 = vpack.c.b16 %v344, %v341
      %v375 = vpack.c.b16 %v345, %v342
      %v376 = vpack.c.b16 %v346, %v343
      %v377 = vpack.c.b16 %v350, %v347
      %v378 = vpack.c.b16 %v351, %v348
      %v379 = vpack.c.b16 %v352, %v349
      %v380 = vpack.c.b16 %v356, %v353
      %v381 = vpack.c.b16 %v357, %v354
      %v382 = vpack.c.b16 %v358, %v355
      %407 = vmatprep.subr.bf16.mxu0 %v360
      %408 = vmatpush1.bf16.msra.mxu0 %v359
      %409 = vmatprep.subr.bf16.mxu0 %v363
      %410 = vmatpush1.bf16.msra.mxu0 %v362
      %411 = vmatprep.subr.bf16.mxu0 %v366
      %412 = vmatpush1.bf16.msra.mxu0 %v365
      %413 = vmatprep.subr.bf16.mxu0 %v369
      %414 = vmatpush1.bf16.msra.mxu0 %v368
      %415 = vmatprep.subr.bf16.mxu0 %v372
      %416 = vmatpush1.bf16.msra.mxu0 %v371
      %417 = vmatprep.subr.bf16.mxu0 %v375
      %418 = vmatpush1.bf16.msra.mxu0 %v374
      %419 = vmatprep.subr.bf16.mxu0 %v378
      %420 = vmatpush1.bf16.msra.mxu0 %v377
      %421 = vmatprep.subr.bf16.mxu0 %v381
      %422 = vmatpush1.bf16.msra.mxu0 %v380
      %423 = vmatprep.subr.bf16.mxu0 0
      %424 = vmatpush1.bf16.msra.mxu0 0
      %425 = vmatprep.subr.bf16.mxu0 0
      %426 = vmatpush1.bf16.msra.mxu0 0
      %427 = vmatprep.subr.bf16.mxu0 0
      %428 = vmatpush1.bf16.msra.mxu0 0
      %429 = vmatprep.subr.bf16.mxu0 0
      %430 = vmatpush1.bf16.msra.mxu0 0
      %431 = vmatprep.subr.bf16.mxu0 0
      %432 = vmatpush1.bf16.msra.mxu0 0
      %433 = vmatprep.subr.bf16.mxu0 0
      %434 = vmatpush1.bf16.msra.mxu0 0
      %435 = vmatprep.subr.bf16.mxu0 0
      %436 = vmatpush1.bf16.msra.mxu0 0
      %437 = vmatprep.subr.bf16.mxu0 0
      %438 = vmatpush1.bf16.msra.mxu0 0
      %439 = vmatprep.mubr.bf16.mxu0 0
      %440 = vmatmul.mubr.bf16.gmra.mrb[0].mxu0 %v229
      %v441 = vpop.f32.mrb[0].mxu0
      %v442 = vadd.f32 %v267, %v441
      %v443 = vpop.f32.mrb[0].mxu0
      %v444 = vadd.f32 %v271, %v443
      %v445 = vpop.f32.mrb[0].mxu0
      %v446 = vpop.f32.mrb[0].mxu0
      %447 = vdwg.mxu0
      %448 = vmatprep.subr.bf16.mxu0 0
      %449 = vmatpush1.bf16.msra.mxu0 %v361
      %450 = vmatprep.subr.bf16.mxu0 0
      %451 = vmatpush1.bf16.msra.mxu0 %v364
      %452 = vmatprep.subr.bf16.mxu0 0
      %453 = vmatpush1.bf16.msra.mxu0 %v367
      %454 = vmatprep.subr.bf16.mxu0 0
      %455 = vmatpush1.bf16.msra.mxu0 %v370
      %456 = vmatprep.subr.bf16.mxu0 0
      %457 = vmatpush1.bf16.msra.mxu0 %v373
      %458 = vmatprep.subr.bf16.mxu0 0
      %459 = vmatpush1.bf16.msra.mxu0 %v376
      %460 = vmatprep.subr.bf16.mxu0 0
      %461 = vmatpush1.bf16.msra.mxu0 %v379
      %462 = vmatprep.subr.bf16.mxu0 0
      %463 = vmatpush1.bf16.msra.mxu0 %v382
      %464 = vmatprep.subr.bf16.mxu0 0
      %465 = vmatpush1.bf16.msra.mxu0 0
      %466 = vmatprep.subr.bf16.mxu0 0
      %467 = vmatpush1.bf16.msra.mxu0 0
      %468 = vmatprep.subr.bf16.mxu0 0
      %469 = vmatpush1.bf16.msra.mxu0 0
      %470 = vmatprep.subr.bf16.mxu0 0
      %471 = vmatpush1.bf16.msra.mxu0 0
      %472 = vmatprep.subr.bf16.mxu0 0
      %473 = vmatpush1.bf16.msra.mxu0 0
      %474 = vmatprep.subr.bf16.mxu0 0
      %475 = vmatpush1.bf16.msra.mxu0 0
      %476 = vmatprep.subr.bf16.mxu0 0
      %477 = vmatpush1.bf16.msra.mxu0 0
      %478 = vmatprep.subr.bf16.mxu0 0
      %479 = vmatpush1.bf16.msra.mxu0 0
      %480 = vmatprep.mubr.bf16.mxu0 0
      %481 = vmatmul.mubr.bf16.gmra.mrb[0].mxu0 %v229
      %v482 = vpop.f32.mrb[0].mxu0
      %v483 = vadd.f32 %v275, %v482
      %v484 = vpop.f32.mrb[0].mxu0
      %v485 = vpop.f32.mrb[0].mxu0
      %v486 = vpop.f32.mrb[0].mxu0
      %487 = vdwg.mxu0
      %v488 = vadd.f32 %v226, %v442
      %v489 = vxor.u32 %v488, 2147483648
      %v490 = vmul.f32 %v489, 1.442695
      %v491 = vpow.pop %v490
      %v492 = vadd.f32 %v491, 1.0
      %v493 = vrcp.pop %v492
      %v494 = vmul.f32 1.0, %v493
      %v495 = vadd.f32 %v227, %v444
      %v496 = vxor.u32 %v495, 2147483648
      %v497 = vmul.f32 %v496, 1.442695
      %v498 = vpow.pop %v497
      %v499 = vadd.f32 %v498, 1.0
      %v500 = vrcp.pop %v499
      %v501 = vmul.f32 1.0, %v500
      %v502 = vmul.f32 %v494, %v483
      %v503 = vadd.f32 %v228, %v502
      %v504 = vtanh.pop %v503
      %v505 = vsub.f32 1.0, %v501
      %v506 = vmul.f32 %v505, %v504
      %v507 = vmul.f32 %v501, %v225
      %v508 = vadd.f32 %v506, %v507
      %v509 = vld [vmem:[%s212] sm:$0xff]
      %511 = vset.pattern.permute.xlu0 0
      %512 = vperm.xlu0 %511, %v509
      %v513 = vpop.permute.xlu0 %512
      %v515 = vmul.f32 %v513, %v508
      %v516 = vsub.f32 1.0, %v509
      %518 = vset.pattern.permute.xlu0 0
      %519 = vperm.xlu0 %518, %v516
      %v520 = vpop.permute.xlu0 %519
      %v522 = vmul.f32 %v520, %v225
      %v523 = vadd.f32 %v515, %v522
      %524 = vst [vmem:[#allocation2] sm:$0xff] %v523
      %525 = vst [vmem:[%s217] sm:$0xff] %v515
      %s526 = scalar_lea.vmem [#allocation2], 8
      %v527 = vld [vmem:[%s526] sm:$0xff]
      %s528 = scalar_lea.vmem %s207, 24
      %v529 = vld [vmem:[%s528] sm:$0xff]
      %v530 = vld [vmem:[%s528 + $0x8] sm:$0xff]
      %v531 = vld [vmem:[%s528 + $0x10] sm:$0xff]
      %v532 = vpack.c.bf16 %v527, %v527
      %s533 = scalar_lea.vmem %s2, 192
      %v534 = vld [vmem:[%s533] sm:$0xff]
      %v535 = vld [vmem:[%s533 + $0x8] sm:$0xf]
      %v536 = vld [vmem:[%s533 + $0xc] sm:$0xff]
      %v537 = vld [vmem:[%s533 + $0x14] sm:$0xf]
      %v538 = vld [vmem:[%s533 + $0x18] sm:$0xff]
      %v539 = vld [vmem:[%s533 + $0x20] sm:$0xf]
      %v540 = vld [vmem:[%s533 + $0x24] sm:$0xff]
      %v541 = vld [vmem:[%s533 + $0x2c] sm:$0xf]
      %v542 = vld [vmem:[%s533 + $0x30] sm:$0xff]
      %v543 = vld [vmem:[%s533 + $0x38] sm:$0xf]
      %v544 = vld [vmem:[%s533 + $0x3c] sm:$0xff]
      %v545 = vld [vmem:[%s533 + $0x44] sm:$0xf]
      %v546 = vld [vmem:[%s533 + $0x48] sm:$0xff]
      %v547 = vld [vmem:[%s533 + $0x50] sm:$0xf]
      %v548 = vld [vmem:[%s533 + $0x54] sm:$0xff]
      %v549 = vld [vmem:[%s533 + $0x5c] sm:$0xf]
      %v550 = vld [vmem:[%s533 + $0x60] sm:$0xff]
      %v551 = vld [vmem:[%s533 + $0x68] sm:$0xf]
      %v552 = vld [vmem:[%s533 + $0x6c] sm:$0xff]
      %v553 = vld [vmem:[%s533 + $0x74] sm:$0xf]
      %v554 = vld [vmem:[%s533 + $0x78] sm:$0xff]
      %v555 = vld [vmem:[%s533 + $0x80] sm:$0xf]
      %v556 = vld [vmem:[%s533 + $0x84] sm:$0xff]
      %v557 = vld [vmem:[%s533 + $0x8c] sm:$0xf]
      %v558 = vld [vmem:[%s533 + $0x90] sm:$0xff]
      %v559 = vld [vmem:[%s533 + $0x98] sm:$0xf]
      %v560 = vld [vmem:[%s533 + $0x9c] sm:$0xff]
      %v561 = vld [vmem:[%s533 + $0xa4] sm:$0xf]
      %v562 = vld [vmem:[%s533 + $0xa8] sm:$0xff]
      %v563 = vld [vmem:[%s533 + $0xb0] sm:$0xf]
      %v564 = vld [vmem:[%s533 + $0xb4] sm:$0xff]
      %v565 = vld [vmem:[%s533 + $0xbc] sm:$0xf]
      %s566 = scalar_lea.vmem %s3, 3
      %v567 = vld [vmem:[%s566] sm:$0x7]
      %v569 = vlaneseq
      %v570 = vshrl.u32 %v569, 7
      %v571 = vsub.s32 0, %v570
      %v572 = vrot.slane %v567, %v571
      %v573 = vlaneseq
      %v574 = vshrl.u32 %v573, 7
      %v575 = vsub.s32 1, %v574
      %v576 = vrot.slane %v567, %v575
      %v577 = vlaneseq
      %v578 = vshrl.u32 %v577, 7
      %v579 = vsub.s32 2, %v578
      %v580 = vrot.slane %v567, %v579
      %v616 = vunpack.c.l.b16 %v534
      %v617 = vunpack.c.h.b16 %v534
      %v618 = vunpack.c.l.b16 %v535
      %v619 = vunpack.c.l.b16 %v536
      %v620 = vunpack.c.h.b16 %v536
      %v621 = vunpack.c.l.b16 %v537
      %v622 = vunpack.c.l.b16 %v538
      %v623 = vunpack.c.h.b16 %v538
      %v624 = vunpack.c.l.b16 %v539
      %v625 = vunpack.c.l.b16 %v540
      %v626 = vunpack.c.h.b16 %v540
      %v627 = vunpack.c.l.b16 %v541
      %v628 = vunpack.c.l.b16 %v542
      %v629 = vunpack.c.h.b16 %v542
      %v630 = vunpack.c.l.b16 %v543
      %v631 = vunpack.c.l.b16 %v544
      %v632 = vunpack.c.h.b16 %v544
      %v633 = vunpack.c.l.b16 %v545
      %v634 = vunpack.c.l.b16 %v546
      %v635 = vunpack.c.h.b16 %v546
      %v636 = vunpack.c.l.b16 %v547
      %v637 = vunpack.c.l.b16 %v548
      %v638 = vunpack.c.h.b16 %v548
      %v639 = vunpack.c.l.b16 %v549
      %v640 = vunpack.c.l.b16 %v550
      %v641 = vunpack.c.h.b16 %v550
      %v642 = vunpack.c.l.b16 %v551
      %v643 = vunpack.c.l.b16 %v552
      %v644 = vunpack.c.h.b16 %v552
      %v645 = vunpack.c.l.b16 %v553
      %v646 = vunpack.c.l.b16 %v554
      %v647 = vunpack.c.h.b16 %v554
      %v648 = vunpack.c.l.b16 %v555
      %v649 = vunpack.c.l.b16 %v556
      %v650 = vunpack.c.h.b16 %v556
      %v651 = vunpack.c.l.b16 %v557
      %v652 = vunpack.c.l.b16 %v558
      %v653 = vunpack.c.h.b16 %v558
      %v654 = vunpack.c.l.b16 %v559
      %v655 = vunpack.c.l.b16 %v560
      %v656 = vunpack.c.h.b16 %v560
      %v657 = vunpack.c.l.b16 %v561
      %v658 = vunpack.c.l.b16 %v562
      %v659 = vunpack.c.h.b16 %v562
      %v660 = vunpack.c.l.b16 %v563
      %v661 = vunpack.c.l.b16 %v564
      %v662 = vunpack.c.h.b16 %v564
      %v663 = vunpack.c.l.b16 %v565
      %v664 = vpack.c.b16 %v619, %v616
      %v665 = vpack.c.b16 %v620, %v617
      %v666 = vpack.c.b16 %v621, %v618
      %v667 = vpack.c.b16 %v625, %v622
      %v668 = vpack.c.b16 %v626, %v623
      %v669 = vpack.c.b16 %v627, %v624
      %v670 = vpack.c.b16 %v631, %v628
      %v671 = vpack.c.b16 %v632, %v629
      %v672 = vpack.c.b16 %v633, %v630
      %v673 = vpack.c.b16 %v637, %v634
      %v674 = vpack.c.b16 %v638, %v635
      %v675 = vpack.c.b16 %v639, %v636
      %v676 = vpack.c.b16 %v643, %v640
      %v677 = vpack.c.b16 %v644, %v641
      %v678 = vpack.c.b16 %v645, %v642
      %v679 = vpack.c.b16 %v649, %v646
      %v680 = vpack.c.b16 %v650, %v647
      %v681 = vpack.c.b16 %v651, %v648
      %v682 = vpack.c.b16 %v655, %v652
      %v683 = vpack.c.b16 %v656, %v653
      %v684 = vpack.c.b16 %v657, %v654
      %v685 = vpack.c.b16 %v661, %v658
      %v686 = vpack.c.b16 %v662, %v659
      %v687 = vpack.c.b16 %v663, %v660
      %712 = vmatprep.subr.bf16.mxu0 %v665
      %713 = vmatpush1.bf16.msra.mxu0 %v664
      %714 = vmatprep.subr.bf16.mxu0 %v668
      %715 = vmatpush1.bf16.msra.mxu0 %v667
      %716 = vmatprep.subr.bf16.mxu0 %v671
      %717 = vmatpush1.bf16.msra.mxu0 %v670
      %718 = vmatprep.subr.bf16.mxu0 %v674
      %719 = vmatpush1.bf16.msra.mxu0 %v673
      %720 = vmatprep.subr.bf16.mxu0 %v677
      %721 = vmatpush1.bf16.msra.mxu0 %v676
      %722 = vmatprep.subr.bf16.mxu0 %v680
      %723 = vmatpush1.bf16.msra.mxu0 %v679
      %724 = vmatprep.subr.bf16.mxu0 %v683
      %725 = vmatpush1.bf16.msra.mxu0 %v682
      %726 = vmatprep.subr.bf16.mxu0 %v686
      %727 = vmatpush1.bf16.msra.mxu0 %v685
      %728 = vmatprep.subr.bf16.mxu0 0
      %729 = vmatpush1.bf16.msra.mxu0 0
      %730 = vmatprep.subr.bf16.mxu0 0
      %731 = vmatpush1.bf16.msra.mxu0 0
      %732 = vmatprep.subr.bf16.mxu0 0
      %733 = vmatpush1.bf16.msra.mxu0 0
      %734 = vmatprep.subr.bf16.mxu0 0
      %735 = vmatpush1.bf16.msra.mxu0 0
      %736 = vmatprep.subr.bf16.mxu0 0
      %737 = vmatpush1.bf16.msra.mxu0 0
      %738 = vmatprep.subr.bf16.mxu0 0
      %739 = vmatpush1.bf16.msra.mxu0 0
      %740 = vmatprep.subr.bf16.mxu0 0
      %741 = vmatpush1.bf16.msra.mxu0 0
      %742 = vmatprep.subr.bf16.mxu0 0
      %743 = vmatpush1.bf16.msra.mxu0 0
      %744 = vmatprep.mubr.bf16.mxu0 0
      %745 = vmatmul.mubr.bf16.gmra.mrb[0].mxu0 %v532
      %v746 = vpop.f32.mrb[0].mxu0
      %v747 = vadd.f32 %v572, %v746
      %v748 = vpop.f32.mrb[0].mxu0
      %v749 = vadd.f32 %v576, %v748
      %v750 = vpop.f32.mrb[0].mxu0
      %v751 = vpop.f32.mrb[0].mxu0
      %752 = vdwg.mxu0
      %753 = vmatprep.subr.bf16.mxu0 0
      %754 = vmatpush1.bf16.msra.mxu0 %v666
      %755 = vmatprep.subr.bf16.mxu0 0
      %756 = vmatpush1.bf16.msra.mxu0 %v669
      %757 = vmatprep.subr.bf16.mxu0 0
      %758 = vmatpush1.bf16.msra.mxu0 %v672
      %759 = vmatprep.subr.bf16.mxu0 0
      %760 = vmatpush1.bf16.msra.mxu0 %v675
      %761 = vmatprep.subr.bf16.mxu0 0
      %762 = vmatpush1.bf16.msra.mxu0 %v678
      %763 = vmatprep.subr.bf16.mxu0 0
      %764 = vmatpush1.bf16.msra.mxu0 %v681
      %765 = vmatprep.subr.bf16.mxu0 0
      %766 = vmatpush1.bf16.msra.mxu0 %v684
      %767 = vmatprep.subr.bf16.mxu0 0
      %768 = vmatpush1.bf16.msra.mxu0 %v687
      %769 = vmatprep.subr.bf16.mxu0 0
      %770 = vmatpush1.bf16.msra.mxu0 0
      %771 = vmatprep.subr.bf16.mxu0 0
      %772 = vmatpush1.bf16.msra.mxu0 0
      %773 = vmatprep.subr.bf16.mxu0 0
      %774 = vmatpush1.bf16.msra.mxu0 0
      %775 = vmatprep.subr.bf16.mxu0 0
      %776 = vmatpush1.bf16.msra.mxu0 0
      %777 = vmatprep.subr.bf16.mxu0 0
      %778 = vmatpush1.bf16.msra.mxu0 0
      %779 = vmatprep.subr.bf16.mxu0 0
      %780 = vmatpush1.bf16.msra.mxu0 0
      %781 = vmatprep.subr.bf16.mxu0 0
      %782 = vmatpush1.bf16.msra.mxu0 0
      %783 = vmatprep.subr.bf16.mxu0 0
      %784 = vmatpush1.bf16.msra.mxu0 0
      %785 = vmatprep.mubr.bf16.mxu0 0
      %786 = vmatmul.mubr.bf16.gmra.mrb[0].mxu0 %v532
      %v787 = vpop.f32.mrb[0].mxu0
      %v788 = vadd.f32 %v580, %v787
      %v789 = vpop.f32.mrb[0].mxu0
      %v790 = vpop.f32.mrb[0].mxu0
      %v791 = vpop.f32.mrb[0].mxu0
      %792 = vdwg.mxu0
      %v793 = vadd.f32 %v529, %v747
      %v794 = vxor.u32 %v793, 2147483648
      %v795 = vmul.f32 %v794, 1.442695
      %v796 = vpow.pop %v795
      %v797 = vadd.f32 %v796, 1.0
      %v798 = vrcp.pop %v797
      %v799 = vmul.f32 1.0, %v798
      %v800 = vadd.f32 %v530, %v749
      %v801 = vxor.u32 %v800, 2147483648
      %v802 = vmul.f32 %v801, 1.442695
      %v803 = vpow.pop %v802
      %v804 = vadd.f32 %v803, 1.0
      %v805 = vrcp.pop %v804
      %v806 = vmul.f32 1.0, %v805
      %v807 = vmul.f32 %v799, %v788
      %v808 = vadd.f32 %v531, %v807
      %v809 = vtanh.pop %v808
      %v810 = vsub.f32 1.0, %v806
      %v811 = vmul.f32 %v810, %v809
      %v812 = vmul.f32 %v806, %v527
      %v813 = vadd.f32 %v811, %v812
      %s814 = scalar_lea.vmem %s212, 8
      %v815 = vld [vmem:[%s814] sm:$0xff]
      %817 = vset.pattern.permute.xlu0 0
      %818 = vperm.xlu0 %817, %v815
      %v819 = vpop.permute.xlu0 %818
      %v821 = vmul.f32 %v819, %v813
      %v822 = vsub.f32 1.0, %v815
      %824 = vset.pattern.permute.xlu0 0
      %825 = vperm.xlu0 %824, %v822
      %v826 = vpop.permute.xlu0 %825
      %v828 = vmul.f32 %v826, %v527
      %v829 = vadd.f32 %v821, %v828
      %830 = vst [vmem:[%s526] sm:$0xff] %v829
      %s831 = scalar_lea.vmem %s217, 8
      %832 = vst [vmem:[%s831] sm:$0xff] %v821
      %p833 = scmp.lt.s32.totalorder %s15, 7
      %s834 = scalar_select %p833, %s15, 7
      %s835 = smul.addr %s834, 2
      %s836 = smul.addr %s835, 8
      %s837 = scalar_lea.vmem %s4, %s836
      // Predicated region
      $region41: #{rnnt_forward.15} parent=35 // pred_check
        %p838 = pneg %p127
      $region42: #{rnnt_forward.15} parent=35 // pred_check_branch
        %840 = sbr.rel (%p838) target = $region44
      $region43: #{rnnt_forward.15} parent=35 // pred_region
        _
      $region44: #{rnnt_forward.15} parent=35 // pred_fallthru
        _
    $region36: #{rnnt_forward.15} parent=5 // pred_fallthru
      _
    %p841 = scmp.le.s32.totalorder 2, %s10
    // Predicated region
    $region45: #{rnnt_forward.15} parent=5 // pred_check
      %p842 = pneg %p841
    $region46: #{rnnt_forward.15} parent=5 // pred_check_branch
      %844 = sbr.rel (%p842) target = $region48
    $region47: #{rnnt_forward.15} parent=5 // pred_region
      %s845 = ssub.s32 %s10, 2
      // Predicated region
      $region49: #{rnnt_forward.15} parent=47 // pred_check
        %p846 = pneg %p133
      $region50: #{rnnt_forward.15} parent=47 // pred_check_branch
        %848 = sbr.rel (%p846) target = $region52
      $region51: #{rnnt_forward.15} parent=47 // pred_region
        %p849 = scmp.lt.s32.totalorder %s16, 7
        %s850 = scalar_select %p849, %s16, 7
        %s851 = smul.addr %s850, 2
        %s852 = smul.addr %s851, 8
        %s853 = scalar_lea.vmem %s4, %s852
      $region52: #{rnnt_forward.15} parent=47 // pred_fallthru
        _
    $region48: #{rnnt_forward.15} parent=5 // pred_fallthru
      _
  $region6: #{rnnt_forward.15} parent=0 // loop_footer
    %s14 = sadd.s32 1, %s10
  $region7: #{rnnt_forward.15} parent=0 // loop_footer_branch
    %9 = sbr.rel target = $region3
  $region8: #{rnnt_forward.15} parent=0 // loop_exit
    _

// kernel: rnnt_forward.19
$region0: #{rnnt_forward.19}
  #allocation0 [shape = 'u32[]', space=smem, size = 0x4, offset = 0x4, fixed_abs, tag = 'smem constant byte address 0x4 - core index']
  #allocation1 [shape = 'u32[144,128]{1,0:T(1,128)}', space=vmem, size = 0x12000, scoped, tag = 'internal scratch']
  %s0 = inlined_call_operand.vmem [shape: bf16[16,128], index: 0, kind: input, shape index: {}]
  %s1 = inlined_call_operand.vmem [shape: bf16[128,128], index: 1, kind: input, shape index: {}]
  %s2 = inlined_call_operand.vmem [shape: f32[1,128], index: 2, kind: input, shape index: {}]
  %s3 = inlined_call_operand.vmem [shape: f32[16,128], index: 3, kind: output, shape index: {}]
  %s4 = sld [smem:[#allocation0]]
  $region22: #{rnnt_forward.19} parent=0
    _
  %s6 = ssub.s32 1, %s4
  %s7 = scalar_select 0, %s6, %s4
  // Predicated region
  $region2: #{rnnt_forward.19} parent=0 // pred_check
    _
  $region3: #{rnnt_forward.19} parent=0 // pred_check_branch
    %9 = sbr.rel (0) target = $region5
  $region4: #{rnnt_forward.19} parent=0 // pred_region
    _
  $region5: #{rnnt_forward.19} parent=0 // pred_fallthru
    _
  // Predicated region
  $region6: #{rnnt_forward.19} parent=0 // pred_check
    _
  $region7: #{rnnt_forward.19} parent=0 // pred_check_branch
    %11 = sbr.rel (0) target = $region9
  $region8: #{rnnt_forward.19} parent=0 // pred_region
    _
  $region9: #{rnnt_forward.19} parent=0 // pred_fallthru
    _
  // Predicated region
  $region10: #{rnnt_forward.19} parent=0 // pred_check
    _
  $region11: #{rnnt_forward.19} parent=0 // pred_check_branch
    %13 = sbr.rel (0) target = $region13
  $region12: #{rnnt_forward.19} parent=0 // pred_region
    _
  $region13: #{rnnt_forward.19} parent=0 // pred_fallthru
    _
  %v15 = vld [vmem:[%s0] sm:$0xf]
  %v16 = vld [vmem:[%s0 + $0x4] sm:$0xf]
  %v17 = vld [vmem:[%s1] sm:$0xf]
  %v18 = vld [vmem:[%s1 + $0x4] sm:$0xf]
  %v19 = vld [vmem:[%s1 + $0x8] sm:$0xf]
  %v20 = vld [vmem:[%s1 + $0xc] sm:$0xf]
  %v21 = vld [vmem:[%s1 + $0x10] sm:$0xf]
  %v22 = vld [vmem:[%s1 + $0x14] sm:$0xf]
  %v23 = vld [vmem:[%s1 + $0x18] sm:$0xf]
  %v24 = vld [vmem:[%s1 + $0x1c] sm:$0xf]
  %v25 = vld [vmem:[%s1 + $0x20] sm:$0xf]
  %v26 = vld [vmem:[%s1 + $0x24] sm:$0xf]
  %v27 = vld [vmem:[%s1 + $0x28] sm:$0xf]
  %v28 = vld [vmem:[%s1 + $0x2c] sm:$0xf]
  %v29 = vld [vmem:[%s1 + $0x30] sm:$0xf]
  %v30 = vld [vmem:[%s1 + $0x34] sm:$0xf]
  %v31 = vld [vmem:[%s1 + $0x38] sm:$0xf]
  %v32 = vld [vmem:[%s1 + $0x3c] sm:$0xf]
  %v33 = vld [vmem:[%s2] sm:$0x1]
  %v35 = vlaneseq
  %v36 = vshrl.u32 %v35, 7
  %v37 = vsub.s32 0, %v36
  %v38 = vrot.slane %v33, %v37
  %v42 = vunpack.c.l.b16 %v15
  %v43 = vunpack.c.l.b16 %v16
  %v44 = vpack.c.b16 %v43, %v42
  %v62 = vunpack.c.l.b16 %v17
  %v63 = vunpack.c.l.b16 %v18
  %v64 = vunpack.c.l.b16 %v19
  %v65 = vunpack.c.l.b16 %v20
  %v66 = vunpack.c.l.b16 %v21
  %v67 = vunpack.c.l.b16 %v22
  %v68 = vunpack.c.l.b16 %v23
  %v69 = vunpack.c.l.b16 %v24
  %v70 = vunpack.c.l.b16 %v25
  %v71 = vunpack.c.l.b16 %v26
  %v72 = vunpack.c.l.b16 %v27
  %v73 = vunpack.c.l.b16 %v28
  %v74 = vunpack.c.l.b16 %v29
  %v75 = vunpack.c.l.b16 %v30
  %v76 = vunpack.c.l.b16 %v31
  %v77 = vunpack.c.l.b16 %v32
  %v78 = vpack.c.b16 %v63, %v62
  %v79 = vpack.c.b16 %v65, %v64
  %v80 = vpack.c.b16 %v67, %v66
  %v81 = vpack.c.b16 %v69, %v68
  %v82 = vpack.c.b16 %v71, %v70
  %v83 = vpack.c.b16 %v73, %v72
  %v84 = vpack.c.b16 %v75, %v74
  %v85 = vpack.c.b16 %v77, %v76
  %94 = vmatprep.subr.bf16.mxu0 0
  %95 = vmatpush1.bf16.msra.mxu0 %v78
  %96 = vmatprep.subr.bf16.mxu0 0
  %97 = vmatpush1.bf16.msra.mxu0 %v79
  %98 = vmatprep.subr.bf16.mxu0 0
  %99 = vmatpush1.bf16.msra.mxu0 %v80
  %100 = vmatprep.subr.bf16.mxu0 0
  %101 = vmatpush1.bf16.msra.mxu0 %v81
  %102 = vmatprep.subr.bf16.mxu0 0
  %103 = vmatpush1.bf16.msra.mxu0 %v82
  %104 = vmatprep.subr.bf16.mxu0 0
  %105 = vmatpush1.bf16.msra.mxu0 %v83
  %106 = vmatprep.subr.bf16.mxu0 0
  %107 = vmatpush1.bf16.msra.mxu0 %v84
  %108 = vmatprep.subr.bf16.mxu0 0
  %109 = vmatpush1.bf16.msra.mxu0 %v85
  %110 = vmatprep.subr.bf16.mxu0 0
  %111 = vmatpush1.bf16.msra.mxu0 0
  %112 = vmatprep.subr.bf16.mxu0 0
  %113 = vmatpush1.bf16.msra.mxu0 0
  %114 = vmatprep.subr.bf16.mxu0 0
  %115 = vmatpush1.bf16.msra.mxu0 0
  %116 = vmatprep.subr.bf16.mxu0 0
  %117 = vmatpush1.bf16.msra.mxu0 0
  %118 = vmatprep.subr.bf16.mxu0 0
  %119 = vmatpush1.bf16.msra.mxu0 0
  %120 = vmatprep.subr.bf16.mxu0 0
  %121 = vmatpush1.bf16.msra.mxu0 0
  %122 = vmatprep.subr.bf16.mxu0 0
  %123 = vmatpush1.bf16.msra.mxu0 0
  %124 = vmatprep.subr.bf16.mxu0 0
  %125 = vmatpush1.bf16.msra.mxu0 0
  %126 = vmatprep.mubr.bf16.mxu0 0
  %127 = vmatmul.mubr.bf16.gmra.mrb[0].mxu0 %v44
  %v128 = vpop.f32.mrb[0].mxu0
  %v129 = vadd.f32 %v38, %v128
  %v130 = vpop.f32.mrb[0].mxu0
  %v131 = vpop.f32.mrb[0].mxu0
  %v132 = vadd.f32 %v38, %v131
  %v133 = vpop.f32.mrb[0].mxu0
  %134 = vdwg.mxu0
  %135 = vst [vmem:[%s3] sm:$0xff] %v129
  %136 = vst [vmem:[%s3 + $0x8] sm:$0xff] %v132
  // Predicated region
  $region14: #{rnnt_forward.19} parent=0 // pred_check
    _
  $region15: #{rnnt_forward.19} parent=0 // pred_check_branch
    %138 = sbr.rel (0) target = $region17
  $region16: #{rnnt_forward.19} parent=0 // pred_region
    _
  $region17: #{rnnt_forward.19} parent=0 // pred_fallthru
    _
  // Predicated region
  $region18: #{rnnt_forward.19} parent=0 // pred_check
    _
  $region19: #{rnnt_forward.19} parent=0 // pred_check_branch
    %140 = sbr.rel (0) target = $region21
  $region20: #{rnnt_forward.19} parent=0 // pred_region
    _
  $region21: #{rnnt_forward.19} parent=0 // pred_fallthru
    _

// kernel: rnnt_forward.23
$region0: #{rnnt_forward.23}
  #allocation0 [shape = 'u32[]', space=smem, size = 0x4, offset = 0x4, fixed_abs, tag = 'smem constant byte address 0x4 - core index']
  #allocation1 [shape = 'u32[144,128]{1,0:T(1,128)}', space=vmem, size = 0x12000, scoped, tag = 'internal scratch']
  %s0 = inlined_call_operand.vmem [shape: bf16[16,128], index: 0, kind: input, shape index: {}]
  %s1 = inlined_call_operand.vmem [shape: bf16[128,128], index: 1, kind: input, shape index: {}]
  %s2 = inlined_call_operand.vmem [shape: f32[1,128], index: 2, kind: input, shape index: {}]
  %s3 = inlined_call_operand.vmem [shape: bf16[16,128], index: 3, kind: output, shape index: {}]
  %s4 = sld [smem:[#allocation0]]
  $region22: #{rnnt_forward.23} parent=0
    _
  %s6 = ssub.s32 1, %s4
  %s7 = scalar_select 0, %s6, %s4
  // Predicated region
  $region2: #{rnnt_forward.23} parent=0 // pred_check
    _
  $region3: #{rnnt_forward.23} parent=0 // pred_check_branch
    %9 = sbr.rel (0) target = $region5
  $region4: #{rnnt_forward.23} parent=0 // pred_region
    _
  $region5: #{rnnt_forward.23} parent=0 // pred_fallthru
    _
  // Predicated region
  $region6: #{rnnt_forward.23} parent=0 // pred_check
    _
  $region7: #{rnnt_forward.23} parent=0 // pred_check_branch
    %11 = sbr.rel (0) target = $region9
  $region8: #{rnnt_forward.23} parent=0 // pred_region
    _
  $region9: #{rnnt_forward.23} parent=0 // pred_fallthru
    _
  // Predicated region
  $region10: #{rnnt_forward.23} parent=0 // pred_check
    _
  $region11: #{rnnt_forward.23} parent=0 // pred_check_branch
    %13 = sbr.rel (0) target = $region13
  $region12: #{rnnt_forward.23} parent=0 // pred_region
    _
  $region13: #{rnnt_forward.23} parent=0 // pred_fallthru
    _
  %v15 = vld [vmem:[%s0] sm:$0xf]
  %v16 = vld [vmem:[%s0 + $0x4] sm:$0xf]
  %v17 = vld [vmem:[%s1] sm:$0xf]
  %v18 = vld [vmem:[%s1 + $0x4] sm:$0xf]
  %v19 = vld [vmem:[%s1 + $0x8] sm:$0xf]
  %v20 = vld [vmem:[%s1 + $0xc] sm:$0xf]
  %v21 = vld [vmem:[%s1 + $0x10] sm:$0xf]
  %v22 = vld [vmem:[%s1 + $0x14] sm:$0xf]
  %v23 = vld [vmem:[%s1 + $0x18] sm:$0xf]
  %v24 = vld [vmem:[%s1 + $0x1c] sm:$0xf]
  %v25 = vld [vmem:[%s1 + $0x20] sm:$0xf]
  %v26 = vld [vmem:[%s1 + $0x24] sm:$0xf]
  %v27 = vld [vmem:[%s1 + $0x28] sm:$0xf]
  %v28 = vld [vmem:[%s1 + $0x2c] sm:$0xf]
  %v29 = vld [vmem:[%s1 + $0x30] sm:$0xf]
  %v30 = vld [vmem:[%s1 + $0x34] sm:$0xf]
  %v31 = vld [vmem:[%s1 + $0x38] sm:$0xf]
  %v32 = vld [vmem:[%s1 + $0x3c] sm:$0xf]
  %v33 = vld [vmem:[%s2] sm:$0x1]
  %v35 = vlaneseq
  %v36 = vshrl.u32 %v35, 7
  %v37 = vsub.s32 0, %v36
  %v38 = vrot.slane %v33, %v37
  %v42 = vunpack.c.l.b16 %v15
  %v43 = vunpack.c.l.b16 %v16
  %v44 = vpack.c.b16 %v43, %v42
  %v62 = vunpack.c.l.b16 %v17
  %v63 = vunpack.c.l.b16 %v18
  %v64 = vunpack.c.l.b16 %v19
  %v65 = vunpack.c.l.b16 %v20
  %v66 = vunpack.c.l.b16 %v21
  %v67 = vunpack.c.l.b16 %v22
  %v68 = vunpack.c.l.b16 %v23
  %v69 = vunpack.c.l.b16 %v24
  %v70 = vunpack.c.l.b16 %v25
  %v71 = vunpack.c.l.b16 %v26
  %v72 = vunpack.c.l.b16 %v27
  %v73 = vunpack.c.l.b16 %v28
  %v74 = vunpack.c.l.b16 %v29
  %v75 = vunpack.c.l.b16 %v30
  %v76 = vunpack.c.l.b16 %v31
  %v77 = vunpack.c.l.b16 %v32
  %v78 = vpack.c.b16 %v63, %v62
  %v79 = vpack.c.b16 %v65, %v64
  %v80 = vpack.c.b16 %v67, %v66
  %v81 = vpack.c.b16 %v69, %v68
  %v82 = vpack.c.b16 %v71, %v70
  %v83 = vpack.c.b16 %v73, %v72
  %v84 = vpack.c.b16 %v75, %v74
  %v85 = vpack.c.b16 %v77, %v76
  %94 = vmatprep.subr.bf16.mxu0 0
  %95 = vmatpush1.bf16.msra.mxu0 %v78
  %96 = vmatprep.subr.bf16.mxu0 0
  %97 = vmatpush1.bf16.msra.mxu0 %v79
  %98 = vmatprep.subr.bf16.mxu0 0
  %99 = vmatpush1.bf16.msra.mxu0 %v80
  %100 = vmatprep.subr.bf16.mxu0 0
  %101 = vmatpush1.bf16.msra.mxu0 %v81
  %102 = vmatprep.subr.bf16.mxu0 0
  %103 = vmatpush1.bf16.msra.mxu0 %v82
  %104 = vmatprep.subr.bf16.mxu0 0
  %105 = vmatpush1.bf16.msra.mxu0 %v83
  %106 = vmatprep.subr.bf16.mxu0 0
  %107 = vmatpush1.bf16.msra.mxu0 %v84
  %108 = vmatprep.subr.bf16.mxu0 0
  %109 = vmatpush1.bf16.msra.mxu0 %v85
  %110 = vmatprep.subr.bf16.mxu0 0
  %111 = vmatpush1.bf16.msra.mxu0 0
  %112 = vmatprep.subr.bf16.mxu0 0
  %113 = vmatpush1.bf16.msra.mxu0 0
  %114 = vmatprep.subr.bf16.mxu0 0
  %115 = vmatpush1.bf16.msra.mxu0 0
  %116 = vmatprep.subr.bf16.mxu0 0
  %117 = vmatpush1.bf16.msra.mxu0 0
  %118 = vmatprep.subr.bf16.mxu0 0
  %119 = vmatpush1.bf16.msra.mxu0 0
  %120 = vmatprep.subr.bf16.mxu0 0
  %121 = vmatpush1.bf16.msra.mxu0 0
  %122 = vmatprep.subr.bf16.mxu0 0
  %123 = vmatpush1.bf16.msra.mxu0 0
  %124 = vmatprep.subr.bf16.mxu0 0
  %125 = vmatpush1.bf16.msra.mxu0 0
  %126 = vmatprep.mubr.bf16.mxu0 0
  %127 = vmatmul.mubr.bf16.gmra.mrb[0].mxu0 %v44
  %v128 = vpop.f32.mrb[0].mxu0
  %v129 = vadd.f32 %v38, %v128
  %v130 = vpop.f32.mrb[0].mxu0
  %v131 = vpop.f32.mrb[0].mxu0
  %v132 = vadd.f32 %v38, %v131
  %v133 = vpop.f32.mrb[0].mxu0
  %134 = vdwg.mxu0
  %v135 = vpack.c.bf16 %v132, %v129
  %v137 = vunpack.c.l.b16 %v135
  %v138 = vunpack.c.h.b16 %v135
  %v139 = vpack.c.b16 %v137, %v137
  %v140 = vpack.c.b16 %v138, %v138
  %143 = vst [vmem:[%s3] sm:$0xf] %v139
  %144 = vst [vmem:[%s3 + $0x4] sm:$0xf] %v140
  // Predicated region
  $region14: #{rnnt_forward.23} parent=0 // pred_check
    _
  $region15: #{rnnt_forward.23} parent=0 // pred_check_branch
    %146 = sbr.rel (0) target = $region17
  $region16: #{rnnt_forward.23} parent=0 // pred_region
    _
  $region17: #{rnnt_forward.23} parent=0 // pred_fallthru
    _
  // Predicated region
  $region18: #{rnnt_forward.23} parent=0 // pred_check
    _
  $region19: #{rnnt_forward.23} parent=0 // pred_check_branch
    %148 = sbr.rel (0) target = $region21
  $region20: #{rnnt_forward.23} parent=0 // pred_region
    _
  $region21: #{rnnt_forward.23} parent=0 // pred_fallthru
    _

// kernel: rnnt_forward.21
$region0: #{rnnt_forward.21}
  #allocation0 [shape = 'u32[]', space=smem, size = 0x4, offset = 0x4, fixed_abs, tag = 'smem constant byte address 0x4 - core index']
  #allocation1 [shape = 'u32[144,128]{1,0:T(1,128)}', space=vmem, size = 0x12000, scoped, tag = 'internal scratch']
  #allocation2 [shape = 'f32[1,8,128]{2,1,0:T(8,128)}', space=vmem, size = 0x1000, scoped, tag = 'scratch operand']
  %s0 = inlined_call_operand.vmem [shape: f32[7,1,8,384], index: 0, kind: input, shape index: {}]
  %s1 = inlined_call_operand.vmem [shape: f32[7,1,8,1], index: 1, kind: input, shape index: {}]
  %s2 = inlined_call_operand.vmem [shape: bf16[1,128,384], index: 2, kind: input, shape index: {}]
  %s3 = inlined_call_operand.vmem [shape: f32[1,1,384], index: 3, kind: input, shape index: {}]
  %s4 = inlined_call_operand.vmem [shape: f32[7,1,8,128], index: 4, kind: output, shape index: {}]
  %s5 = sld [smem:[#allocation0]]
  $region53: #{rnnt_forward.21} parent=0
    _
  %s7 = ssub.s32 1, %s5
  %s8 = scalar_select 0, %s7, %s5
  loop: start=0, step=1, limit=9
  $region2: #{rnnt_forward.21} parent=0 // loop_pre_header
    _
  $region3: #{rnnt_forward.21} parent=0 // loop_header
    %s10 = sphi 0, %s14
    %p11 = scmp.ge.s32.totalorder %s10, 9
    %s20 = sphi 0, %s22
    %s23 = sphi 0, %s20
    %s24 = sphi 0, %s23
    %s40 = sphi 0, %s24
    %s46 = sphi 0, %s48
    %s49 = sphi 0, %s46
    %s50 = sphi 0, %s49
    %s66 = sphi 0, %s50
    %s70 = sphi 0, %s70
    %s72 = sphi 0, %s70
    %s73 = sphi 0, %s72
    %s87 = sphi 0, %s73
    %s91 = sphi 0, %s91
    %s93 = sphi 0, %s91
    %s94 = sphi 0, %s93
    %s108 = sphi 0, %s94
    %s114 = sphi 0, %s116
    %s117 = sphi 0, %s114
    %s118 = sphi 0, %s117
    %s134 = sphi 0, %s118
  $region4: #{rnnt_forward.21} parent=0 // loop_header_branch
    %13 = sbr.rel (%p11) target = $region8
  $region5: #{rnnt_forward.21} parent=0 // loop_body
    %s15 = ssub.s32 %s10, 1
    %s16 = ssub.s32 %s10, 2
    %s17 = sadd.s32 %s10, 1
    %s18 = ssub.s32 %s10, %s17
    %p19 = scmp.eq.s32.totalorder %s18, 0
    %s21 = sadd.s32 %s20, 1
    %s22 = scalar_select %p19, %s20, %s21
    %p25 = pneg %p19
    %p26 = scmp.eq.s32.totalorder %s10, 6
    %p27 = por %p25, %p26
    %p28 = scmp.ne.s32.totalorder %s20, %s23
    %p29 = scmp.eq.s32.totalorder %s10, 0
    %p30 = por %p28, %p29
    %p31 = scmp.ne.s32.totalorder %s20, %s23
    %p32 = scmp.eq.s32.totalorder %s15, 6
    %p33 = por %p31, %p32
    %p34 = scmp.ne.s32.totalorder %s23, %s24
    %p35 = scmp.eq.s32.totalorder %s15, 0
    %p36 = por %p34, %p35
    %p37 = scmp.ne.s32.totalorder %s23, %s24
    %p38 = scmp.eq.s32.totalorder %s16, 6
    %p39 = por %p37, %p38
    %p41 = scmp.ne.s32.totalorder %s24, %s40
    %p42 = scmp.eq.s32.totalorder %s16, 0
    %p43 = por %p41, %p42
    %s44 = ssub.s32 %s10, %s17
    %p45 = scmp.eq.s32.totalorder %s44, 0
    %s47 = sadd.s32 %s46, 1
    %s48 = scalar_select %p45, %s46, %s47
    %p51 = pneg %p45
    %p52 = scmp.eq.s32.totalorder %s10, 6
    %p53 = por %p51, %p52
    %p54 = scmp.ne.s32.totalorder %s46, %s49
    %p55 = scmp.eq.s32.totalorder %s10, 0
    %p56 = por %p54, %p55
    %p57 = scmp.ne.s32.totalorder %s46, %s49
    %p58 = scmp.eq.s32.totalorder %s15, 6
    %p59 = por %p57, %p58
    %p60 = scmp.ne.s32.totalorder %s49, %s50
    %p61 = scmp.eq.s32.totalorder %s15, 0
    %p62 = por %p60, %p61
    %p63 = scmp.ne.s32.totalorder %s49, %s50
    %p64 = scmp.eq.s32.totalorder %s16, 6
    %p65 = por %p63, %p64
    %p67 = scmp.ne.s32.totalorder %s50, %s66
    %p68 = scmp.eq.s32.totalorder %s16, 0
    %p69 = por %p67, %p68
    %s71 = sadd.s32 %s70, 1
    %p74 = scmp.eq.s32.totalorder %s10, 6
    %p75 = scmp.ne.s32.totalorder %s70, %s72
    %p76 = scmp.eq.s32.totalorder %s10, 0
    %p77 = por %p75, %p76
    %p78 = scmp.ne.s32.totalorder %s70, %s72
    %p79 = scmp.eq.s32.totalorder %s15, 6
    %p80 = por %p78, %p79
    %p81 = scmp.ne.s32.totalorder %s72, %s73
    %p82 = scmp.eq.s32.totalorder %s15, 0
    %p83 = por %p81, %p82
    %p84 = scmp.ne.s32.totalorder %s72, %s73
    %p85 = scmp.eq.s32.totalorder %s16, 6
    %p86 = por %p84, %p85
    %p88 = scmp.ne.s32.totalorder %s73, %s87
    %p89 = scmp.eq.s32.totalorder %s16, 0
    %p90 = por %p88, %p89
    %s92 = sadd.s32 %s91, 1
    %p95 = scmp.eq.s32.totalorder %s10, 6
    %p96 = scmp.ne.s32.totalorder %s91, %s93
    %p97 = scmp.eq.s32.totalorder %s10, 0
    %p98 = por %p96, %p97
    %p99 = scmp.ne.s32.totalorder %s91, %s93
    %p100 = scmp.eq.s32.totalorder %s15, 6
    %p101 = por %p99, %p100
    %p102 = scmp.ne.s32.totalorder %s93, %s94
    %p103 = scmp.eq.s32.totalorder %s15, 0
    %p104 = por %p102, %p103
    %p105 = scmp.ne.s32.totalorder %s93, %s94
    %p106 = scmp.eq.s32.totalorder %s16, 6
    %p107 = por %p105, %p106
    %p109 = scmp.ne.s32.totalorder %s94, %s108
    %p110 = scmp.eq.s32.totalorder %s16, 0
    %p111 = por %p109, %p110
    %s112 = ssub.s32 %s10, %s17
    %p113 = scmp.eq.s32.totalorder %s112, 0
    %s115 = sadd.s32 %s114, 1
    %s116 = scalar_select %p113, %s114, %s115
    %p119 = pneg %p113
    %p120 = scmp.eq.s32.totalorder %s10, 6
    %p121 = por %p119, %p120
    %p122 = scmp.ne.s32.totalorder %s114, %s117
    %p123 = scmp.eq.s32.totalorder %s10, 0
    %p124 = por %p122, %p123
    %p125 = scmp.ne.s32.totalorder %s114, %s117
    %p126 = scmp.eq.s32.totalorder %s15, 6
    %p127 = por %p125, %p126
    %p128 = scmp.ne.s32.totalorder %s117, %s118
    %p129 = scmp.eq.s32.totalorder %s15, 0
    %p130 = por %p128, %p129
    %p131 = scmp.ne.s32.totalorder %s117, %s118
    %p132 = scmp.eq.s32.totalorder %s16, 6
    %p133 = por %p131, %p132
    %p135 = scmp.ne.s32.totalorder %s118, %s134
    %p136 = scmp.eq.s32.totalorder %s16, 0
    %p137 = por %p135, %p136
    %p138 = scmp.le.s32.totalorder 1, %s10
    %p139 = scmp.lt.s32.totalorder %s10, 8
    %p140 = pnand %p138, %p139
    %p141 = pneg %p140
    // Predicated region
    $region9: #{rnnt_forward.21} parent=5 // pred_check
      _
    $region10: #{rnnt_forward.21} parent=5 // pred_check_branch
      %143 = sbr.rel (%p140) target = $region12
    $region11: #{rnnt_forward.21} parent=5 // pred_region
      %s144 = ssub.s32 %s10, 1
      // Predicated region
      $region13: #{rnnt_forward.21} parent=11 // pred_check
        %p145 = pneg %p83
      $region14: #{rnnt_forward.21} parent=11 // pred_check_branch
        %147 = sbr.rel (%p145) target = $region16
      $region15: #{rnnt_forward.21} parent=11 // pred_region
        _
      $region16: #{rnnt_forward.21} parent=11 // pred_fallthru
        _
      // Predicated region
      $region17: #{rnnt_forward.21} parent=11 // pred_check
        %p148 = pneg %p104
      $region18: #{rnnt_forward.21} parent=11 // pred_check_branch
        %150 = sbr.rel (%p148) target = $region20
      $region19: #{rnnt_forward.21} parent=11 // pred_region
        _
      $region20: #{rnnt_forward.21} parent=11 // pred_fallthru
        _
    $region12: #{rnnt_forward.21} parent=5 // pred_fallthru
      _
    %p151 = scmp.lt.s32.totalorder %s10, 7
    // Predicated region
    $region21: #{rnnt_forward.21} parent=5 // pred_check
      %p152 = pneg %p151
    $region22: #{rnnt_forward.21} parent=5 // pred_check_branch
      %154 = sbr.rel (%p152) target = $region24
    $region23: #{rnnt_forward.21} parent=5 // pred_region
      // Predicated region
      $region25: #{rnnt_forward.21} parent=23 // pred_check
        %p155 = pneg %p30
      $region26: #{rnnt_forward.21} parent=23 // pred_check_branch
        %157 = sbr.rel (%p155) target = $region28
      $region27: #{rnnt_forward.21} parent=23 // pred_region
        %p158 = scmp.lt.s32.totalorder %s10, 6
        %s159 = scalar_select %p158, %s10, 6
        %s160 = smul.addr %s159, 3
        %s161 = smul.addr %s160, 8
        %s162 = scalar_lea.vmem %s0, %s161
      $region28: #{rnnt_forward.21} parent=23 // pred_fallthru
        _
      // Predicated region
      $region29: #{rnnt_forward.21} parent=23 // pred_check
        %p163 = pneg %p56
      $region30: #{rnnt_forward.21} parent=23 // pred_check_branch
        %165 = sbr.rel (%p163) target = $region32
      $region31: #{rnnt_forward.21} parent=23 // pred_region
        %p166 = scmp.lt.s32.totalorder %s10, 6
        %s167 = scalar_select %p166, %s10, 6
        %s168 = smul.addr %s167, 8
        %s169 = scalar_lea.vmem %s1, %s168
      $region32: #{rnnt_forward.21} parent=23 // pred_fallthru
        _
    $region24: #{rnnt_forward.21} parent=5 // pred_fallthru
      _
    %p170 = scmp.le.s32.totalorder 1, %s10
    %p171 = scmp.lt.s32.totalorder %s10, 8
    %p172 = pnand %p170, %p171
    %p173 = pneg %p172
    // Predicated region
    $region33: #{rnnt_forward.21} parent=5 // pred_check
      _
    $region34: #{rnnt_forward.21} parent=5 // pred_check_branch
      %175 = sbr.rel (%p172) target = $region36
    $region35: #{rnnt_forward.21} parent=5 // pred_region
      %s176 = ssub.s32 %s10, 1
      %p177 = scmp.lt.s32.totalorder %s15, 6
      %s178 = scalar_select %p177, %s15, 6
      %s179 = smul.addr %s178, 3
      %s180 = smul.addr %s179, 8
      %s181 = scalar_lea.vmem %s0, %s180
      %p182 = pneg %p36
      %p183 = pneg %p33
      %p184 = scmp.lt.s32.totalorder %s15, 6
      %s185 = scalar_select %p184, %s15, 6
      %s186 = smul.addr %s185, 8
      %s187 = scalar_lea.vmem %s1, %s186
      %p188 = pneg %p62
      %p189 = pneg %p59
      %p190 = pneg %p83
      %p191 = pneg %p80
      %p192 = pneg %p104
      %p193 = pneg %p101
      %p194 = pneg %p130
      %p195 = pneg %p127
      %p196 = scmp.lt.s32.totalorder %s15, 6
      %s197 = scalar_select %p196, %s15, 6
      %s198 = smul.addr %s197, 8
      %s199 = scalar_lea.vmem %s4, %s198
      %p200 = scmp.lt.s32.totalorder %s15, 6
      %s201 = scalar_select %p200, %s15, 6
      %s202 = smul.addr %s201, 3
      %s203 = smul.addr %s202, 8
      %s204 = scalar_lea.vmem %s0, %s203
      %p205 = scmp.lt.s32.totalorder %s15, 6
      %s206 = scalar_select %p205, %s15, 6
      %s207 = smul.addr %s206, 8
      %s208 = scalar_lea.vmem %s1, %s207
      %p209 = scmp.lt.s32.totalorder %s15, 6
      %s210 = scalar_select %p209, %s15, 6
      %s211 = smul.addr %s210, 8
      %s212 = scalar_lea.vmem %s4, %s211
      %p214 = scmp.eq.s32.totalorder %s15, 0
      // Predicated region
      $region37: #{rnnt_forward.21} parent=35 // pred_check
        %p215 = pneg %p214
      $region38: #{rnnt_forward.21} parent=35 // pred_check_branch
        %217 = sbr.rel (%p215) target = $region40
      $region39: #{rnnt_forward.21} parent=35 // pred_region
        %218 = vst [vmem:[#allocation2] sm:$0xff] 0.0
      $region40: #{rnnt_forward.21} parent=35 // pred_fallthru
        _
      %v219 = vld [vmem:[#allocation2] sm:$0xff]
      %v220 = vld [vmem:[%s204] sm:$0xff]
      %v221 = vld [vmem:[%s204 + $0x8] sm:$0xff]
      %v222 = vld [vmem:[%s204 + $0x10] sm:$0xff]
      %v223 = vpack.c.bf16 %v219, %v219
      %v224 = vld [vmem:[%s2] sm:$0xff]
      %v225 = vld [vmem:[%s2 + $0x8] sm:$0xf]
      %v226 = vld [vmem:[%s2 + $0xc] sm:$0xff]
      %v227 = vld [vmem:[%s2 + $0x14] sm:$0xf]
      %v228 = vld [vmem:[%s2 + $0x18] sm:$0xff]
      %v229 = vld [vmem:[%s2 + $0x20] sm:$0xf]
      %v230 = vld [vmem:[%s2 + $0x24] sm:$0xff]
      %v231 = vld [vmem:[%s2 + $0x2c] sm:$0xf]
      %v232 = vld [vmem:[%s2 + $0x30] sm:$0xff]
      %v233 = vld [vmem:[%s2 + $0x38] sm:$0xf]
      %v234 = vld [vmem:[%s2 + $0x3c] sm:$0xff]
      %v235 = vld [vmem:[%s2 + $0x44] sm:$0xf]
      %v236 = vld [vmem:[%s2 + $0x48] sm:$0xff]
      %v237 = vld [vmem:[%s2 + $0x50] sm:$0xf]
      %v238 = vld [vmem:[%s2 + $0x54] sm:$0xff]
      %v239 = vld [vmem:[%s2 + $0x5c] sm:$0xf]
      %v240 = vld [vmem:[%s2 + $0x60] sm:$0xff]
      %v241 = vld [vmem:[%s2 + $0x68] sm:$0xf]
      %v242 = vld [vmem:[%s2 + $0x6c] sm:$0xff]
      %v243 = vld [vmem:[%s2 + $0x74] sm:$0xf]
      %v244 = vld [vmem:[%s2 + $0x78] sm:$0xff]
      %v245 = vld [vmem:[%s2 + $0x80] sm:$0xf]
      %v246 = vld [vmem:[%s2 + $0x84] sm:$0xff]
      %v247 = vld [vmem:[%s2 + $0x8c] sm:$0xf]
      %v248 = vld [vmem:[%s2 + $0x90] sm:$0xff]
      %v249 = vld [vmem:[%s2 + $0x98] sm:$0xf]
      %v250 = vld [vmem:[%s2 + $0x9c] sm:$0xff]
      %v251 = vld [vmem:[%s2 + $0xa4] sm:$0xf]
      %v252 = vld [vmem:[%s2 + $0xa8] sm:$0xff]
      %v253 = vld [vmem:[%s2 + $0xb0] sm:$0xf]
      %v254 = vld [vmem:[%s2 + $0xb4] sm:$0xff]
      %v255 = vld [vmem:[%s2 + $0xbc] sm:$0xf]
      %v256 = vld [vmem:[%s3] sm:$0x7]
      %v258 = vlaneseq
      %v259 = vshrl.u32 %v258, 7
      %v260 = vsub.s32 0, %v259
      %v261 = vrot.slane %v256, %v260
      %v262 = vlaneseq
      %v263 = vshrl.u32 %v262, 7
      %v264 = vsub.s32 1, %v263
      %v265 = vrot.slane %v256, %v264
      %v266 = vlaneseq
      %v267 = vshrl.u32 %v266, 7
      %v268 = vsub.s32 2, %v267
      %v269 = vrot.slane %v256, %v268
      %v305 = vunpack.c.l.b16 %v224
      %v306 = vunpack.c.h.b16 %v224
      %v307 = vunpack.c.l.b16 %v225
      %v308 = vunpack.c.l.b16 %v226
      %v309 = vunpack.c.h.b16 %v226
      %v310 = vunpack.c.l.b16 %v227
      %v311 = vunpack.c.l.b16 %v228
      %v312 = vunpack.c.h.b16 %v228
      %v313 = vunpack.c.l.b16 %v229
      %v314 = vunpack.c.l.b16 %v230
      %v315 = vunpack.c.h.b16 %v230
      %v316 = vunpack.c.l.b16 %v231
      %v317 = vunpack.c.l.b16 %v232
      %v318 = vunpack.c.h.b16 %v232
      %v319 = vunpack.c.l.b16 %v233
      %v320 = vunpack.c.l.b16 %v234
      %v321 = vunpack.c.h.b16 %v234
      %v322 = vunpack.c.l.b16 %v235
      %v323 = vunpack.c.l.b16 %v236
      %v324 = vunpack.c.h.b16 %v236
      %v325 = vunpack.c.l.b16 %v237
      %v326 = vunpack.c.l.b16 %v238
      %v327 = vunpack.c.h.b16 %v238
      %v328 = vunpack.c.l.b16 %v239
      %v329 = vunpack.c.l.b16 %v240
      %v330 = vunpack.c.h.b16 %v240
      %v331 = vunpack.c.l.b16 %v241
      %v332 = vunpack.c.l.b16 %v242
      %v333 = vunpack.c.h.b16 %v242
      %v334 = vunpack.c.l.b16 %v243
      %v335 = vunpack.c.l.b16 %v244
      %v336 = vunpack.c.h.b16 %v244
      %v337 = vunpack.c.l.b16 %v245
      %v338 = vunpack.c.l.b16 %v246
      %v339 = vunpack.c.h.b16 %v246
      %v340 = vunpack.c.l.b16 %v247
      %v341 = vunpack.c.l.b16 %v248
      %v342 = vunpack.c.h.b16 %v248
      %v343 = vunpack.c.l.b16 %v249
      %v344 = vunpack.c.l.b16 %v250
      %v345 = vunpack.c.h.b16 %v250
      %v346 = vunpack.c.l.b16 %v251
      %v347 = vunpack.c.l.b16 %v252
      %v348 = vunpack.c.h.b16 %v252
      %v349 = vunpack.c.l.b16 %v253
      %v350 = vunpack.c.l.b16 %v254
      %v351 = vunpack.c.h.b16 %v254
      %v352 = vunpack.c.l.b16 %v255
      %v353 = vpack.c.b16 %v308, %v305
      %v354 = vpack.c.b16 %v309, %v306
      %v355 = vpack.c.b16 %v310, %v307
      %v356 = vpack.c.b16 %v314, %v311
      %v357 = vpack.c.b16 %v315, %v312
      %v358 = vpack.c.b16 %v316, %v313
      %v359 = vpack.c.b16 %v320, %v317
      %v360 = vpack.c.b16 %v321, %v318
      %v361 = vpack.c.b16 %v322, %v319
      %v362 = vpack.c.b16 %v326, %v323
      %v363 = vpack.c.b16 %v327, %v324
      %v364 = vpack.c.b16 %v328, %v325
      %v365 = vpack.c.b16 %v332, %v329
      %v366 = vpack.c.b16 %v333, %v330
      %v367 = vpack.c.b16 %v334, %v331
      %v368 = vpack.c.b16 %v338, %v335
      %v369 = vpack.c.b16 %v339, %v336
      %v370 = vpack.c.b16 %v340, %v337
      %v371 = vpack.c.b16 %v344, %v341
      %v372 = vpack.c.b16 %v345, %v342
      %v373 = vpack.c.b16 %v346, %v343
      %v374 = vpack.c.b16 %v350, %v347
      %v375 = vpack.c.b16 %v351, %v348
      %v376 = vpack.c.b16 %v352, %v349
      %401 = vmatprep.subr.bf16.mxu0 %v354
      %402 = vmatpush1.bf16.msra.mxu0 %v353
      %403 = vmatprep.subr.bf16.mxu0 %v357
      %404 = vmatpush1.bf16.msra.mxu0 %v356
      %405 = vmatprep.subr.bf16.mxu0 %v360
      %406 = vmatpush1.bf16.msra.mxu0 %v359
      %407 = vmatprep.subr.bf16.mxu0 %v363
      %408 = vmatpush1.bf16.msra.mxu0 %v362
      %409 = vmatprep.subr.bf16.mxu0 %v366
      %410 = vmatpush1.bf16.msra.mxu0 %v365
      %411 = vmatprep.subr.bf16.mxu0 %v369
      %412 = vmatpush1.bf16.msra.mxu0 %v368
      %413 = vmatprep.subr.bf16.mxu0 %v372
      %414 = vmatpush1.bf16.msra.mxu0 %v371
      %415 = vmatprep.subr.bf16.mxu0 %v375
      %416 = vmatpush1.bf16.msra.mxu0 %v374
      %417 = vmatprep.subr.bf16.mxu0 0
      %418 = vmatpush1.bf16.msra.mxu0 0
      %419 = vmatprep.subr.bf16.mxu0 0
      %420 = vmatpush1.bf16.msra.mxu0 0
      %421 = vmatprep.subr.bf16.mxu0 0
      %422 = vmatpush1.bf16.msra.mxu0 0
      %423 = vmatprep.subr.bf16.mxu0 0
      %424 = vmatpush1.bf16.msra.mxu0 0
      %425 = vmatprep.subr.bf16.mxu0 0
      %426 = vmatpush1.bf16.msra.mxu0 0
      %427 = vmatprep.subr.bf16.mxu0 0
      %428 = vmatpush1.bf16.msra.mxu0 0
      %429 = vmatprep.subr.bf16.mxu0 0
      %430 = vmatpush1.bf16.msra.mxu0 0
      %431 = vmatprep.subr.bf16.mxu0 0
      %432 = vmatpush1.bf16.msra.mxu0 0
      %433 = vmatprep.mubr.bf16.mxu0 0
      %434 = vmatmul.mubr.bf16.gmra.mrb[0].mxu0 %v223
      %v435 = vpop.f32.mrb[0].mxu0
      %v436 = vadd.f32 %v261, %v435
      %v437 = vpop.f32.mrb[0].mxu0
      %v438 = vadd.f32 %v265, %v437
      %v439 = vpop.f32.mrb[0].mxu0
      %v440 = vpop.f32.mrb[0].mxu0
      %441 = vdwg.mxu0
      %442 = vmatprep.subr.bf16.mxu0 0
      %443 = vmatpush1.bf16.msra.mxu0 %v355
      %444 = vmatprep.subr.bf16.mxu0 0
      %445 = vmatpush1.bf16.msra.mxu0 %v358
      %446 = vmatprep.subr.bf16.mxu0 0
      %447 = vmatpush1.bf16.msra.mxu0 %v361
      %448 = vmatprep.subr.bf16.mxu0 0
      %449 = vmatpush1.bf16.msra.mxu0 %v364
      %450 = vmatprep.subr.bf16.mxu0 0
      %451 = vmatpush1.bf16.msra.mxu0 %v367
      %452 = vmatprep.subr.bf16.mxu0 0
      %453 = vmatpush1.bf16.msra.mxu0 %v370
      %454 = vmatprep.subr.bf16.mxu0 0
      %455 = vmatpush1.bf16.msra.mxu0 %v373
      %456 = vmatprep.subr.bf16.mxu0 0
      %457 = vmatpush1.bf16.msra.mxu0 %v376
      %458 = vmatprep.subr.bf16.mxu0 0
      %459 = vmatpush1.bf16.msra.mxu0 0
      %460 = vmatprep.subr.bf16.mxu0 0
      %461 = vmatpush1.bf16.msra.mxu0 0
      %462 = vmatprep.subr.bf16.mxu0 0
      %463 = vmatpush1.bf16.msra.mxu0 0
      %464 = vmatprep.subr.bf16.mxu0 0
      %465 = vmatpush1.bf16.msra.mxu0 0
      %466 = vmatprep.subr.bf16.mxu0 0
      %467 = vmatpush1.bf16.msra.mxu0 0
      %468 = vmatprep.subr.bf16.mxu0 0
      %469 = vmatpush1.bf16.msra.mxu0 0
      %470 = vmatprep.subr.bf16.mxu0 0
      %471 = vmatpush1.bf16.msra.mxu0 0
      %472 = vmatprep.subr.bf16.mxu0 0
      %473 = vmatpush1.bf16.msra.mxu0 0
      %474 = vmatprep.mubr.bf16.mxu0 0
      %475 = vmatmul.mubr.bf16.gmra.mrb[0].mxu0 %v223
      %v476 = vpop.f32.mrb[0].mxu0
      %v477 = vadd.f32 %v269, %v476
      %v478 = vpop.f32.mrb[0].mxu0
      %v479 = vpop.f32.mrb[0].mxu0
      %v480 = vpop.f32.mrb[0].mxu0
      %481 = vdwg.mxu0
      %v482 = vadd.f32 %v220, %v436
      %v483 = vxor.u32 %v482, 2147483648
      %v484 = vmul.f32 %v483, 1.442695
      %v485 = vpow.pop %v484
      %v486 = vadd.f32 %v485, 1.0
      %v487 = vrcp.pop %v486
      %v488 = vmul.f32 1.0, %v487
      %v489 = vadd.f32 %v221, %v438
      %v490 = vxor.u32 %v489, 2147483648
      %v491 = vmul.f32 %v490, 1.442695
      %v492 = vpow.pop %v491
      %v493 = vadd.f32 %v492, 1.0
      %v494 = vrcp.pop %v493
      %v495 = vmul.f32 1.0, %v494
      %v496 = vmul.f32 %v488, %v477
      %v497 = vadd.f32 %v222, %v496
      %v498 = vtanh.pop %v497
      %v499 = vsub.f32 1.0, %v495
      %v500 = vmul.f32 %v499, %v498
      %v501 = vmul.f32 %v495, %v219
      %v502 = vadd.f32 %v500, %v501
      %v503 = vld [vmem:[%s208] sm:$0xff]
      %505 = vset.pattern.permute.xlu0 0
      %506 = vperm.xlu0 %505, %v503
      %v507 = vpop.permute.xlu0 %506
      %v509 = vmul.f32 %v507, %v502
      %v510 = vsub.f32 1.0, %v503
      %512 = vset.pattern.permute.xlu0 0
      %513 = vperm.xlu0 %512, %v510
      %v514 = vpop.permute.xlu0 %513
      %v516 = vmul.f32 %v514, %v219
      %v517 = vadd.f32 %v509, %v516
      %518 = vst [vmem:[#allocation2] sm:$0xff] %v517
      %519 = vst [vmem:[%s212] sm:$0xff] %v509
      %p520 = scmp.lt.s32.totalorder %s15, 6
      %s521 = scalar_select %p520, %s15, 6
      %s522 = smul.addr %s521, 8
      %s523 = scalar_lea.vmem %s4, %s522
      // Predicated region
      $region41: #{rnnt_forward.21} parent=35 // pred_check
        %p524 = pneg %p127
      $region42: #{rnnt_forward.21} parent=35 // pred_check_branch
        %526 = sbr.rel (%p524) target = $region44
      $region43: #{rnnt_forward.21} parent=35 // pred_region
        _
      $region44: #{rnnt_forward.21} parent=35 // pred_fallthru
        _
    $region36: #{rnnt_forward.21} parent=5 // pred_fallthru
      _
    %p527 = scmp.le.s32.totalorder 2, %s10
    // Predicated region
    $region45: #{rnnt_forward.21} parent=5 // pred_check
      %p528 = pneg %p527
    $region46: #{rnnt_forward.21} parent=5 // pred_check_branch
      %530 = sbr.rel (%p528) target = $region48
    $region47: #{rnnt_forward.21} parent=5 // pred_region
      %s531 = ssub.s32 %s10, 2
      // Predicated region
      $region49: #{rnnt_forward.21} parent=47 // pred_check
        %p532 = pneg %p133
      $region50: #{rnnt_forward.21} parent=47 // pred_check_branch
        %534 = sbr.rel (%p532) target = $region52
      $region51: #{rnnt_forward.21} parent=47 // pred_region
        %p535 = scmp.lt.s32.totalorder %s16, 6
        %s536 = scalar_select %p535, %s16, 6
        %s537 = smul.addr %s536, 8
        %s538 = scalar_lea.vmem %s4, %s537
      $region52: #{rnnt_forward.21} parent=47 // pred_fallthru
        _
    $region48: #{rnnt_forward.21} parent=5 // pred_fallthru
      _
  $region6: #{rnnt_forward.21} parent=0 // loop_footer
    %s14 = sadd.s32 1, %s10
  $region7: #{rnnt_forward.21} parent=0 // loop_footer_branch
    %9 = sbr.rel target = $region3
  $region8: #{rnnt_forward.21} parent=0 // loop_exit
    _

// kernel: rnnt_forward.25
$region0: #{rnnt_forward.25}
  #allocation0 [shape = 'u32[]', space=smem, size = 0x4, offset = 0x4, fixed_abs, tag = 'smem constant byte address 0x4 - core index']
  #allocation1 [shape = 'u32[144,128]{1,0:T(1,128)}', space=vmem, size = 0x12000, scoped, tag = 'internal scratch']
  #allocation2 [shape = 'bf16[16,16,128]{2,1,0:T(16,128)(2,1)}', space=vmem, size = 0x10000, scoped, tag = 'scratch operand']
  %s0 = inlined_call_operand.vmem [shape: bf16[2,16,128], index: 0, kind: input, shape index: {}]
  %s1 = inlined_call_operand.vmem [shape: bf16[2,16,128], index: 1, kind: input, shape index: {}]
  %s2 = inlined_call_operand.vmem [shape: bf16[128,128], index: 2, kind: input, shape index: {}]
  %s3 = inlined_call_operand.vmem [shape: bf16[2,16,16,128], index: 3, kind: output, shape index: {}]
  %s4 = sld [smem:[#allocation0]]
  $region49: #{rnnt_forward.25} parent=0
    _
  %s6 = ssub.s32 1, %s4
  %s7 = scalar_select 0, %s6, %s4
  loop: start=0, step=1, limit=4
  $region2: #{rnnt_forward.25} parent=0 // loop_pre_header
    _
  $region3: #{rnnt_forward.25} parent=0 // loop_header
    %s9 = sphi 0, %s13
    %p10 = scmp.ge.s32.totalorder %s9, 4
    %s16 = sphi 0, %s42
    %s17 = sphi 0, %s38
    %s18 = sphi 0, %s34
    %s19 = sphi 0, %s30
    %s20 = sphi 0, %s16
    %s21 = sphi 0, %s17
    %s22 = sphi 0, %s18
    %s23 = sphi 0, %s19
    %s24 = sphi 0, %s20
    %s25 = sphi 0, %s21
    %s26 = sphi 0, %s22
    %s27 = sphi 0, %s23
    %s47 = sphi 0, %s49
    %s50 = sphi 0, %s47
    %s51 = sphi 0, %s50
    %s67 = sphi 0, %s51
    %s75 = sphi 0, %s77
    %s78 = sphi 0, %s75
    %s79 = sphi 0, %s78
    %s95 = sphi 0, %s79
    %s101 = sphi 0, %s103
    %s104 = sphi 0, %s101
    %s105 = sphi 0, %s104
    %s121 = sphi 0, %s105
    %s133 = sphi 0, %s135
    %s136 = sphi 0, %s133
    %s137 = sphi 0, %s136
    %s153 = sphi 0, %s137
  $region4: #{rnnt_forward.25} parent=0 // loop_header_branch
    %12 = sbr.rel (%p10) target = $region8
  $region5: #{rnnt_forward.25} parent=0 // loop_body
    %s14 = ssub.s32 %s9, 1
    %s15 = ssub.s32 %s9, 2
    %s28 = sadd.s32 1, %s19
    %p29 = scmp.ge.s32.totalorder %s28, 1
    %s30 = scalar_select %p29, 0, %s28
    %s31 = sadd.s32 1, %s18
    %s32 = scalar_select %p29, %s31, %s18
    %p33 = scmp.ge.s32.totalorder %s32, 1
    %s34 = scalar_select %p33, 0, %s32
    %s35 = sadd.s32 1, %s17
    %s36 = scalar_select %p33, %s35, %s17
    %p37 = scmp.ge.s32.totalorder %s36, 1
    %s38 = scalar_select %p37, 0, %s36
    %s39 = sadd.s32 1, %s16
    %s40 = scalar_select %p37, %s39, %s16
    %p41 = scmp.ge.s32.totalorder %s40, 2
    %s42 = scalar_select %p41, 0, %s40
    %s43 = ssub.s32 %s16, %s42
    %s44 = ssub.s32 %s17, %s38
    %s45 = sor.u32 %s43, %s44
    %p46 = scmp.eq.s32.totalorder %s45, 0
    %s48 = sadd.s32 %s47, 1
    %s49 = scalar_select %p46, %s47, %s48
    %p52 = pneg %p46
    %p53 = scmp.eq.s32.totalorder %s9, 1
    %p54 = por %p52, %p53
    %p55 = scmp.ne.s32.totalorder %s47, %s50
    %p56 = scmp.eq.s32.totalorder %s9, 0
    %p57 = por %p55, %p56
    %p58 = scmp.ne.s32.totalorder %s47, %s50
    %p59 = scmp.eq.s32.totalorder %s14, 1
    %p60 = por %p58, %p59
    %p61 = scmp.ne.s32.totalorder %s50, %s51
    %p62 = scmp.eq.s32.totalorder %s14, 0
    %p63 = por %p61, %p62
    %p64 = scmp.ne.s32.totalorder %s50, %s51
    %p65 = scmp.eq.s32.totalorder %s15, 1
    %p66 = por %p64, %p65
    %p68 = scmp.ne.s32.totalorder %s51, %s67
    %p69 = scmp.eq.s32.totalorder %s15, 0
    %p70 = por %p68, %p69
    %s71 = ssub.s32 %s16, %s42
    %s72 = ssub.s32 %s18, %s34
    %s73 = sor.u32 %s71, %s72
    %p74 = scmp.eq.s32.totalorder %s73, 0
    %s76 = sadd.s32 %s75, 1
    %s77 = scalar_select %p74, %s75, %s76
    %p80 = pneg %p74
    %p81 = scmp.eq.s32.totalorder %s9, 1
    %p82 = por %p80, %p81
    %p83 = scmp.ne.s32.totalorder %s75, %s78
    %p84 = scmp.eq.s32.totalorder %s9, 0
    %p85 = por %p83, %p84
    %p86 = scmp.ne.s32.totalorder %s75, %s78
    %p87 = scmp.eq.s32.totalorder %s14, 1
    %p88 = por %p86, %p87
    %p89 = scmp.ne.s32.totalorder %s78, %s79
    %p90 = scmp.eq.s32.totalorder %s14, 0
    %p91 = por %p89, %p90
    %p92 = scmp.ne.s32.totalorder %s78, %s79
    %p93 = scmp.eq.s32.totalorder %s15, 1
    %p94 = por %p92, %p93
    %p96 = scmp.ne.s32.totalorder %s79, %s95
    %p97 = scmp.eq.s32.totalorder %s15, 0
    %p98 = por %p96, %p97
    %s99 = ssub.s32 %s19, %s30
    %p100 = scmp.eq.s32.totalorder %s99, 0
    %s102 = sadd.s32 %s101, 1
    %s103 = scalar_select %p100, %s101, %s102
    %p106 = pneg %p100
    %p107 = scmp.eq.s32.totalorder %s9, 1
    %p108 = por %p106, %p107
    %p109 = scmp.ne.s32.totalorder %s101, %s104
    %p110 = scmp.eq.s32.totalorder %s9, 0
    %p111 = por %p109, %p110
    %p112 = scmp.ne.s32.totalorder %s101, %s104
    %p113 = scmp.eq.s32.totalorder %s14, 1
    %p114 = por %p112, %p113
    %p115 = scmp.ne.s32.totalorder %s104, %s105
    %p116 = scmp.eq.s32.totalorder %s14, 0
    %p117 = por %p115, %p116
    %p118 = scmp.ne.s32.totalorder %s104, %s105
    %p119 = scmp.eq.s32.totalorder %s15, 1
    %p120 = por %p118, %p119
    %p122 = scmp.ne.s32.totalorder %s105, %s121
    %p123 = scmp.eq.s32.totalorder %s15, 0
    %p124 = por %p122, %p123
    %s125 = ssub.s32 %s16, %s42
    %s126 = ssub.s32 %s17, %s38
    %s127 = sor.u32 %s125, %s126
    %s128 = ssub.s32 %s18, %s34
    %s129 = sor.u32 %s127, %s128
    %s130 = ssub.s32 %s19, %s30
    %s131 = sor.u32 %s129, %s130
    %p132 = scmp.eq.s32.totalorder %s131, 0
    %s134 = sadd.s32 %s133, 1
    %s135 = scalar_select %p132, %s133, %s134
    %p138 = pneg %p132
    %p139 = scmp.eq.s32.totalorder %s9, 1
    %p140 = por %p138, %p139
    %p141 = scmp.ne.s32.totalorder %s133, %s136
    %p142 = scmp.eq.s32.totalorder %s9, 0
    %p143 = por %p141, %p142
    %p144 = scmp.ne.s32.totalorder %s133, %s136
    %p145 = scmp.eq.s32.totalorder %s14, 1
    %p146 = por %p144, %p145
    %p147 = scmp.ne.s32.totalorder %s136, %s137
    %p148 = scmp.eq.s32.totalorder %s14, 0
    %p149 = por %p147, %p148
    %p150 = scmp.ne.s32.totalorder %s136, %s137
    %p151 = scmp.eq.s32.totalorder %s15, 1
    %p152 = por %p150, %p151
    %p154 = scmp.ne.s32.totalorder %s137, %s153
    %p155 = scmp.eq.s32.totalorder %s15, 0
    %p156 = por %p154, %p155
    %p157 = scmp.le.s32.totalorder 1, %s9
    %p158 = scmp.lt.s32.totalorder %s9, 3
    %p159 = pnand %p157, %p158
    %p160 = pneg %p159
    // Predicated region
    $region9: #{rnnt_forward.25} parent=5 // pred_check
      _
    $region10: #{rnnt_forward.25} parent=5 // pred_check_branch
      %162 = sbr.rel (%p159) target = $region12
    $region11: #{rnnt_forward.25} parent=5 // pred_region
      %s163 = ssub.s32 %s9, 1
      // Predicated region
      $region13: #{rnnt_forward.25} parent=11 // pred_check
        %p164 = pneg %p117
      $region14: #{rnnt_forward.25} parent=11 // pred_check_branch
        %166 = sbr.rel (%p164) target = $region16
      $region15: #{rnnt_forward.25} parent=11 // pred_region
        %p167 = scmp.lt.s32.totalorder %s23, 0
        %s168 = scalar_select %p167, %s23, 0
        %s169 = smul.addr %s168, 4
        %s170 = scalar_lea.vmem %s2, %s169
      $region16: #{rnnt_forward.25} parent=11 // pred_fallthru
        _
    $region12: #{rnnt_forward.25} parent=5 // pred_fallthru
      _
    %p171 = scmp.lt.s32.totalorder %s9, 2
    // Predicated region
    $region17: #{rnnt_forward.25} parent=5 // pred_check
      %p172 = pneg %p171
    $region18: #{rnnt_forward.25} parent=5 // pred_check_branch
      %174 = sbr.rel (%p172) target = $region20
    $region19: #{rnnt_forward.25} parent=5 // pred_region
      // Predicated region
      $region21: #{rnnt_forward.25} parent=19 // pred_check
        %p175 = pneg %p57
      $region22: #{rnnt_forward.25} parent=19 // pred_check_branch
        %177 = sbr.rel (%p175) target = $region24
      $region23: #{rnnt_forward.25} parent=19 // pred_region
        %s178 = smul.u32 2, %s17
        %p179 = scmp.lt.s32.totalorder %s16, 1
        %s180 = scalar_select %p179, %s16, 1
        %p181 = scmp.lt.s32.totalorder %s178, 1
        %s182 = scalar_select %p181, %s178, 1
        %s183 = smul.addr %s180, 2
        %s184 = sadd.s32 %s182, %s183
        %s185 = smul.addr %s184, 4
        %s186 = scalar_lea.vmem %s0, %s185
        %s187 = smul.u32 2, %s17
      $region24: #{rnnt_forward.25} parent=19 // pred_fallthru
        _
      // Predicated region
      $region25: #{rnnt_forward.25} parent=19 // pred_check
        %p188 = pneg %p85
      $region26: #{rnnt_forward.25} parent=19 // pred_check_branch
        %190 = sbr.rel (%p188) target = $region28
      $region27: #{rnnt_forward.25} parent=19 // pred_region
        %s191 = smul.u32 2, %s18
        %p192 = scmp.lt.s32.totalorder %s16, 1
        %s193 = scalar_select %p192, %s16, 1
        %p194 = scmp.lt.s32.totalorder %s191, 1
        %s195 = scalar_select %p194, %s191, 1
        %s196 = smul.addr %s193, 2
        %s197 = sadd.s32 %s195, %s196
        %s198 = smul.addr %s197, 4
        %s199 = scalar_lea.vmem %s1, %s198
        %s200 = smul.u32 2, %s18
      $region28: #{rnnt_forward.25} parent=19 // pred_fallthru
        _
    $region20: #{rnnt_forward.25} parent=5 // pred_fallthru
      _
    %p201 = scmp.le.s32.totalorder 1, %s9
    %p202 = scmp.lt.s32.totalorder %s9, 3
    %p203 = pnand %p201, %p202
    %p204 = pneg %p203
    // Predicated region
    $region29: #{rnnt_forward.25} parent=5 // pred_check
      _
    $region30: #{rnnt_forward.25} parent=5 // pred_check_branch
      %206 = sbr.rel (%p203) target = $region32
    $region31: #{rnnt_forward.25} parent=5 // pred_region
      %s207 = ssub.s32 %s9, 1
      %s208 = smul.u32 2, %s21
      %p209 = scmp.lt.s32.totalorder %s20, 1
      %s210 = scalar_select %p209, %s20, 1
      %p211 = scmp.lt.s32.totalorder %s208, 1
      %s212 = scalar_select %p211, %s208, 1
      %s213 = smul.addr %s210, 2
      %s214 = sadd.s32 %s212, %s213
      %s215 = smul.addr %s214, 4
      %s216 = scalar_lea.vmem %s0, %s215
      %p217 = pneg %p63
      %p218 = pneg %p60
      %s219 = smul.u32 2, %s22
      %p220 = scmp.lt.s32.totalorder %s20, 1
      %s221 = scalar_select %p220, %s20, 1
      %p222 = scmp.lt.s32.totalorder %s219, 1
      %s223 = scalar_select %p222, %s219, 1
      %s224 = smul.addr %s221, 2
      %s225 = sadd.s32 %s223, %s224
      %s226 = smul.addr %s225, 4
      %s227 = scalar_lea.vmem %s1, %s226
      %p228 = pneg %p91
      %p229 = pneg %p88
      %p230 = scmp.lt.s32.totalorder %s23, 0
      %s231 = scalar_select %p230, %s23, 0
      %s232 = smul.addr %s231, 4
      %s233 = scalar_lea.vmem %s2, %s232
      %p234 = pneg %p117
      %p235 = pneg %p114
      %p236 = pneg %p149
      %p237 = pneg %p146
      %s238 = smul.u32 16, %s21
      %s239 = smul.u32 2, %s22
      %p240 = scmp.lt.s32.totalorder %s20, 1
      %s241 = scalar_select %p240, %s20, 1
      %p242 = scmp.lt.s32.totalorder %s238, 15
      %s243 = scalar_select %p242, %s238, 15
      %p244 = scmp.lt.s32.totalorder %s239, 1
      %s245 = scalar_select %p244, %s239, 1
      %p246 = scmp.lt.s32.totalorder %s23, 0
      %s247 = scalar_select %p246, %s23, 0
      %s248 = sadd.s32 %s247, %s245
      %s249 = smul.addr %s243, 2
      %s250 = sadd.s32 %s248, %s249
      %s251 = smul.addr %s241, 32
      %s252 = sadd.s32 %s250, %s251
      %s253 = smul.addr %s252, 4
      %s254 = scalar_lea.vmem %s3, %s253
      %s255 = smul.u32 2, %s21
      %p256 = scmp.lt.s32.totalorder %s20, 1
      %s257 = scalar_select %p256, %s20, 1
      %p258 = scmp.lt.s32.totalorder %s255, 1
      %s259 = scalar_select %p258, %s255, 1
      %s260 = smul.addr %s257, 2
      %s261 = sadd.s32 %s259, %s260
      %s262 = smul.addr %s261, 4
      %s263 = scalar_lea.vmem %s0, %s262
      %s264 = smul.u32 2, %s21
      %s265 = smul.u32 2, %s22
      %p266 = scmp.lt.s32.totalorder %s20, 1
      %s267 = scalar_select %p266, %s20, 1
      %p268 = scmp.lt.s32.totalorder %s265, 1
      %s269 = scalar_select %p268, %s265, 1
      %s270 = smul.addr %s267, 2
      %s271 = sadd.s32 %s269, %s270
      %s272 = smul.addr %s271, 4
      %s273 = scalar_lea.vmem %s1, %s272
      %s274 = smul.u32 2, %s22
      %p275 = scmp.lt.s32.totalorder %s23, 0
      %s276 = scalar_select %p275, %s23, 0
      %s277 = smul.addr %s276, 4
      %s278 = scalar_lea.vmem %s2, %s277
      %s279 = smul.u32 16, %s21
      %s280 = smul.u32 2, %s22
      %p281 = scmp.lt.s32.totalorder %s20, 1
      %s282 = scalar_select %p281, %s20, 1
      %p283 = scmp.lt.s32.totalorder %s279, 15
      %s284 = scalar_select %p283, %s279, 15
      %p285 = scmp.lt.s32.totalorder %s280, 1
      %s286 = scalar_select %p285, %s280, 1
      %p287 = scmp.lt.s32.totalorder %s23, 0
      %s288 = scalar_select %p287, %s23, 0
      %s289 = sadd.s32 %s288, %s286
      %s290 = smul.addr %s284, 2
      %s291 = sadd.s32 %s289, %s290
      %s292 = smul.addr %s282, 32
      %s293 = sadd.s32 %s291, %s292
      %s294 = smul.addr %s293, 4
      %s295 = scalar_lea.vmem %s3, %s294
      %s296 = smul.u32 16, %s21
      %s297 = smul.u32 2, %s22
      %p299 = scmp.eq.s32.totalorder %s23, 0
      // Predicated region
      $region33: #{rnnt_forward.25} parent=31 // pred_check
        %p300 = pneg %p299
      $region34: #{rnnt_forward.25} parent=31 // pred_check_branch
        %302 = sbr.rel (%p300) target = $region36
      $region35: #{rnnt_forward.25} parent=31 // pred_region
        %v303 = vld [vmem:[%s263] sm:$0xf]
        %v304 = vld [vmem:[%s263 + $0x4] sm:$0xf]
        %v308 = vunpack.c.l.s4 1966171168
        %v309 = vunpack.c.0.s8 %v308
        %v310 = vlaneseq
        %v311 = vshrl.u32 %v310, 7
        %v312 = vsub.s32 %v309, %v311
        %v313 = vrot.slane %v303, %v312
        %v314 = vcombine.high %v313, %v313
        %v316 = vunpack.c.l.s4 1966171168
        %v317 = vunpack.c.0.s8 %v316
        %v318 = vlaneseq
        %v319 = vshrl.u32 %v318, 7
        %v320 = vsub.s32 %v317, %v319
        %v321 = vrot.slane %v313, %v320
        %v323 = vunpack.c.l.s4 1966171168
        %v324 = vunpack.c.0.s8 %v323
        %v325 = vlaneseq
        %v326 = vshrl.u32 %v325, 7
        %v327 = vsub.s32 %v324, %v326
        %v328 = vrot.slane %v314, %v327
        %v329 = vcombine.high %v321, %v321
        %v330 = vcombine.high %v328, %v328
        %v332 = vunpack.c.l.s4 1966171168
        %v333 = vunpack.c.0.s8 %v332
        %v334 = vlaneseq
        %v335 = vshrl.u32 %v334, 7
        %v336 = vsub.s32 %v333, %v335
        %v337 = vrot.slane %v304, %v336
        %v338 = vcombine.high %v337, %v337
        %v340 = vunpack.c.l.s4 1966171168
        %v341 = vunpack.c.0.s8 %v340
        %v342 = vlaneseq
        %v343 = vshrl.u32 %v342, 7
        %v344 = vsub.s32 %v341, %v343
        %v345 = vrot.slane %v337, %v344
        %v347 = vunpack.c.l.s4 1966171168
        %v348 = vunpack.c.0.s8 %v347
        %v349 = vlaneseq
        %v350 = vshrl.u32 %v349, 7
        %v351 = vsub.s32 %v348, %v350
        %v352 = vrot.slane %v338, %v351
        %v353 = vcombine.high %v345, %v345
        %v354 = vcombine.high %v352, %v352
        %v355 = vunpack.i.l.s16 %v321
        %v356 = vunpack.i.h.s16 %v321
        %v357 = vunpack.i.l.s16 %v328
        %v358 = vunpack.i.h.s16 %v328
        %v359 = vunpack.i.l.s16 %v329
        %v360 = vunpack.i.h.s16 %v329
        %v361 = vunpack.i.l.s16 %v330
        %v362 = vunpack.i.h.s16 %v330
        %v363 = vunpack.i.l.s16 %v345
        %v364 = vunpack.i.h.s16 %v345
        %v365 = vunpack.i.l.s16 %v352
        %v366 = vunpack.i.h.s16 %v352
        %v367 = vunpack.i.l.s16 %v353
        %v368 = vunpack.i.h.s16 %v353
        %v369 = vunpack.i.l.s16 %v354
        %v370 = vunpack.i.h.s16 %v354
        %v371 = vld [vmem:[%s273] sm:$0xf]
        %v372 = vld [vmem:[%s273 + $0x4] sm:$0xf]
        %v373 = vpack.i.b16 %v355, %v355
        %v374 = vpack.i.b16 %v356, %v356
        %v375 = vpack.i.b16 %v357, %v357
        %v376 = vpack.i.b16 %v358, %v358
        %v377 = vpack.i.b16 %v359, %v359
        %v378 = vpack.i.b16 %v360, %v360
        %v379 = vpack.i.b16 %v361, %v361
        %v380 = vpack.i.b16 %v362, %v362
        %v381 = vpack.i.b16 %v363, %v363
        %v382 = vpack.i.b16 %v364, %v364
        %v383 = vpack.i.b16 %v365, %v365
        %v384 = vpack.i.b16 %v366, %v366
        %v385 = vpack.i.b16 %v367, %v367
        %v386 = vpack.i.b16 %v368, %v368
        %v387 = vpack.i.b16 %v369, %v369
        %v388 = vpack.i.b16 %v370, %v370
        %v389 = vlaneseq
        %v390 = vshrl.u32 %v389, 7
        %v391 = vsub.s32 0, %v390
        %v392 = vrot.slane %v373, %v391
        %v393 = vlaneseq
        %v394 = vshrl.u32 %v393, 7
        %v395 = vsub.s32 0, %v394
        %v396 = vrot.slane %v374, %v395
        %v397 = vlaneseq
        %v398 = vshrl.u32 %v397, 7
        %v399 = vsub.s32 0, %v398
        %v400 = vrot.slane %v375, %v399
        %v401 = vlaneseq
        %v402 = vshrl.u32 %v401, 7
        %v403 = vsub.s32 0, %v402
        %v404 = vrot.slane %v376, %v403
        %v405 = vlaneseq
        %v406 = vshrl.u32 %v405, 7
        %v407 = vsub.s32 0, %v406
        %v408 = vrot.slane %v377, %v407
        %v409 = vlaneseq
        %v410 = vshrl.u32 %v409, 7
        %v411 = vsub.s32 0, %v410
        %v412 = vrot.slane %v378, %v411
        %v413 = vlaneseq
        %v414 = vshrl.u32 %v413, 7
        %v415 = vsub.s32 0, %v414
        %v416 = vrot.slane %v379, %v415
        %v417 = vlaneseq
        %v418 = vshrl.u32 %v417, 7
        %v419 = vsub.s32 0, %v418
        %v420 = vrot.slane %v380, %v419
        %v421 = vlaneseq
        %v422 = vshrl.u32 %v421, 7
        %v423 = vsub.s32 0, %v422
        %v424 = vrot.slane %v381, %v423
        %v425 = vlaneseq
        %v426 = vshrl.u32 %v425, 7
        %v427 = vsub.s32 0, %v426
        %v428 = vrot.slane %v382, %v427
        %v429 = vlaneseq
        %v430 = vshrl.u32 %v429, 7
        %v431 = vsub.s32 0, %v430
        %v432 = vrot.slane %v383, %v431
        %v433 = vlaneseq
        %v434 = vshrl.u32 %v433, 7
        %v435 = vsub.s32 0, %v434
        %v436 = vrot.slane %v384, %v435
        %v437 = vlaneseq
        %v438 = vshrl.u32 %v437, 7
        %v439 = vsub.s32 0, %v438
        %v440 = vrot.slane %v385, %v439
        %v441 = vlaneseq
        %v442 = vshrl.u32 %v441, 7
        %v443 = vsub.s32 0, %v442
        %v444 = vrot.slane %v386, %v443
        %v445 = vlaneseq
        %v446 = vshrl.u32 %v445, 7
        %v447 = vsub.s32 0, %v446
        %v448 = vrot.slane %v387, %v447
        %v449 = vlaneseq
        %v450 = vshrl.u32 %v449, 7
        %v451 = vsub.s32 0, %v450
        %v452 = vrot.slane %v388, %v451
        %v454 = vpack.i.b16 %v392, %v392
        %v456 = vlaneseq
        %v457 = vshrl.u32 %v456, 7
        %v458 = vsub.s32 0, %v457
        %v459 = vrot.slane %v454, %v458
        %v461 = vpack.i.b16 %v396, %v396
        %v463 = vlaneseq
        %v464 = vshrl.u32 %v463, 7
        %v465 = vsub.s32 0, %v464
        %v466 = vrot.slane %v461, %v465
        %v468 = vpack.i.b16 %v400, %v400
        %v470 = vlaneseq
        %v471 = vshrl.u32 %v470, 7
        %v472 = vsub.s32 0, %v471
        %v473 = vrot.slane %v468, %v472
        %v475 = vpack.i.b16 %v404, %v404
        %v477 = vlaneseq
        %v478 = vshrl.u32 %v477, 7
        %v479 = vsub.s32 0, %v478
        %v480 = vrot.slane %v475, %v479
        %v482 = vpack.i.b16 %v408, %v408
        %v484 = vlaneseq
        %v485 = vshrl.u32 %v484, 7
        %v486 = vsub.s32 0, %v485
        %v487 = vrot.slane %v482, %v486
        %v489 = vpack.i.b16 %v412, %v412
        %v491 = vlaneseq
        %v492 = vshrl.u32 %v491, 7
        %v493 = vsub.s32 0, %v492
        %v494 = vrot.slane %v489, %v493
        %v496 = vpack.i.b16 %v416, %v416
        %v498 = vlaneseq
        %v499 = vshrl.u32 %v498, 7
        %v500 = vsub.s32 0, %v499
        %v501 = vrot.slane %v496, %v500
        %v503 = vpack.i.b16 %v420, %v420
        %v505 = vlaneseq
        %v506 = vshrl.u32 %v505, 7
        %v507 = vsub.s32 0, %v506
        %v508 = vrot.slane %v503, %v507
        %v510 = vpack.i.b16 %v424, %v424
        %v512 = vlaneseq
        %v513 = vshrl.u32 %v512, 7
        %v514 = vsub.s32 0, %v513
        %v515 = vrot.slane %v510, %v514
        %v517 = vpack.i.b16 %v428, %v428
        %v519 = vlaneseq
        %v520 = vshrl.u32 %v519, 7
        %v521 = vsub.s32 0, %v520
        %v522 = vrot.slane %v517, %v521
        %v524 = vpack.i.b16 %v432, %v432
        %v526 = vlaneseq
        %v527 = vshrl.u32 %v526, 7
        %v528 = vsub.s32 0, %v527
        %v529 = vrot.slane %v524, %v528
        %v531 = vpack.i.b16 %v436, %v436
        %v533 = vlaneseq
        %v534 = vshrl.u32 %v533, 7
        %v535 = vsub.s32 0, %v534
        %v536 = vrot.slane %v531, %v535
        %v538 = vpack.i.b16 %v440, %v440
        %v540 = vlaneseq
        %v541 = vshrl.u32 %v540, 7
        %v542 = vsub.s32 0, %v541
        %v543 = vrot.slane %v538, %v542
        %v545 = vpack.i.b16 %v444, %v444
        %v547 = vlaneseq
        %v548 = vshrl.u32 %v547, 7
        %v549 = vsub.s32 0, %v548
        %v550 = vrot.slane %v545, %v549
        %v552 = vpack.i.b16 %v448, %v448
        %v554 = vlaneseq
        %v555 = vshrl.u32 %v554, 7
        %v556 = vsub.s32 0, %v555
        %v557 = vrot.slane %v552, %v556
        %v559 = vpack.i.b16 %v452, %v452
        %v561 = vlaneseq
        %v562 = vshrl.u32 %v561, 7
        %v563 = vsub.s32 0, %v562
        %v564 = vrot.slane %v559, %v563
        %v567 = vunpack.c.l.b16 %v371
        %v568 = vunpack.c.l.b16 %v372
        %v569 = vpack.c.b16 %v568, %v567
        %v571 = vadd.bf16 %v459, %v569
        %v572 = vadd.bf16 %v466, %v569
        %v573 = vadd.bf16 %v473, %v569
        %v574 = vadd.bf16 %v480, %v569
        %v575 = vadd.bf16 %v487, %v569
        %v576 = vadd.bf16 %v494, %v569
        %v577 = vadd.bf16 %v501, %v569
        %v578 = vadd.bf16 %v508, %v569
        %v579 = vadd.bf16 %v515, %v569
        %v580 = vadd.bf16 %v522, %v569
        %v581 = vadd.bf16 %v529, %v569
        %v582 = vadd.bf16 %v536, %v569
        %v583 = vadd.bf16 %v543, %v569
        %v584 = vadd.bf16 %v550, %v569
        %v585 = vadd.bf16 %v557, %v569
        %v586 = vadd.bf16 %v564, %v569
        %v587 = vtanh.bf16.pop %v571
        %v588 = vtanh.bf16.pop %v572
        %v589 = vtanh.bf16.pop %v573
        %v590 = vtanh.bf16.pop %v574
        %v591 = vtanh.bf16.pop %v575
        %v592 = vtanh.bf16.pop %v576
        %v593 = vtanh.bf16.pop %v577
        %v594 = vtanh.bf16.pop %v578
        %v595 = vtanh.bf16.pop %v579
        %v596 = vtanh.bf16.pop %v580
        %v597 = vtanh.bf16.pop %v581
        %v598 = vtanh.bf16.pop %v582
        %v599 = vtanh.bf16.pop %v583
        %v600 = vtanh.bf16.pop %v584
        %v601 = vtanh.bf16.pop %v585
        %v602 = vtanh.bf16.pop %v586
        %603 = vst [vmem:[#allocation2] sm:$0xff] %v587
        %604 = vst [vmem:[#allocation2 + $0x8] sm:$0xff] %v588
        %605 = vst [vmem:[#allocation2 + $0x10] sm:$0xff] %v589
        %606 = vst [vmem:[#allocation2 + $0x18] sm:$0xff] %v590
        %607 = vst [vmem:[#allocation2 + $0x20] sm:$0xff] %v591
        %608 = vst [vmem:[#allocation2 + $0x28] sm:$0xff] %v592
        %609 = vst [vmem:[#allocation2 + $0x30] sm:$0xff] %v593
        %610 = vst [vmem:[#allocation2 + $0x38] sm:$0xff] %v594
        %611 = vst [vmem:[#allocation2 + $0x40] sm:$0xff] %v595
        %612 = vst [vmem:[#allocation2 + $0x48] sm:$0xff] %v596
        %613 = vst [vmem:[#allocation2 + $0x50] sm:$0xff] %v597
        %614 = vst [vmem:[#allocation2 + $0x58] sm:$0xff] %v598
        %615 = vst [vmem:[#allocation2 + $0x60] sm:$0xff] %v599
        %616 = vst [vmem:[#allocation2 + $0x68] sm:$0xff] %v600
        %617 = vst [vmem:[#allocation2 + $0x70] sm:$0xff] %v601
        %618 = vst [vmem:[#allocation2 + $0x78] sm:$0xff] %v602
      $region36: #{rnnt_forward.25} parent=31 // pred_fallthru
        _
      %v619 = vld [vmem:[#allocation2] sm:$0xff]
      %v620 = vld [vmem:[#allocation2 + $0x8] sm:$0xff]
      %v621 = vld [vmem:[#allocation2 + $0x10] sm:$0xff]
      %v622 = vld [vmem:[#allocation2 + $0x18] sm:$0xff]
      %v623 = vld [vmem:[#allocation2 + $0x20] sm:$0xff]
      %v624 = vld [vmem:[#allocation2 + $0x28] sm:$0xff]
      %v625 = vld [vmem:[#allocation2 + $0x30] sm:$0xff]
      %v626 = vld [vmem:[#allocation2 + $0x38] sm:$0xff]
      %v627 = vld [vmem:[#allocation2 + $0x40] sm:$0xff]
      %v628 = vld [vmem:[#allocation2 + $0x48] sm:$0xff]
      %v629 = vld [vmem:[#allocation2 + $0x50] sm:$0xff]
      %v630 = vld [vmem:[#allocation2 + $0x58] sm:$0xff]
      %v631 = vld [vmem:[#allocation2 + $0x60] sm:$0xff]
      %v632 = vld [vmem:[#allocation2 + $0x68] sm:$0xff]
      %v633 = vld [vmem:[#allocation2 + $0x70] sm:$0xff]
      %v634 = vld [vmem:[#allocation2 + $0x78] sm:$0xff]
      %v635 = vld [vmem:[%s278] sm:$0xf]
      %v636 = vld [vmem:[%s278 + $0x4] sm:$0xf]
      %v637 = vld [vmem:[%s278 + $0x8] sm:$0xf]
      %v638 = vld [vmem:[%s278 + $0xc] sm:$0xf]
      %v639 = vld [vmem:[%s278 + $0x10] sm:$0xf]
      %v640 = vld [vmem:[%s278 + $0x14] sm:$0xf]
      %v641 = vld [vmem:[%s278 + $0x18] sm:$0xf]
      %v642 = vld [vmem:[%s278 + $0x1c] sm:$0xf]
      %v643 = vld [vmem:[%s278 + $0x20] sm:$0xf]
      %v644 = vld [vmem:[%s278 + $0x24] sm:$0xf]
      %v645 = vld [vmem:[%s278 + $0x28] sm:$0xf]
      %v646 = vld [vmem:[%s278 + $0x2c] sm:$0xf]
      %v647 = vld [vmem:[%s278 + $0x30] sm:$0xf]
      %v648 = vld [vmem:[%s278 + $0x34] sm:$0xf]
      %v649 = vld [vmem:[%s278 + $0x38] sm:$0xf]
      %v650 = vld [vmem:[%s278 + $0x3c] sm:$0xf]
      %v667 = vunpack.c.l.b16 %v635
      %v668 = vunpack.c.l.b16 %v636
      %v669 = vunpack.c.l.b16 %v637
      %v670 = vunpack.c.l.b16 %v638
      %v671 = vunpack.c.l.b16 %v639
      %v672 = vunpack.c.l.b16 %v640
      %v673 = vunpack.c.l.b16 %v641
      %v674 = vunpack.c.l.b16 %v642
      %v675 = vunpack.c.l.b16 %v643
      %v676 = vunpack.c.l.b16 %v644
      %v677 = vunpack.c.l.b16 %v645
      %v678 = vunpack.c.l.b16 %v646
      %v679 = vunpack.c.l.b16 %v647
      %v680 = vunpack.c.l.b16 %v648
      %v681 = vunpack.c.l.b16 %v649
      %v682 = vunpack.c.l.b16 %v650
      %v683 = vpack.c.b16 %v668, %v667
      %v684 = vpack.c.b16 %v670, %v669
      %v685 = vpack.c.b16 %v672, %v671
      %v686 = vpack.c.b16 %v674, %v673
      %v687 = vpack.c.b16 %v676, %v675
      %v688 = vpack.c.b16 %v678, %v677
      %v689 = vpack.c.b16 %v680, %v679
      %v690 = vpack.c.b16 %v682, %v681
      %699 = vmatprep.subr.bf16.mxu0 0
      %700 = vmatpush1.bf16.msra.mxu0 %v683
      %701 = vmatprep.subr.bf16.mxu0 0
      %702 = vmatpush1.bf16.msra.mxu0 %v684
      %703 = vmatprep.subr.bf16.mxu0 0
      %704 = vmatpush1.bf16.msra.mxu0 %v685
      %705 = vmatprep.subr.bf16.mxu0 0
      %706 = vmatpush1.bf16.msra.mxu0 %v686
      %707 = vmatprep.subr.bf16.mxu0 0
      %708 = vmatpush1.bf16.msra.mxu0 %v687
      %709 = vmatprep.subr.bf16.mxu0 0
      %710 = vmatpush1.bf16.msra.mxu0 %v688
      %711 = vmatprep.subr.bf16.mxu0 0
      %712 = vmatpush1.bf16.msra.mxu0 %v689
      %713 = vmatprep.subr.bf16.mxu0 0
      %714 = vmatpush1.bf16.msra.mxu0 %v690
      %715 = vmatprep.subr.bf16.mxu0 0
      %716 = vmatpush1.bf16.msra.mxu0 0
      %717 = vmatprep.subr.bf16.mxu0 0
      %718 = vmatpush1.bf16.msra.mxu0 0
      %719 = vmatprep.subr.bf16.mxu0 0
      %720 = vmatpush1.bf16.msra.mxu0 0
      %721 = vmatprep.subr.bf16.mxu0 0
      %722 = vmatpush1.bf16.msra.mxu0 0
      %723 = vmatprep.subr.bf16.mxu0 0
      %724 = vmatpush1.bf16.msra.mxu0 0
      %725 = vmatprep.subr.bf16.mxu0 0
      %726 = vmatpush1.bf16.msra.mxu0 0
      %727 = vmatprep.subr.bf16.mxu0 0
      %728 = vmatpush1.bf16.msra.mxu0 0
      %729 = vmatprep.subr.bf16.mxu0 0
      %730 = vmatpush1.bf16.msra.mxu0 0
      %731 = vmatprep.mubr.bf16.mxu0 0
      %732 = vmatmul.mubr.bf16.gmra.mrb[0].mxu0 %v619
      %v733 = vpop.f32.mrb[0].mxu0
      %v734 = vadd.f32 0.0, %v733
      %v735 = vpop.f32.mrb[0].mxu0
      %v736 = vpop.f32.mrb[0].mxu0
      %v737 = vadd.f32 0.0, %v736
      %v738 = vpop.f32.mrb[0].mxu0
      %739 = vmatprep.mubr.bf16.mxu0 0
      %740 = vmatmul.mubr.bf16.gmra.mrb[0].mxu0 %v620
      %v741 = vpop.f32.mrb[0].mxu0
      %v742 = vadd.f32 0.0, %v741
      %v743 = vpop.f32.mrb[0].mxu0
      %v744 = vpop.f32.mrb[0].mxu0
      %v745 = vadd.f32 0.0, %v744
      %v746 = vpop.f32.mrb[0].mxu0
      %747 = vmatprep.mubr.bf16.mxu0 0
      %748 = vmatmul.mubr.bf16.gmra.mrb[0].mxu0 %v621
      %v749 = vpop.f32.mrb[0].mxu0
      %v750 = vadd.f32 0.0, %v749
      %v751 = vpop.f32.mrb[0].mxu0
      %v752 = vpop.f32.mrb[0].mxu0
      %v753 = vadd.f32 0.0, %v752
      %v754 = vpop.f32.mrb[0].mxu0
      %755 = vmatprep.mubr.bf16.mxu0 0
      %756 = vmatmul.mubr.bf16.gmra.mrb[0].mxu0 %v622
      %v757 = vpop.f32.mrb[0].mxu0
      %v758 = vadd.f32 0.0, %v757
      %v759 = vpop.f32.mrb[0].mxu0
      %v760 = vpop.f32.mrb[0].mxu0
      %v761 = vadd.f32 0.0, %v760
      %v762 = vpop.f32.mrb[0].mxu0
      %763 = vmatprep.mubr.bf16.mxu0 0
      %764 = vmatmul.mubr.bf16.gmra.mrb[0].mxu0 %v623
      %v765 = vpop.f32.mrb[0].mxu0
      %v766 = vadd.f32 0.0, %v765
      %v767 = vpop.f32.mrb[0].mxu0
      %v768 = vpop.f32.mrb[0].mxu0
      %v769 = vadd.f32 0.0, %v768
      %v770 = vpop.f32.mrb[0].mxu0
      %771 = vmatprep.mubr.bf16.mxu0 0
      %772 = vmatmul.mubr.bf16.gmra.mrb[0].mxu0 %v624
      %v773 = vpop.f32.mrb[0].mxu0
      %v774 = vadd.f32 0.0, %v773
      %v775 = vpop.f32.mrb[0].mxu0
      %v776 = vpop.f32.mrb[0].mxu0
      %v777 = vadd.f32 0.0, %v776
      %v778 = vpop.f32.mrb[0].mxu0
      %779 = vmatprep.mubr.bf16.mxu0 0
      %780 = vmatmul.mubr.bf16.gmra.mrb[0].mxu0 %v625
      %v781 = vpop.f32.mrb[0].mxu0
      %v782 = vadd.f32 0.0, %v781
      %v783 = vpop.f32.mrb[0].mxu0
      %v784 = vpop.f32.mrb[0].mxu0
      %v785 = vadd.f32 0.0, %v784
      %v786 = vpop.f32.mrb[0].mxu0
      %787 = vmatprep.mubr.bf16.mxu0 0
      %788 = vmatmul.mubr.bf16.gmra.mrb[0].mxu0 %v626
      %v789 = vpop.f32.mrb[0].mxu0
      %v790 = vadd.f32 0.0, %v789
      %v791 = vpop.f32.mrb[0].mxu0
      %v792 = vpop.f32.mrb[0].mxu0
      %v793 = vadd.f32 0.0, %v792
      %v794 = vpop.f32.mrb[0].mxu0
      %795 = vmatprep.mubr.bf16.mxu0 0
      %796 = vmatmul.mubr.bf16.gmra.mrb[0].mxu0 %v627
      %v797 = vpop.f32.mrb[0].mxu0
      %v798 = vadd.f32 0.0, %v797
      %v799 = vpop.f32.mrb[0].mxu0
      %v800 = vpop.f32.mrb[0].mxu0
      %v801 = vadd.f32 0.0, %v800
      %v802 = vpop.f32.mrb[0].mxu0
      %803 = vmatprep.mubr.bf16.mxu0 0
      %804 = vmatmul.mubr.bf16.gmra.mrb[0].mxu0 %v628
      %v805 = vpop.f32.mrb[0].mxu0
      %v806 = vadd.f32 0.0, %v805
      %v807 = vpop.f32.mrb[0].mxu0
      %v808 = vpop.f32.mrb[0].mxu0
      %v809 = vadd.f32 0.0, %v808
      %v810 = vpop.f32.mrb[0].mxu0
      %811 = vmatprep.mubr.bf16.mxu0 0
      %812 = vmatmul.mubr.bf16.gmra.mrb[0].mxu0 %v629
      %v813 = vpop.f32.mrb[0].mxu0
      %v814 = vadd.f32 0.0, %v813
      %v815 = vpop.f32.mrb[0].mxu0
      %v816 = vpop.f32.mrb[0].mxu0
      %v817 = vadd.f32 0.0, %v816
      %v818 = vpop.f32.mrb[0].mxu0
      %819 = vmatprep.mubr.bf16.mxu0 0
      %820 = vmatmul.mubr.bf16.gmra.mrb[0].mxu0 %v630
      %v821 = vpop.f32.mrb[0].mxu0
      %v822 = vadd.f32 0.0, %v821
      %v823 = vpop.f32.mrb[0].mxu0
      %v824 = vpop.f32.mrb[0].mxu0
      %v825 = vadd.f32 0.0, %v824
      %v826 = vpop.f32.mrb[0].mxu0
      %827 = vmatprep.mubr.bf16.mxu0 0
      %828 = vmatmul.mubr.bf16.gmra.mrb[0].mxu0 %v631
      %v829 = vpop.f32.mrb[0].mxu0
      %v830 = vadd.f32 0.0, %v829
      %v831 = vpop.f32.mrb[0].mxu0
      %v832 = vpop.f32.mrb[0].mxu0
      %v833 = vadd.f32 0.0, %v832
      %v834 = vpop.f32.mrb[0].mxu0
      %835 = vmatprep.mubr.bf16.mxu0 0
      %836 = vmatmul.mubr.bf16.gmra.mrb[0].mxu0 %v632
      %v837 = vpop.f32.mrb[0].mxu0
      %v838 = vadd.f32 0.0, %v837
      %v839 = vpop.f32.mrb[0].mxu0
      %v840 = vpop.f32.mrb[0].mxu0
      %v841 = vadd.f32 0.0, %v840
      %v842 = vpop.f32.mrb[0].mxu0
      %843 = vmatprep.mubr.bf16.mxu0 0
      %844 = vmatmul.mubr.bf16.gmra.mrb[0].mxu0 %v633
      %v845 = vpop.f32.mrb[0].mxu0
      %v846 = vadd.f32 0.0, %v845
      %v847 = vpop.f32.mrb[0].mxu0
      %v848 = vpop.f32.mrb[0].mxu0
      %v849 = vadd.f32 0.0, %v848
      %v850 = vpop.f32.mrb[0].mxu0
      %851 = vmatprep.mubr.bf16.mxu0 0
      %852 = vmatmul.mubr.bf16.gmra.mrb[0].mxu0 %v634
      %v853 = vpop.f32.mrb[0].mxu0
      %v854 = vadd.f32 0.0, %v853
      %v855 = vpop.f32.mrb[0].mxu0
      %v856 = vpop.f32.mrb[0].mxu0
      %v857 = vadd.f32 0.0, %v856
      %v858 = vpop.f32.mrb[0].mxu0
      %859 = vdwg.mxu0
      %v860 = vpack.c.bf16 %v737, %v734
      %v861 = vpack.c.bf16 %v745, %v742
      %v862 = vpack.c.bf16 %v753, %v750
      %v863 = vpack.c.bf16 %v761, %v758
      %v864 = vpack.c.bf16 %v769, %v766
      %v865 = vpack.c.bf16 %v777, %v774
      %v866 = vpack.c.bf16 %v785, %v782
      %v867 = vpack.c.bf16 %v793, %v790
      %v868 = vpack.c.bf16 %v801, %v798
      %v869 = vpack.c.bf16 %v809, %v806
      %v870 = vpack.c.bf16 %v817, %v814
      %v871 = vpack.c.bf16 %v825, %v822
      %v872 = vpack.c.bf16 %v833, %v830
      %v873 = vpack.c.bf16 %v841, %v838
      %v874 = vpack.c.bf16 %v849, %v846
      %v875 = vpack.c.bf16 %v857, %v854
      %v892 = vunpack.c.l.b16 %v860
      %v893 = vunpack.c.h.b16 %v860
      %v894 = vunpack.c.l.b16 %v861
      %v895 = vunpack.c.h.b16 %v861
      %v896 = vunpack.c.l.b16 %v862
      %v897 = vunpack.c.h.b16 %v862
      %v898 = vunpack.c.l.b16 %v863
      %v899 = vunpack.c.h.b16 %v863
      %v900 = vunpack.c.l.b16 %v864
      %v901 = vunpack.c.h.b16 %v864
      %v902 = vunpack.c.l.b16 %v865
      %v903 = vunpack.c.h.b16 %v865
      %v904 = vunpack.c.l.b16 %v866
      %v905 = vunpack.c.h.b16 %v866
      %v906 = vunpack.c.l.b16 %v867
      %v907 = vunpack.c.h.b16 %v867
      %v908 = vunpack.c.l.b16 %v868
      %v909 = vunpack.c.h.b16 %v868
      %v910 = vunpack.c.l.b16 %v869
      %v911 = vunpack.c.h.b16 %v869
      %v912 = vunpack.c.l.b16 %v870
      %v913 = vunpack.c.h.b16 %v870
      %v914 = vunpack.c.l.b16 %v871
      %v915 = vunpack.c.h.b16 %v871
      %v916 = vunpack.c.l.b16 %v872
      %v917 = vunpack.c.h.b16 %v872
      %v918 = vunpack.c.l.b16 %v873
      %v919 = vunpack.c.h.b16 %v873
      %v920 = vunpack.c.l.b16 %v874
      %v921 = vunpack.c.h.b16 %v874
      %v922 = vunpack.c.l.b16 %v875
      %v923 = vunpack.c.h.b16 %v875
      %v924 = vpack.c.b16 %v892, %v892
      %v925 = vpack.c.b16 %v893, %v893
      %v926 = vpack.c.b16 %v894, %v894
      %v927 = vpack.c.b16 %v895, %v895
      %v928 = vpack.c.b16 %v896, %v896
      %v929 = vpack.c.b16 %v897, %v897
      %v930 = vpack.c.b16 %v898, %v898
      %v931 = vpack.c.b16 %v899, %v899
      %v932 = vpack.c.b16 %v900, %v900
      %v933 = vpack.c.b16 %v901, %v901
      %v934 = vpack.c.b16 %v902, %v902
      %v935 = vpack.c.b16 %v903, %v903
      %v936 = vpack.c.b16 %v904, %v904
      %v937 = vpack.c.b16 %v905, %v905
      %v938 = vpack.c.b16 %v906, %v906
      %v939 = vpack.c.b16 %v907, %v907
      %v940 = vpack.c.b16 %v908, %v908
      %v941 = vpack.c.b16 %v909, %v909
      %v942 = vpack.c.b16 %v910, %v910
      %v943 = vpack.c.b16 %v911, %v911
      %v944 = vpack.c.b16 %v912, %v912
      %v945 = vpack.c.b16 %v913, %v913
      %v946 = vpack.c.b16 %v914, %v914
      %v947 = vpack.c.b16 %v915, %v915
      %v948 = vpack.c.b16 %v916, %v916
      %v949 = vpack.c.b16 %v917, %v917
      %v950 = vpack.c.b16 %v918, %v918
      %v951 = vpack.c.b16 %v919, %v919
      %v952 = vpack.c.b16 %v920, %v920
      %v953 = vpack.c.b16 %v921, %v921
      %v954 = vpack.c.b16 %v922, %v922
      %v955 = vpack.c.b16 %v923, %v923
      %988 = vst [vmem:[%s295] sm:$0xf] %v924
      %989 = vst [vmem:[%s295 + $0x4] sm:$0xf] %v925
      %990 = vst [vmem:[%s295 + $0x8] sm:$0xf] %v926
      %991 = vst [vmem:[%s295 + $0xc] sm:$0xf] %v927
      %992 = vst [vmem:[%s295 + $0x10] sm:$0xf] %v928
      %993 = vst [vmem:[%s295 + $0x14] sm:$0xf] %v929
      %994 = vst [vmem:[%s295 + $0x18] sm:$0xf] %v930
      %995 = vst [vmem:[%s295 + $0x1c] sm:$0xf] %v931
      %996 = vst [vmem:[%s295 + $0x20] sm:$0xf] %v932
      %997 = vst [vmem:[%s295 + $0x24] sm:$0xf] %v933
      %998 = vst [vmem:[%s295 + $0x28] sm:$0xf] %v934
      %999 = vst [vmem:[%s295 + $0x2c] sm:$0xf] %v935
      %1000 = vst [vmem:[%s295 + $0x30] sm:$0xf] %v936
      %1001 = vst [vmem:[%s295 + $0x34] sm:$0xf] %v937
      %1002 = vst [vmem:[%s295 + $0x38] sm:$0xf] %v938
      %1003 = vst [vmem:[%s295 + $0x3c] sm:$0xf] %v939
      %1004 = vst [vmem:[%s295 + $0x40] sm:$0xf] %v940
      %1005 = vst [vmem:[%s295 + $0x44] sm:$0xf] %v941
      %1006 = vst [vmem:[%s295 + $0x48] sm:$0xf] %v942
      %1007 = vst [vmem:[%s295 + $0x4c] sm:$0xf] %v943
      %1008 = vst [vmem:[%s295 + $0x50] sm:$0xf] %v944
      %1009 = vst [vmem:[%s295 + $0x54] sm:$0xf] %v945
      %1010 = vst [vmem:[%s295 + $0x58] sm:$0xf] %v946
      %1011 = vst [vmem:[%s295 + $0x5c] sm:$0xf] %v947
      %1012 = vst [vmem:[%s295 + $0x60] sm:$0xf] %v948
      %1013 = vst [vmem:[%s295 + $0x64] sm:$0xf] %v949
      %1014 = vst [vmem:[%s295 + $0x68] sm:$0xf] %v950
      %1015 = vst [vmem:[%s295 + $0x6c] sm:$0xf] %v951
      %1016 = vst [vmem:[%s295 + $0x70] sm:$0xf] %v952
      %1017 = vst [vmem:[%s295 + $0x74] sm:$0xf] %v953
      %1018 = vst [vmem:[%s295 + $0x78] sm:$0xf] %v954
      %1019 = vst [vmem:[%s295 + $0x7c] sm:$0xf] %v955
      %s1020 = smul.u32 16, %s21
      %s1021 = smul.u32 2, %s22
      %p1022 = scmp.lt.s32.totalorder %s20, 1
      %s1023 = scalar_select %p1022, %s20, 1
      %p1024 = scmp.lt.s32.totalorder %s1020, 15
      %s1025 = scalar_select %p1024, %s1020, 15
      %p1026 = scmp.lt.s32.totalorder %s1021, 1
      %s1027 = scalar_select %p1026, %s1021, 1
      %p1028 = scmp.lt.s32.totalorder %s23, 0
      %s1029 = scalar_select %p1028, %s23, 0
      %s1030 = sadd.s32 %s1029, %s1027
      %s1031 = smul.addr %s1025, 2
      %s1032 = sadd.s32 %s1030, %s1031
      %s1033 = smul.addr %s1023, 32
      %s1034 = sadd.s32 %s1032, %s1033
      %s1035 = smul.addr %s1034, 4
      %s1036 = scalar_lea.vmem %s3, %s1035
      // Predicated region
      $region37: #{rnnt_forward.25} parent=31 // pred_check
        %p1037 = pneg %p146
      $region38: #{rnnt_forward.25} parent=31 // pred_check_branch
        %1039 = sbr.rel (%p1037) target = $region40
      $region39: #{rnnt_forward.25} parent=31 // pred_region
        %s1040 = smul.u32 16, %s21
        %s1041 = smul.u32 2, %s22
      $region40: #{rnnt_forward.25} parent=31 // pred_fallthru
        _
    $region32: #{rnnt_forward.25} parent=5 // pred_fallthru
      _
    %p1042 = scmp.le.s32.totalorder 2, %s9
    // Predicated region
    $region41: #{rnnt_forward.25} parent=5 // pred_check
      %p1043 = pneg %p1042
    $region42: #{rnnt_forward.25} parent=5 // pred_check_branch
      %1045 = sbr.rel (%p1043) target = $region44
    $region43: #{rnnt_forward.25} parent=5 // pred_region
      %s1046 = ssub.s32 %s9, 2
      // Predicated region
      $region45: #{rnnt_forward.25} parent=43 // pred_check
        %p1047 = pneg %p152
      $region46: #{rnnt_forward.25} parent=43 // pred_check_branch
        %1049 = sbr.rel (%p1047) target = $region48
      $region47: #{rnnt_forward.25} parent=43 // pred_region
        %s1050 = smul.u32 16, %s25
        %s1051 = smul.u32 2, %s26
        %p1052 = scmp.lt.s32.totalorder %s24, 1
        %s1053 = scalar_select %p1052, %s24, 1
        %p1054 = scmp.lt.s32.totalorder %s1050, 15
        %s1055 = scalar_select %p1054, %s1050, 15
        %p1056 = scmp.lt.s32.totalorder %s1051, 1
        %s1057 = scalar_select %p1056, %s1051, 1
        %p1058 = scmp.lt.s32.totalorder %s27, 0
        %s1059 = scalar_select %p1058, %s27, 0
        %s1060 = sadd.s32 %s1059, %s1057
        %s1061 = smul.addr %s1055, 2
        %s1062 = sadd.s32 %s1060, %s1061
        %s1063 = smul.addr %s1053, 32
        %s1064 = sadd.s32 %s1062, %s1063
        %s1065 = smul.addr %s1064, 4
        %s1066 = scalar_lea.vmem %s3, %s1065
      $region48: #{rnnt_forward.25} parent=43 // pred_fallthru
        _
    $region44: #{rnnt_forward.25} parent=5 // pred_fallthru
      _
  $region6: #{rnnt_forward.25} parent=0 // loop_footer
    %s13 = sadd.s32 1, %s9
  $region7: #{rnnt_forward.25} parent=0 // loop_footer_branch
    %8 = sbr.rel target = $region3
  $region8: #{rnnt_forward.25} parent=0 // loop_exit
    _

</llo_original>
